<compile_context>
chip_gen: v6e
topology: v6e:2x2x1
jax: 0.10.0
libtpu: 0.0.40
codegen_flags: <defaults>
</compile_context>

<pallas_src>
import functools

import jax
import jax.numpy as jnp
from jax.experimental import pallas as pl
from jax.experimental.pallas import tpu as pltpu

LANE = 128


def _round_up(x, m):
    return ((x + m - 1) // m) * m


def _pad2d(a, rows, cols):
    return jnp.pad(a, ((0, rows - a.shape[0]), (0, cols - a.shape[1])))


def caps_mlp_kernel(obs_ref,
                    w1_ref, b1_ref, w2_ref, b2_ref, w3_ref, b3_ref,
                    w4_ref, b4_ref, w5_ref, b5_ref,
                    out_ref, *, matmul_dtype, act_dtype):
    """Fused 5-layer MLP (sqrt(condition) pre-folded into W5/b5) for one batch tile."""
    x = obs_ref[...].astype(matmul_dtype)   # no-op if obs already in matmul_dtype

    def dense(h, w_ref, b_ref):
        # MXU matmul with f32 accumulation; bias add in f32.
        return jnp.dot(h, w_ref[...], preferred_element_type=jnp.float32) + b_ref[...]

    def silu(y_f32):
        # Activation dtype is configurable: bf16 on v6e/v7x (2x EUP rate),
        # f32 for the full-precision / v5e path.
        y = y_f32.astype(act_dtype)
        return (y * jax.nn.sigmoid(y)).astype(matmul_dtype)

    h = silu(dense(x, w1_ref, b1_ref))
    h = silu(dense(h, w2_ref, b2_ref))
    h = silu(dense(h, w3_ref, b3_ref))
    h = silu(dense(h, w4_ref, b4_ref))
    logits = dense(h, w5_ref, b5_ref)            # (tile, out_pad), f32; scale folded in

    out_ref[...] = logits.astype(out_ref.dtype)  # lane-dense 128-wide store


def caps_model_forward(obs, condition_space, params, *,
                       batch_tile=1024,
                       matmul_dtype=jnp.bfloat16,
                       act_dtype=None,
                       out_dtype=None,
                       core_parallel_batch=False,
                       vmem_limit_bytes=None):
    """obs: (B, obs_dim). condition_space: (1,1) f32. params: 5 (W,b) pairs,
    W stored as (in_dim, out_dim), b as (1, out_dim). Returns (B, num_outputs) f32."""
    B, obs_dim = obs.shape
    (w1, b1), (w2, b2), (w3, b3), (w4, b4), (w5, b5) = params
    num_outputs = w5.shape[1]
    f32 = jnp.float32
    act_dtype = matmul_dtype if act_dtype is None else act_dtype
    out_dtype = matmul_dtype if out_dtype is None else out_dtype

    # ---- lane-dense padding of the narrow tail layers (64 -> 128, out -> 128) ----
    h4_pad = _round_up(w4.shape[1], LANE)
    out_pad = _round_up(num_outputs, LANE)
    w4p = _pad2d(w4, w4.shape[0], h4_pad)            # zero cols -> SiLU(0)=0 in pad lanes
    b4p = _pad2d(b4, 1, h4_pad)
    w5p = _pad2d(w5, h4_pad, out_pad)                # zero rows/cols keep pad lanes inert
    b5p = _pad2d(b5, 1, out_pad)

    # ---- fold sqrt(condition_space) into the last layer (wrapper-side, XLA-fused) ----
    scale = jnp.sqrt(condition_space.reshape(()).astype(f32))  # NaN for negative, as torch.sqrt
    w5p = w5p.astype(f32) * scale
    b5p = b5p.astype(f32) * scale

    ws = [w.astype(matmul_dtype) for w in (w1, w2, w3, w4p, w5p)]
    bs = [b.astype(f32) for b in (b1, b2, b3, b4p, b5p)]

    # ---- batch tiling ----------------------------------------------------------
    # Tiny batches: single tile (grid=(1,)). Large batches: even grid >= 2 steps so
    # v7x's two TensorCores split the work evenly; tile <= batch_tile keeps VMEM
    # comfortably inside the scoped default on every generation (incl. v5e 16 MiB).
    B8 = _round_up(B, 8)
    if B8 <= batch_tile:
        tile = B8
        n_tiles = 1
    else:
        n_tiles = 2 * pl.cdiv(B8, 2 * batch_tile)        # even, >= 2
        tile = _round_up(pl.cdiv(B8, n_tiles), 8)
    Bp = tile * n_tiles
    obs_p = obs if Bp == B else jnp.pad(obs, ((0, Bp - B), (0, 0)))
    grid = (n_tiles,)

    def invariant(shape):
        # Same block index every grid step: fetched once, resident in VMEM.
        # (pipeline_mode=pl.Buffered(1) would drop the double-buffer copy, but the
        #  weights total < 0.5 MiB so it is not worth the extra knob here.)
        return pl.BlockSpec(shape, lambda i: (0, 0))

    in_specs = [pl.BlockSpec((tile, obs_dim), lambda i: (i, 0))]          # obs tile
    for w, b in zip(ws, bs):
        in_specs.append(invariant(w.shape))
        in_specs.append(invariant(b.shape))

    out_specs = pl.BlockSpec((tile, out_pad), lambda i: (i, 0))

    kernel = functools.partial(caps_mlp_kernel,
                               matmul_dtype=matmul_dtype, act_dtype=act_dtype)

    # CORE_PARALLEL shards the batch grid axis across v7x's two TensorCores;
    # plain "parallel" is the portable default (v5e/v6e have one TC per chip).
    semantics = (pltpu.CORE_PARALLEL,) if core_parallel_batch else ("parallel",)
    cp_kwargs = dict(dimension_semantics=semantics)
    if vmem_limit_bytes is not None:
        cp_kwargs["vmem_limit_bytes"] = vmem_limit_bytes

    out = pl.pallas_call(
        kernel,
        out_shape=jax.ShapeDtypeStruct((Bp, out_pad), out_dtype),
        grid_spec=pltpu.PrefetchScalarGridSpec(
            num_scalar_prefetch=0,
            grid=grid,
            in_specs=in_specs,
            out_specs=out_specs,
        ),
        compiler_params=pltpu.CompilerParams(**cp_kwargs),
    )(obs_p,
      ws[0], bs[0], ws[1], bs[1], ws[2], bs[2], ws[3], bs[3], ws[4], bs[4])

    return out[:B, :num_outputs].astype(f32)


def init_params(key, obs_dim, num_outputs):
    """Deterministic init mimicking PyTorch Linear default U(-1/sqrt(fan_in), +).
    Weights stored as (in_dim, out_dim); biases as (1, out_dim)."""
    dims = [obs_dim, 256, 256, 128, 64, num_outputs]
    params = []
    for i in range(5):
        key, kw, kb = jax.random.split(key, 3)
        fan_in, fan_out = dims[i], dims[i + 1]
        bound = 1.0 / jnp.sqrt(jnp.float32(fan_in))
        w = jax.random.uniform(kw, (fan_in, fan_out), jnp.float32, -bound, bound)
        b = jax.random.uniform(kb, (1, fan_out), jnp.float32, -bound, bound)
        params.append((w, b))
    return params


def reference_forward(obs, condition_space, params):
    """Pure-JAX reference matching the PyTorch semantics (full precision)."""
    x = obs
    for i, (w, b) in enumerate(params):
        x = jnp.dot(x, w, precision=jax.lax.Precision.HIGHEST) + b
        if i < 4:
            x = x * jax.nn.sigmoid(x)
    cond = jnp.broadcast_to(condition_space, (obs.shape[0], 1))
    return x * jnp.sqrt(cond)


if __name__ == "__main__":
    key = jax.random.PRNGKey(0)
    k_obs, k_params, k_obs2 = jax.random.split(key, 3)

    B = 300           # ragged on purpose; fits one tile -> grid=(1,)
    obs_dim = 32      # small obs space
    num_outputs = 8   # small action logits (padded to 128 lanes inside the wrapper)

    obs = jax.random.normal(k_obs, (B, obs_dim), jnp.float32)
    # Module initialises condition_space to ones; use a non-trivial positive value
    # so the sqrt(condition) scaling path is actually exercised.
    condition_space = jnp.full((1, 1), 1.5, jnp.float32)
    params = init_params(k_params, obs_dim, num_outputs)

    ref = reference_forward(obs, condition_space, params)

    # Full-precision path (f32 matmul / f32 SiLU / f32 output): tight check.
    out_f32 = caps_model_forward(obs, condition_space, params,
                                 matmul_dtype=jnp.float32)
    out_f32 = jax.block_until_ready(out_f32)
    assert out_f32.shape == (B, num_outputs)
    assert jnp.allclose(out_f32, ref, atol=1e-3, rtol=1e-3), "f32 kernel mismatch vs reference"

    # Default perf path (bf16 matmul + bf16 SiLU + bf16 output): loose check.
    out_bf16 = caps_model_forward(obs, condition_space, params)
    out_bf16 = jax.block_until_ready(out_bf16)
    assert out_bf16.shape == (B, num_outputs)
    assert jnp.allclose(out_bf16, ref, atol=5e-2, rtol=5e-2), "bf16 kernel mismatch vs reference"

    # Multi-tile path: force an even grid (>= 2 steps) with a small batch_tile to
    # exercise the tiling / parallel-batch codepath.
    B2 = 900
    obs2 = jax.random.normal(k_obs2, (B2, obs_dim), jnp.float32)
    ref2 = reference_forward(obs2, condition_space, params)
    out2 = caps_model_forward(obs2, condition_space, params, batch_tile=512)
    out2 = jax.block_until_ready(out2)
    assert out2.shape == (B2, num_outputs)
    assert jnp.allclose(out2, ref2, atol=5e-2, rtol=5e-2), "multi-tile kernel mismatch vs reference"

    print("KERNEL_OK")
</pallas_src>

<mosaic_0001>
module attributes {stable_mosaic.version = 11 : i64} {
  func.func @caps_mlp_kernel(%arg0: i32, %arg1: memref<304x32xf32, #tpu.memory_space<vmem>>, %arg2: memref<32x256xf32, #tpu.memory_space<vmem>>, %arg3: memref<1x256xf32, #tpu.memory_space<vmem>>, %arg4: memref<256x256xf32, #tpu.memory_space<vmem>>, %arg5: memref<1x256xf32, #tpu.memory_space<vmem>>, %arg6: memref<256x128xf32, #tpu.memory_space<vmem>>, %arg7: memref<1x128xf32, #tpu.memory_space<vmem>>, %arg8: memref<128x128xf32, #tpu.memory_space<vmem>>, %arg9: memref<1x128xf32, #tpu.memory_space<vmem>>, %arg10: memref<128x128xf32, #tpu.memory_space<vmem>>, %arg11: memref<1x128xf32, #tpu.memory_space<vmem>>, %arg12: memref<304x128xf32, #tpu.memory_space<vmem>>) attributes {dimension_semantics = [#tpu.dimension_semantics<parallel>], iteration_bounds = array<i64: 1>, scalar_prefetch = 0 : i64, scratch_operands = 0 : i64, tpu.core_type = #tpu.core_type<tc>, window_params = [{transform_indices = @transform_0, window_bounds = array<i64: 304, 32>}, {pipeline_mode = #tpu.pipeline_mode<synchronous>, transform_indices = @transform_1, window_bounds = array<i64: 32, 256>}, {pipeline_mode = #tpu.pipeline_mode<synchronous>, transform_indices = @transform_2, window_bounds = array<i64: 1, 256>}, {pipeline_mode = #tpu.pipeline_mode<synchronous>, transform_indices = @transform_3, window_bounds = array<i64: 256, 256>}, {pipeline_mode = #tpu.pipeline_mode<synchronous>, transform_indices = @transform_4, window_bounds = array<i64: 1, 256>}, {pipeline_mode = #tpu.pipeline_mode<synchronous>, transform_indices = @transform_5, window_bounds = array<i64: 256, 128>}, {pipeline_mode = #tpu.pipeline_mode<synchronous>, transform_indices = @transform_6, window_bounds = array<i64: 1, 128>}, {pipeline_mode = #tpu.pipeline_mode<synchronous>, transform_indices = @transform_7, window_bounds = array<i64: 128, 128>}, {pipeline_mode = #tpu.pipeline_mode<synchronous>, transform_indices = @transform_8, window_bounds = array<i64: 1, 128>}, {pipeline_mode = #tpu.pipeline_mode<synchronous>, transform_indices = @transform_9, window_bounds = array<i64: 128, 128>}, {pipeline_mode = #tpu.pipeline_mode<synchronous>, transform_indices = @transform_10, window_bounds = array<i64: 1, 128>}, {transform_indices = @transform_11, window_bounds = array<i64: 304, 128>}]} {
    %c0 = arith.constant 0 : index
    %c0_0 = arith.constant 0 : index
    %0 = vector.load %arg1[%c0, %c0_0] : memref<304x32xf32, #tpu.memory_space<vmem>>, vector<304x32xf32>
    %c0_1 = arith.constant 0 : index
    %c0_2 = arith.constant 0 : index
    %1 = vector.load %arg2[%c0_1, %c0_2] : memref<32x256xf32, #tpu.memory_space<vmem>>, vector<32x256xf32>
    %cst = arith.constant dense<0.000000e+00> : vector<304x256xf32>
    %2 = tpu.matmul %0, %1, %cst {dimension_numbers = #tpu.dot_dimension_numbers<[1], [0], [0], [1], [0, 0, 1, 1], [], []>} : vector<304x32xf32>, vector<32x256xf32>, vector<304x256xf32> -> vector<304x256xf32>
    %c0_3 = arith.constant 0 : index
    %c0_4 = arith.constant 0 : index
    %3 = vector.load %arg3[%c0_3, %c0_4] : memref<1x256xf32, #tpu.memory_space<vmem>>, vector<1x256xf32>
    %4 = vector.broadcast %3 : vector<1x256xf32> to vector<304x256xf32>
    %5 = arith.addf %2, %4 : vector<304x256xf32>
    %6 = arith.negf %5 : vector<304x256xf32>
    %7 = math.exp %6 : vector<304x256xf32>
    %cst_5 = arith.constant 1.000000e+00 : f32
    %8 = vector.broadcast %cst_5 : f32 to vector<304x256xf32>
    %9 = arith.addf %8, %7 : vector<304x256xf32>
    %10 = arith.divf %8, %9 : vector<304x256xf32>
    %11 = arith.mulf %5, %10 : vector<304x256xf32>
    %c0_6 = arith.constant 0 : index
    %c0_7 = arith.constant 0 : index
    %12 = vector.load %arg4[%c0_6, %c0_7] : memref<256x256xf32, #tpu.memory_space<vmem>>, vector<256x256xf32>
    %cst_8 = arith.constant dense<0.000000e+00> : vector<304x256xf32>
    %13 = tpu.matmul %11, %12, %cst_8 {dimension_numbers = #tpu.dot_dimension_numbers<[1], [0], [0], [1], [0, 0, 1, 1], [], []>} : vector<304x256xf32>, vector<256x256xf32>, vector<304x256xf32> -> vector<304x256xf32>
    %c0_9 = arith.constant 0 : index
    %c0_10 = arith.constant 0 : index
    %14 = vector.load %arg5[%c0_9, %c0_10] : memref<1x256xf32, #tpu.memory_space<vmem>>, vector<1x256xf32>
    %15 = vector.broadcast %14 : vector<1x256xf32> to vector<304x256xf32>
    %16 = arith.addf %13, %15 : vector<304x256xf32>
    %17 = arith.negf %16 : vector<304x256xf32>
    %18 = math.exp %17 : vector<304x256xf32>
    %cst_11 = arith.constant 1.000000e+00 : f32
    %19 = vector.broadcast %cst_11 : f32 to vector<304x256xf32>
    %20 = arith.addf %19, %18 : vector<304x256xf32>
    %21 = arith.divf %19, %20 : vector<304x256xf32>
    %22 = arith.mulf %16, %21 : vector<304x256xf32>
    %c0_12 = arith.constant 0 : index
    %c0_13 = arith.constant 0 : index
    %23 = vector.load %arg6[%c0_12, %c0_13] : memref<256x128xf32, #tpu.memory_space<vmem>>, vector<256x128xf32>
    %cst_14 = arith.constant dense<0.000000e+00> : vector<304x128xf32>
    %24 = tpu.matmul %22, %23, %cst_14 {dimension_numbers = #tpu.dot_dimension_numbers<[1], [0], [0], [1], [0, 0, 1, 1], [], []>} : vector<304x256xf32>, vector<256x128xf32>, vector<304x128xf32> -> vector<304x128xf32>
    %c0_15 = arith.constant 0 : index
    %c0_16 = arith.constant 0 : index
    %25 = vector.load %arg7[%c0_15, %c0_16] : memref<1x128xf32, #tpu.memory_space<vmem>>, vector<1x128xf32>
    %26 = vector.broadcast %25 : vector<1x128xf32> to vector<304x128xf32>
    %27 = arith.addf %24, %26 : vector<304x128xf32>
    %28 = arith.negf %27 : vector<304x128xf32>
    %29 = math.exp %28 : vector<304x128xf32>
    %cst_17 = arith.constant 1.000000e+00 : f32
    %30 = vector.broadcast %cst_17 : f32 to vector<304x128xf32>
    %31 = arith.addf %30, %29 : vector<304x128xf32>
    %32 = arith.divf %30, %31 : vector<304x128xf32>
    %33 = arith.mulf %27, %32 : vector<304x128xf32>
    %c0_18 = arith.constant 0 : index
    %c0_19 = arith.constant 0 : index
    %34 = vector.load %arg8[%c0_18, %c0_19] : memref<128x128xf32, #tpu.memory_space<vmem>>, vector<128x128xf32>
    %cst_20 = arith.constant dense<0.000000e+00> : vector<304x128xf32>
    %35 = tpu.matmul %33, %34, %cst_20 {dimension_numbers = #tpu.dot_dimension_numbers<[1], [0], [0], [1], [0, 0, 1, 1], [], []>} : vector<304x128xf32>, vector<128x128xf32>, vector<304x128xf32> -> vector<304x128xf32>
    %c0_21 = arith.constant 0 : index
    %c0_22 = arith.constant 0 : index
    %36 = vector.load %arg9[%c0_21, %c0_22] : memref<1x128xf32, #tpu.memory_space<vmem>>, vector<1x128xf32>
    %37 = vector.broadcast %36 : vector<1x128xf32> to vector<304x128xf32>
    %38 = arith.addf %35, %37 : vector<304x128xf32>
    %39 = arith.negf %38 : vector<304x128xf32>
    %40 = math.exp %39 : vector<304x128xf32>
    %cst_23 = arith.constant 1.000000e+00 : f32
    %41 = vector.broadcast %cst_23 : f32 to vector<304x128xf32>
    %42 = arith.addf %41, %40 : vector<304x128xf32>
    %43 = arith.divf %41, %42 : vector<304x128xf32>
    %44 = arith.mulf %38, %43 : vector<304x128xf32>
    %c0_24 = arith.constant 0 : index
    %c0_25 = arith.constant 0 : index
    %45 = vector.load %arg10[%c0_24, %c0_25] : memref<128x128xf32, #tpu.memory_space<vmem>>, vector<128x128xf32>
    %cst_26 = arith.constant dense<0.000000e+00> : vector<304x128xf32>
    %46 = tpu.matmul %44, %45, %cst_26 {dimension_numbers = #tpu.dot_dimension_numbers<[1], [0], [0], [1], [0, 0, 1, 1], [], []>} : vector<304x128xf32>, vector<128x128xf32>, vector<304x128xf32> -> vector<304x128xf32>
    %c0_27 = arith.constant 0 : index
    %c0_28 = arith.constant 0 : index
    %47 = vector.load %arg11[%c0_27, %c0_28] : memref<1x128xf32, #tpu.memory_space<vmem>>, vector<1x128xf32>
    %48 = vector.broadcast %47 : vector<1x128xf32> to vector<304x128xf32>
    %49 = arith.addf %46, %48 : vector<304x128xf32>
    %c0_29 = arith.constant 0 : index
    %c0_30 = arith.constant 0 : index
    %50 = vector.load %arg12[%c0_29, %c0_30] : memref<304x128xf32, #tpu.memory_space<vmem>>, vector<304x128xf32>
    tpu.vector_store %arg12[%c0_29, %c0_30], %49 {strides = array<i32>} : memref<304x128xf32, #tpu.memory_space<vmem>>, vector<304x128xf32>,
    return
  }
  func.func @transform_0(%arg0: i32) -> (i32, i32) {
    %c0_i32 = arith.constant 0 : i32
    %c0_i32_0 = arith.constant 0 : i32
    return %arg0, %c0_i32 : i32, i32
  }
  func.func @transform_1(%arg0: i32) -> (i32, i32) {
    %c0_i32 = arith.constant 0 : i32
    %c0_i32_0 = arith.constant 0 : i32
    %c0_i32_1 = arith.constant 0 : i32
    return %c0_i32, %c0_i32_0 : i32, i32
  }
  func.func @transform_2(%arg0: i32) -> (i32, i32) {
    %c0_i32 = arith.constant 0 : i32
    %c0_i32_0 = arith.constant 0 : i32
    %c0_i32_1 = arith.constant 0 : i32
    return %c0_i32, %c0_i32_0 : i32, i32
  }
  func.func @transform_3(%arg0: i32) -> (i32, i32) {
    %c0_i32 = arith.constant 0 : i32
    %c0_i32_0 = arith.constant 0 : i32
    %c0_i32_1 = arith.constant 0 : i32
    return %c0_i32, %c0_i32_0 : i32, i32
  }
  func.func @transform_4(%arg0: i32) -> (i32, i32) {
    %c0_i32 = arith.constant 0 : i32
    %c0_i32_0 = arith.constant 0 : i32
    %c0_i32_1 = arith.constant 0 : i32
    return %c0_i32, %c0_i32_0 : i32, i32
  }
  func.func @transform_5(%arg0: i32) -> (i32, i32) {
    %c0_i32 = arith.constant 0 : i32
    %c0_i32_0 = arith.constant 0 : i32
    %c0_i32_1 = arith.constant 0 : i32
    return %c0_i32, %c0_i32_0 : i32, i32
  }
  func.func @transform_6(%arg0: i32) -> (i32, i32) {
    %c0_i32 = arith.constant 0 : i32
    %c0_i32_0 = arith.constant 0 : i32
    %c0_i32_1 = arith.constant 0 : i32
    return %c0_i32, %c0_i32_0 : i32, i32
  }
  func.func @transform_7(%arg0: i32) -> (i32, i32) {
    %c0_i32 = arith.constant 0 : i32
    %c0_i32_0 = arith.constant 0 : i32
    %c0_i32_1 = arith.constant 0 : i32
    return %c0_i32, %c0_i32_0 : i32, i32
  }
  func.func @transform_8(%arg0: i32) -> (i32, i32) {
    %c0_i32 = arith.constant 0 : i32
    %c0_i32_0 = arith.constant 0 : i32
    %c0_i32_1 = arith.constant 0 : i32
    return %c0_i32, %c0_i32_0 : i32, i32
  }
  func.func @transform_9(%arg0: i32) -> (i32, i32) {
    %c0_i32 = arith.constant 0 : i32
    %c0_i32_0 = arith.constant 0 : i32
    %c0_i32_1 = arith.constant 0 : i32
    return %c0_i32, %c0_i32_0 : i32, i32
  }
  func.func @transform_10(%arg0: i32) -> (i32, i32) {
    %c0_i32 = arith.constant 0 : i32
    %c0_i32_0 = arith.constant 0 : i32
    %c0_i32_1 = arith.constant 0 : i32
    return %c0_i32, %c0_i32_0 : i32, i32
  }
  func.func @transform_11(%arg0: i32) -> (i32, i32) {
    %c0_i32 = arith.constant 0 : i32
    %c0_i32_0 = arith.constant 0 : i32
    return %arg0, %c0_i32 : i32, i32
  }
}

</mosaic_0001>

<llo_original>
// kernel: tpu_custom_call.1
$region0: #{tpu_custom_call.1}
  #allocation0 [shape = 'u32[]', space=smem, size = 0x4, offset = 0x4, fixed_abs, tag = 'smem constant byte address 0x4 - core index']
  #allocation1 [shape = 'u32[144,128]{1,0:T(1,128)}', space=vmem, size = 0x12000, scoped, tag = 'internal scratch']
  %s0 = inlined_call_operand.vmem [shape: f32[304,32], index: 0, kind: input, shape index: {}]
  %s1 = inlined_call_operand.hbm [shape: f32[32,256], index: 1, kind: input, shape index: {}]
  %s2 = inlined_call_operand.vmem [shape: f32[1,256], index: 2, kind: input, shape index: {}]
  %s3 = inlined_call_operand.hbm [shape: f32[256,256], index: 3, kind: input, shape index: {}]
  %s4 = inlined_call_operand.vmem [shape: f32[1,256], index: 4, kind: input, shape index: {}]
  %s5 = inlined_call_operand.vmem [shape: f32[256,128], index: 5, kind: input, shape index: {}]
  %s6 = inlined_call_operand.vmem [shape: f32[1,128], index: 6, kind: input, shape index: {}]
  %s7 = inlined_call_operand.vmem [shape: f32[128,128], index: 7, kind: input, shape index: {}]
  %s8 = inlined_call_operand.vmem [shape: f32[1,128], index: 8, kind: input, shape index: {}]
  %s9 = inlined_call_operand.hbm [shape: f32[128,128], index: 9, kind: input, shape index: {}]
  %s10 = inlined_call_operand.vmem [shape: f32[1,128], index: 10, kind: input, shape index: {}]
  %s11 = inlined_call_operand.hbm [shape: f32[304,128], index: 11, kind: output, shape index: {}]
  %s12 = sld [smem:[#allocation0]]
  $region66: #{tpu_custom_call.1} parent=0
    _
  %s14 = ssub.s32 1, %s12
  %s15 = scalar_select 0, %s14, %s12
  $region1: #{tpu_custom_call.1} parent=0
    #allocation2 [shape = 'u8[32768]{0}', space=vmem, size = 0x8000, scoped, tag = 'input window, operand 1, single buffered']
    #allocation3 [shape = 's32[1]{0}', space=sflag, size = 0x4, scoped, tag = 'scoped memory for tpu_custom_call.1']
    #allocation4 [shape = 's32[1]{0}', space=sflag, size = 0x4, scoped, tag = 'scoped memory for tpu_custom_call.1']
    #allocation5 [shape = 'u8[262144]{0}', space=vmem, size = 0x40000, scoped, tag = 'input window, operand 3, single buffered']
    #allocation6 [shape = 's32[1]{0}', space=sflag, size = 0x4, scoped, tag = 'scoped memory for tpu_custom_call.1']
    #allocation7 [shape = 'u8[65536]{0}', space=vmem, size = 0x10000, scoped, tag = 'input window, operand 9, single buffered']
    #allocation8 [shape = 'u8[155648]{0}', space=vmem, size = 0x26000, scoped, tag = 'output window, operand 0, single buffered']
    %16 = vsyncpa [#allocation3], 0
    %17 = vsyncpa [#allocation6], 0
    %18 = vsyncpa [#allocation4], 0
    // Predicated region
    $region2: #{tpu_custom_call.1} parent=1 // pred_check
      _
    $region3: #{tpu_custom_call.1} parent=1 // pred_check_branch
      %20 = sbr.rel (0) target = $region5
    $region4: #{tpu_custom_call.1} parent=1 // pred_region
      _
    $region5: #{tpu_custom_call.1} parent=1 // pred_fallthru
      _
    // Predicated region
    $region6: #{tpu_custom_call.1} parent=1 // pred_check
      _
    $region7: #{tpu_custom_call.1} parent=1 // pred_check_branch
      %22 = sbr.rel (0) target = $region9
    $region8: #{tpu_custom_call.1} parent=1 // pred_region
      %s24 = ssub.s32 1024, 1024
      %25 = vsyncadd [#allocation3], %s24
      %s26 = sshll.u32 [#allocation2], 4
      %s27 = int_to_ptr.vmem [resolvable:$true] %s26
      %32 = dma.hbm_to_vmem [thread:$0]  %s1, 1024, %s27, [#allocation3], 256, 256, 16
    $region9: #{tpu_custom_call.1} parent=1 // pred_fallthru
      _
    // Predicated region
    $region10: #{tpu_custom_call.1} parent=1 // pred_check
      _
    $region11: #{tpu_custom_call.1} parent=1 // pred_check_branch
      %34 = sbr.rel (0) target = $region13
    $region12: #{tpu_custom_call.1} parent=1 // pred_region
      _
    $region13: #{tpu_custom_call.1} parent=1 // pred_fallthru
      _
    // Predicated region
    $region14: #{tpu_custom_call.1} parent=1 // pred_check
      _
    $region15: #{tpu_custom_call.1} parent=1 // pred_check_branch
      %36 = sbr.rel (0) target = $region17
    $region16: #{tpu_custom_call.1} parent=1 // pred_region
      %s38 = ssub.s32 8192, 8192
      %39 = vsyncadd [#allocation6], %s38
      %s40 = sshll.u32 [#allocation5], 4
      %s41 = int_to_ptr.vmem [resolvable:$true] %s40
      %46 = dma.hbm_to_vmem [thread:$0]  %s3, 8192, %s41, [#allocation6], 256, 256, 16
    $region17: #{tpu_custom_call.1} parent=1 // pred_fallthru
      _
    // Predicated region
    $region18: #{tpu_custom_call.1} parent=1 // pred_check
      _
    $region19: #{tpu_custom_call.1} parent=1 // pred_check_branch
      %48 = sbr.rel (0) target = $region21
    $region20: #{tpu_custom_call.1} parent=1 // pred_region
      _
    $region21: #{tpu_custom_call.1} parent=1 // pred_fallthru
      _
    // Predicated region
    $region22: #{tpu_custom_call.1} parent=1 // pred_check
      _
    $region23: #{tpu_custom_call.1} parent=1 // pred_check_branch
      %50 = sbr.rel (0) target = $region25
    $region24: #{tpu_custom_call.1} parent=1 // pred_region
      _
    $region25: #{tpu_custom_call.1} parent=1 // pred_fallthru
      _
    // Predicated region
    $region26: #{tpu_custom_call.1} parent=1 // pred_check
      _
    $region27: #{tpu_custom_call.1} parent=1 // pred_check_branch
      %52 = sbr.rel (0) target = $region29
    $region28: #{tpu_custom_call.1} parent=1 // pred_region
      _
    $region29: #{tpu_custom_call.1} parent=1 // pred_fallthru
      _
    // Predicated region
    $region30: #{tpu_custom_call.1} parent=1 // pred_check
      _
    $region31: #{tpu_custom_call.1} parent=1 // pred_check_branch
      %54 = sbr.rel (0) target = $region33
    $region32: #{tpu_custom_call.1} parent=1 // pred_region
      _
    $region33: #{tpu_custom_call.1} parent=1 // pred_fallthru
      _
    // Predicated region
    $region34: #{tpu_custom_call.1} parent=1 // pred_check
      _
    $region35: #{tpu_custom_call.1} parent=1 // pred_check_branch
      %56 = sbr.rel (0) target = $region37
    $region36: #{tpu_custom_call.1} parent=1 // pred_region
      _
    $region37: #{tpu_custom_call.1} parent=1 // pred_fallthru
      _
    // Predicated region
    $region38: #{tpu_custom_call.1} parent=1 // pred_check
      _
    $region39: #{tpu_custom_call.1} parent=1 // pred_check_branch
      %58 = sbr.rel (0) target = $region41
    $region40: #{tpu_custom_call.1} parent=1 // pred_region
      %s60 = ssub.s32 2048, 2048
      %61 = vsyncadd [#allocation6], %s60
      %s62 = sshll.u32 [#allocation7], 4
      %s63 = int_to_ptr.vmem [resolvable:$true] %s62
      %68 = dma.hbm_to_vmem [thread:$0]  %s9, 2048, %s63, [#allocation6], 128, 128, 8
    $region41: #{tpu_custom_call.1} parent=1 // pred_fallthru
      _
    // Predicated region
    $region42: #{tpu_custom_call.1} parent=1 // pred_check
      _
    $region43: #{tpu_custom_call.1} parent=1 // pred_check_branch
      %70 = sbr.rel (0) target = $region45
    $region44: #{tpu_custom_call.1} parent=1 // pred_region
      _
    $region45: #{tpu_custom_call.1} parent=1 // pred_fallthru
      _
    // Predicated region
    $region46: #{tpu_custom_call.1} parent=1 // pred_check
      _
    $region47: #{tpu_custom_call.1} parent=1 // pred_check_branch
      %72 = sbr.rel (0) target = $region49
    $region48: #{tpu_custom_call.1} parent=1 // pred_region
      %73 = dma.done [#allocation3], 1024
    $region49: #{tpu_custom_call.1} parent=1 // pred_fallthru
      _
    // Predicated region
    $region50: #{tpu_custom_call.1} parent=1 // pred_check
      _
    $region51: #{tpu_custom_call.1} parent=1 // pred_check_branch
      %75 = sbr.rel (0) target = $region53
    $region52: #{tpu_custom_call.1} parent=1 // pred_region
      %76 = dma.done [#allocation6], 8192
    $region53: #{tpu_custom_call.1} parent=1 // pred_fallthru
      _
    // Predicated region
    $region54: #{tpu_custom_call.1} parent=1 // pred_check
      _
    $region55: #{tpu_custom_call.1} parent=1 // pred_check_branch
      %78 = sbr.rel (0) target = $region57
    $region56: #{tpu_custom_call.1} parent=1 // pred_region
      %79 = dma.done [#allocation6], 2048
    $region57: #{tpu_custom_call.1} parent=1 // pred_fallthru
      _
    %v80 = vld [vmem:[%s0] sm:$0xff]
    %v81 = vld [vmem:[%s0 + $0x8] sm:$0xff]
    %v82 = vld [vmem:[%s0 + $0x10] sm:$0xff]
    %v83 = vld [vmem:[%s0 + $0x18] sm:$0xff]
    %v84 = vld [vmem:[%s0 + $0x20] sm:$0xff]
    %v85 = vld [vmem:[%s0 + $0x28] sm:$0xff]
    %v86 = vld [vmem:[%s0 + $0x30] sm:$0xff]
    %v87 = vld [vmem:[%s0 + $0x38] sm:$0xff]
    %v88 = vld [vmem:[%s0 + $0x40] sm:$0xff]
    %v89 = vld [vmem:[%s0 + $0x48] sm:$0xff]
    %v90 = vld [vmem:[%s0 + $0x50] sm:$0xff]
    %v91 = vld [vmem:[%s0 + $0x58] sm:$0xff]
    %v92 = vld [vmem:[%s0 + $0x60] sm:$0xff]
    %v93 = vld [vmem:[%s0 + $0x68] sm:$0xff]
    %v94 = vld [vmem:[%s0 + $0x70] sm:$0xff]
    %v95 = vld [vmem:[%s0 + $0x78] sm:$0xff]
    %v96 = vld [vmem:[%s0 + $0x80] sm:$0xff]
    %v97 = vld [vmem:[%s0 + $0x88] sm:$0xff]
    %v98 = vld [vmem:[%s0 + $0x90] sm:$0xff]
    %v99 = vld [vmem:[%s0 + $0x98] sm:$0xff]
    %v100 = vld [vmem:[%s0 + $0xa0] sm:$0xff]
    %v101 = vld [vmem:[%s0 + $0xa8] sm:$0xff]
    %v102 = vld [vmem:[%s0 + $0xb0] sm:$0xff]
    %v103 = vld [vmem:[%s0 + $0xb8] sm:$0xff]
    %v104 = vld [vmem:[%s0 + $0xc0] sm:$0xff]
    %v105 = vld [vmem:[%s0 + $0xc8] sm:$0xff]
    %v106 = vld [vmem:[%s0 + $0xd0] sm:$0xff]
    %v107 = vld [vmem:[%s0 + $0xd8] sm:$0xff]
    %v108 = vld [vmem:[%s0 + $0xe0] sm:$0xff]
    %v109 = vld [vmem:[%s0 + $0xe8] sm:$0xff]
    %v110 = vld [vmem:[%s0 + $0xf0] sm:$0xff]
    %v111 = vld [vmem:[%s0 + $0xf8] sm:$0xff]
    %v112 = vld [vmem:[%s0 + $0x100] sm:$0xff]
    %v113 = vld [vmem:[%s0 + $0x108] sm:$0xff]
    %v114 = vld [vmem:[%s0 + $0x110] sm:$0xff]
    %v115 = vld [vmem:[%s0 + $0x118] sm:$0xff]
    %v116 = vld [vmem:[%s0 + $0x120] sm:$0xff]
    %v117 = vld [vmem:[%s0 + $0x128] sm:$0xff]
    %v118 = vld [vmem:[#allocation2] sm:$0xff]
    %v119 = vld [vmem:[#allocation2 + $0x8] sm:$0xff]
    %v120 = vld [vmem:[#allocation2 + $0x10] sm:$0xff]
    %v121 = vld [vmem:[#allocation2 + $0x18] sm:$0xff]
    %v122 = vld [vmem:[#allocation2 + $0x20] sm:$0xff]
    %v123 = vld [vmem:[#allocation2 + $0x28] sm:$0xff]
    %v124 = vld [vmem:[#allocation2 + $0x30] sm:$0xff]
    %v125 = vld [vmem:[#allocation2 + $0x38] sm:$0xff]
    %v126 = vld [vmem:[%s2] sm:$0x3]
    %v128 = vlaneseq
    %v129 = vshrl.u32 %v128, 7
    %v130 = vsub.s32 0, %v129
    %v131 = vrot.slane %v126, %v130
    %v132 = vlaneseq
    %v133 = vshrl.u32 %v132, 7
    %v134 = vsub.s32 1, %v133
    %v135 = vrot.slane %v126, %v134
    %vm138 = vcmask 261120
    %v140 = vsel %vm138, %v80, 0
    %v143 = vsel %vm138, %v81, 0
    %v146 = vsel %vm138, %v82, 0
    %v149 = vsel %vm138, %v83, 0
    %v152 = vsel %vm138, %v84, 0
    %v155 = vsel %vm138, %v85, 0
    %v158 = vsel %vm138, %v86, 0
    %v161 = vsel %vm138, %v87, 0
    %v164 = vsel %vm138, %v88, 0
    %v167 = vsel %vm138, %v89, 0
    %v170 = vsel %vm138, %v90, 0
    %v173 = vsel %vm138, %v91, 0
    %v176 = vsel %vm138, %v92, 0
    %v179 = vsel %vm138, %v93, 0
    %v182 = vsel %vm138, %v94, 0
    %v185 = vsel %vm138, %v95, 0
    %v188 = vsel %vm138, %v96, 0
    %v191 = vsel %vm138, %v97, 0
    %v194 = vsel %vm138, %v98, 0
    %v197 = vsel %vm138, %v99, 0
    %v200 = vsel %vm138, %v100, 0
    %v203 = vsel %vm138, %v101, 0
    %v206 = vsel %vm138, %v102, 0
    %v209 = vsel %vm138, %v103, 0
    %v212 = vsel %vm138, %v104, 0
    %v215 = vsel %vm138, %v105, 0
    %v218 = vsel %vm138, %v106, 0
    %v221 = vsel %vm138, %v107, 0
    %v224 = vsel %vm138, %v108, 0
    %v227 = vsel %vm138, %v109, 0
    %v230 = vsel %vm138, %v110, 0
    %v233 = vsel %vm138, %v111, 0
    %v236 = vsel %vm138, %v112, 0
    %v239 = vsel %vm138, %v113, 0
    %v242 = vsel %vm138, %v114, 0
    %v245 = vsel %vm138, %v115, 0
    %v248 = vsel %vm138, %v116, 0
    %v251 = vsel %vm138, %v117, 0
    %253 = vmatprep.subr.mxu0 0.0
    %254 = vmatpush1.msra.mxu0 0.0
    %255 = vmatprep.subr.mxu0 0.0
    %256 = vmatpush1.msra.mxu0 0.0
    %257 = vmatprep.subr.mxu0 0.0
    %258 = vmatpush1.msra.mxu0 0.0
    %259 = vmatprep.subr.mxu0 0.0
    %260 = vmatpush1.msra.mxu0 0.0
    %261 = vmatprep.subr.mxu0 0.0
    %262 = vmatpush1.msra.mxu0 0.0
    %263 = vmatprep.subr.mxu0 0.0
    %264 = vmatpush1.msra.mxu0 0.0
    %265 = vmatprep.subr.mxu0 0.0
    %266 = vmatpush1.msra.mxu0 0.0
    %267 = vmatprep.subr.mxu0 0.0
    %268 = vmatpush1.msra.mxu0 0.0
    %269 = vmatprep.subr.mxu0 0.0
    %270 = vmatpush1.msra.mxu0 0.0
    %271 = vmatprep.subr.mxu0 0.0
    %272 = vmatpush1.msra.mxu0 0.0
    %273 = vmatprep.subr.mxu0 0.0
    %274 = vmatpush1.msra.mxu0 0.0
    %275 = vmatprep.subr.mxu0 0.0
    %276 = vmatpush1.msra.mxu0 0.0
    %277 = vmatprep.subr.mxu0 %v125
    %278 = vmatpush1.msra.mxu0 %v124
    %279 = vmatprep.subr.mxu0 %v123
    %280 = vmatpush1.msra.mxu0 %v122
    %281 = vmatprep.subr.mxu0 %v121
    %282 = vmatpush1.msra.mxu0 %v120
    %283 = vmatprep.subr.mxu0 %v119
    %284 = vmatpush1.msra.mxu0 %v118
    %285 = vmatprep.subr.mxu0 0.0
    %286 = vmatpush2.msra.mxu0 0.0
    %287 = vmatprep.subr.mxu0 0.0
    %288 = vmatpush2.msra.mxu0 0.0
    %289 = vmatprep.subr.mxu0 0.0
    %290 = vmatpush2.msra.mxu0 0.0
    %291 = vmatprep.subr.mxu0 0.0
    %292 = vmatpush2.msra.mxu0 0.0
    %293 = vmatprep.subr.mxu0 0.0
    %294 = vmatpush2.msra.mxu0 0.0
    %295 = vmatprep.subr.mxu0 0.0
    %296 = vmatpush2.msra.mxu0 0.0
    %297 = vmatprep.subr.mxu0 0.0
    %298 = vmatpush2.msra.mxu0 0.0
    %299 = vmatprep.subr.mxu0 0.0
    %300 = vmatpush2.msra.mxu0 0.0
    %301 = vmatprep.subr.mxu0 0.0
    %302 = vmatpush2.msra.mxu0 0.0
    %303 = vmatprep.subr.mxu0 0.0
    %304 = vmatpush2.msra.mxu0 0.0
    %305 = vmatprep.subr.mxu0 0.0
    %306 = vmatpush2.msra.mxu0 0.0
    %307 = vmatprep.subr.mxu0 0.0
    %308 = vmatpush2.msra.mxu0 0.0
    %309 = vmatprep.subr.mxu0 0.0
    %310 = vmatpush2.msra.mxu0 0.0
    %311 = vmatprep.subr.mxu0 0.0
    %312 = vmatpush2.msra.mxu0 0.0
    %313 = vmatprep.subr.mxu0 0.0
    %314 = vmatpush2.msra.mxu0 0.0
    %315 = vmatprep.subr.mxu0 0.0
    %316 = vmatpush2.msra.mxu0 0.0
    %317 = vmatprep.mubr.f32.mxu0 0.0
    %318 = vmatmul.mubr.f32.gmra.mxu0 %v140
    %v319 = vpop.f32.mrf.mxu0
    %v320 = vadd.f32 %v131, %v319
    %v321 = vpop.f32.mrf.mxu0
    %v322 = vadd.f32 %v135, %v321
    %323 = vmatprep.mubr.f32.mxu0 0.0
    %324 = vmatmul.mubr.f32.gmra.mxu0 %v143
    %v325 = vpop.f32.mrf.mxu0
    %v326 = vadd.f32 %v131, %v325
    %v327 = vpop.f32.mrf.mxu0
    %v328 = vadd.f32 %v135, %v327
    %329 = vmatprep.mubr.f32.mxu0 0.0
    %330 = vmatmul.mubr.f32.gmra.mxu0 %v146
    %v331 = vpop.f32.mrf.mxu0
    %v332 = vadd.f32 %v131, %v331
    %v333 = vpop.f32.mrf.mxu0
    %v334 = vadd.f32 %v135, %v333
    %335 = vmatprep.mubr.f32.mxu0 0.0
    %336 = vmatmul.mubr.f32.gmra.mxu0 %v149
    %v337 = vpop.f32.mrf.mxu0
    %v338 = vadd.f32 %v131, %v337
    %v339 = vpop.f32.mrf.mxu0
    %v340 = vadd.f32 %v135, %v339
    %341 = vmatprep.mubr.f32.mxu0 0.0
    %342 = vmatmul.mubr.f32.gmra.mxu0 %v152
    %v343 = vpop.f32.mrf.mxu0
    %v344 = vadd.f32 %v131, %v343
    %v345 = vpop.f32.mrf.mxu0
    %v346 = vadd.f32 %v135, %v345
    %347 = vmatprep.mubr.f32.mxu0 0.0
    %348 = vmatmul.mubr.f32.gmra.mxu0 %v155
    %v349 = vpop.f32.mrf.mxu0
    %v350 = vadd.f32 %v131, %v349
    %v351 = vpop.f32.mrf.mxu0
    %v352 = vadd.f32 %v135, %v351
    %353 = vmatprep.mubr.f32.mxu0 0.0
    %354 = vmatmul.mubr.f32.gmra.mxu0 %v158
    %v355 = vpop.f32.mrf.mxu0
    %v356 = vadd.f32 %v131, %v355
    %v357 = vpop.f32.mrf.mxu0
    %v358 = vadd.f32 %v135, %v357
    %359 = vmatprep.mubr.f32.mxu0 0.0
    %360 = vmatmul.mubr.f32.gmra.mxu0 %v161
    %v361 = vpop.f32.mrf.mxu0
    %v362 = vadd.f32 %v131, %v361
    %v363 = vpop.f32.mrf.mxu0
    %v364 = vadd.f32 %v135, %v363
    %365 = vmatprep.mubr.f32.mxu0 0.0
    %366 = vmatmul.mubr.f32.gmra.mxu0 %v164
    %v367 = vpop.f32.mrf.mxu0
    %v368 = vadd.f32 %v131, %v367
    %v369 = vpop.f32.mrf.mxu0
    %v370 = vadd.f32 %v135, %v369
    %371 = vmatprep.mubr.f32.mxu0 0.0
    %372 = vmatmul.mubr.f32.gmra.mxu0 %v167
    %v373 = vpop.f32.mrf.mxu0
    %v374 = vadd.f32 %v131, %v373
    %v375 = vpop.f32.mrf.mxu0
    %v376 = vadd.f32 %v135, %v375
    %377 = vmatprep.mubr.f32.mxu0 0.0
    %378 = vmatmul.mubr.f32.gmra.mxu0 %v170
    %v379 = vpop.f32.mrf.mxu0
    %v380 = vadd.f32 %v131, %v379
    %v381 = vpop.f32.mrf.mxu0
    %v382 = vadd.f32 %v135, %v381
    %383 = vmatprep.mubr.f32.mxu0 0.0
    %384 = vmatmul.mubr.f32.gmra.mxu0 %v173
    %v385 = vpop.f32.mrf.mxu0
    %v386 = vadd.f32 %v131, %v385
    %v387 = vpop.f32.mrf.mxu0
    %v388 = vadd.f32 %v135, %v387
    %389 = vmatprep.mubr.f32.mxu0 0.0
    %390 = vmatmul.mubr.f32.gmra.mxu0 %v176
    %v391 = vpop.f32.mrf.mxu0
    %v392 = vadd.f32 %v131, %v391
    %v393 = vpop.f32.mrf.mxu0
    %v394 = vadd.f32 %v135, %v393
    %395 = vmatprep.mubr.f32.mxu0 0.0
    %396 = vmatmul.mubr.f32.gmra.mxu0 %v179
    %v397 = vpop.f32.mrf.mxu0
    %v398 = vadd.f32 %v131, %v397
    %v399 = vpop.f32.mrf.mxu0
    %v400 = vadd.f32 %v135, %v399
    %401 = vmatprep.mubr.f32.mxu0 0.0
    %402 = vmatmul.mubr.f32.gmra.mxu0 %v182
    %v403 = vpop.f32.mrf.mxu0
    %v404 = vadd.f32 %v131, %v403
    %v405 = vpop.f32.mrf.mxu0
    %v406 = vadd.f32 %v135, %v405
    %407 = vmatprep.mubr.f32.mxu0 0.0
    %408 = vmatmul.mubr.f32.gmra.mxu0 %v185
    %v409 = vpop.f32.mrf.mxu0
    %v410 = vadd.f32 %v131, %v409
    %v411 = vpop.f32.mrf.mxu0
    %v412 = vadd.f32 %v135, %v411
    %413 = vmatprep.mubr.f32.mxu0 0.0
    %414 = vmatmul.mubr.f32.gmra.mxu0 %v188
    %v415 = vpop.f32.mrf.mxu0
    %v416 = vadd.f32 %v131, %v415
    %v417 = vpop.f32.mrf.mxu0
    %v418 = vadd.f32 %v135, %v417
    %419 = vmatprep.mubr.f32.mxu0 0.0
    %420 = vmatmul.mubr.f32.gmra.mxu0 %v191
    %v421 = vpop.f32.mrf.mxu0
    %v422 = vadd.f32 %v131, %v421
    %v423 = vpop.f32.mrf.mxu0
    %v424 = vadd.f32 %v135, %v423
    %425 = vmatprep.mubr.f32.mxu0 0.0
    %426 = vmatmul.mubr.f32.gmra.mxu0 %v194
    %v427 = vpop.f32.mrf.mxu0
    %v428 = vadd.f32 %v131, %v427
    %v429 = vpop.f32.mrf.mxu0
    %v430 = vadd.f32 %v135, %v429
    %431 = vmatprep.mubr.f32.mxu0 0.0
    %432 = vmatmul.mubr.f32.gmra.mxu0 %v197
    %v433 = vpop.f32.mrf.mxu0
    %v434 = vadd.f32 %v131, %v433
    %v435 = vpop.f32.mrf.mxu0
    %v436 = vadd.f32 %v135, %v435
    %437 = vmatprep.mubr.f32.mxu0 0.0
    %438 = vmatmul.mubr.f32.gmra.mxu0 %v200
    %v439 = vpop.f32.mrf.mxu0
    %v440 = vadd.f32 %v131, %v439
    %v441 = vpop.f32.mrf.mxu0
    %v442 = vadd.f32 %v135, %v441
    %443 = vmatprep.mubr.f32.mxu0 0.0
    %444 = vmatmul.mubr.f32.gmra.mxu0 %v203
    %v445 = vpop.f32.mrf.mxu0
    %v446 = vadd.f32 %v131, %v445
    %v447 = vpop.f32.mrf.mxu0
    %v448 = vadd.f32 %v135, %v447
    %449 = vmatprep.mubr.f32.mxu0 0.0
    %450 = vmatmul.mubr.f32.gmra.mxu0 %v206
    %v451 = vpop.f32.mrf.mxu0
    %v452 = vadd.f32 %v131, %v451
    %v453 = vpop.f32.mrf.mxu0
    %v454 = vadd.f32 %v135, %v453
    %455 = vmatprep.mubr.f32.mxu0 0.0
    %456 = vmatmul.mubr.f32.gmra.mxu0 %v209
    %v457 = vpop.f32.mrf.mxu0
    %v458 = vadd.f32 %v131, %v457
    %v459 = vpop.f32.mrf.mxu0
    %v460 = vadd.f32 %v135, %v459
    %461 = vmatprep.mubr.f32.mxu0 0.0
    %462 = vmatmul.mubr.f32.gmra.mxu0 %v212
    %v463 = vpop.f32.mrf.mxu0
    %v464 = vadd.f32 %v131, %v463
    %v465 = vpop.f32.mrf.mxu0
    %v466 = vadd.f32 %v135, %v465
    %467 = vmatprep.mubr.f32.mxu0 0.0
    %468 = vmatmul.mubr.f32.gmra.mxu0 %v215
    %v469 = vpop.f32.mrf.mxu0
    %v470 = vadd.f32 %v131, %v469
    %v471 = vpop.f32.mrf.mxu0
    %v472 = vadd.f32 %v135, %v471
    %473 = vmatprep.mubr.f32.mxu0 0.0
    %474 = vmatmul.mubr.f32.gmra.mxu0 %v218
    %v475 = vpop.f32.mrf.mxu0
    %v476 = vadd.f32 %v131, %v475
    %v477 = vpop.f32.mrf.mxu0
    %v478 = vadd.f32 %v135, %v477
    %479 = vmatprep.mubr.f32.mxu0 0.0
    %480 = vmatmul.mubr.f32.gmra.mxu0 %v221
    %v481 = vpop.f32.mrf.mxu0
    %v482 = vadd.f32 %v131, %v481
    %v483 = vpop.f32.mrf.mxu0
    %v484 = vadd.f32 %v135, %v483
    %485 = vmatprep.mubr.f32.mxu0 0.0
    %486 = vmatmul.mubr.f32.gmra.mxu0 %v224
    %v487 = vpop.f32.mrf.mxu0
    %v488 = vadd.f32 %v131, %v487
    %v489 = vpop.f32.mrf.mxu0
    %v490 = vadd.f32 %v135, %v489
    %491 = vmatprep.mubr.f32.mxu0 0.0
    %492 = vmatmul.mubr.f32.gmra.mxu0 %v227
    %v493 = vpop.f32.mrf.mxu0
    %v494 = vadd.f32 %v131, %v493
    %v495 = vpop.f32.mrf.mxu0
    %v496 = vadd.f32 %v135, %v495
    %497 = vmatprep.mubr.f32.mxu0 0.0
    %498 = vmatmul.mubr.f32.gmra.mxu0 %v230
    %v499 = vpop.f32.mrf.mxu0
    %v500 = vadd.f32 %v131, %v499
    %v501 = vpop.f32.mrf.mxu0
    %v502 = vadd.f32 %v135, %v501
    %503 = vmatprep.mubr.f32.mxu0 0.0
    %504 = vmatmul.mubr.f32.gmra.mxu0 %v233
    %v505 = vpop.f32.mrf.mxu0
    %v506 = vadd.f32 %v131, %v505
    %v507 = vpop.f32.mrf.mxu0
    %v508 = vadd.f32 %v135, %v507
    %509 = vmatprep.mubr.f32.mxu0 0.0
    %510 = vmatmul.mubr.f32.gmra.mxu0 %v236
    %v511 = vpop.f32.mrf.mxu0
    %v512 = vadd.f32 %v131, %v511
    %v513 = vpop.f32.mrf.mxu0
    %v514 = vadd.f32 %v135, %v513
    %515 = vmatprep.mubr.f32.mxu0 0.0
    %516 = vmatmul.mubr.f32.gmra.mxu0 %v239
    %v517 = vpop.f32.mrf.mxu0
    %v518 = vadd.f32 %v131, %v517
    %v519 = vpop.f32.mrf.mxu0
    %v520 = vadd.f32 %v135, %v519
    %521 = vmatprep.mubr.f32.mxu0 0.0
    %522 = vmatmul.mubr.f32.gmra.mxu0 %v242
    %v523 = vpop.f32.mrf.mxu0
    %v524 = vadd.f32 %v131, %v523
    %v525 = vpop.f32.mrf.mxu0
    %v526 = vadd.f32 %v135, %v525
    %527 = vmatprep.mubr.f32.mxu0 0.0
    %528 = vmatmul.mubr.f32.gmra.mxu0 %v245
    %v529 = vpop.f32.mrf.mxu0
    %v530 = vadd.f32 %v131, %v529
    %v531 = vpop.f32.mrf.mxu0
    %v532 = vadd.f32 %v135, %v531
    %533 = vmatprep.mubr.f32.mxu0 0.0
    %534 = vmatmul.mubr.f32.gmra.mxu0 %v248
    %v535 = vpop.f32.mrf.mxu0
    %v536 = vadd.f32 %v131, %v535
    %v537 = vpop.f32.mrf.mxu0
    %v538 = vadd.f32 %v135, %v537
    %539 = vmatprep.mubr.f32.mxu0 0.0
    %540 = vmatmul.mubr.f32.gmra.mxu0 %v251
    %v541 = vpop.f32.mrf.mxu0
    %v542 = vadd.f32 %v131, %v541
    %v543 = vpop.f32.mrf.mxu0
    %v544 = vadd.f32 %v135, %v543
    %545 = vdwg.mxu0
    %v546 = vxor.u32 %v320, 2147483648
    %v547 = vxor.u32 %v322, 2147483648
    %v548 = vxor.u32 %v326, 2147483648
    %v549 = vxor.u32 %v328, 2147483648
    %v550 = vxor.u32 %v332, 2147483648
    %v551 = vxor.u32 %v334, 2147483648
    %v552 = vxor.u32 %v338, 2147483648
    %v553 = vxor.u32 %v340, 2147483648
    %v554 = vxor.u32 %v344, 2147483648
    %v555 = vxor.u32 %v346, 2147483648
    %v556 = vxor.u32 %v350, 2147483648
    %v557 = vxor.u32 %v352, 2147483648
    %v558 = vxor.u32 %v356, 2147483648
    %v559 = vxor.u32 %v358, 2147483648
    %v560 = vxor.u32 %v362, 2147483648
    %v561 = vxor.u32 %v364, 2147483648
    %v562 = vxor.u32 %v368, 2147483648
    %v563 = vxor.u32 %v370, 2147483648
    %v564 = vxor.u32 %v374, 2147483648
    %v565 = vxor.u32 %v376, 2147483648
    %v566 = vxor.u32 %v380, 2147483648
    %v567 = vxor.u32 %v382, 2147483648
    %v568 = vxor.u32 %v386, 2147483648
    %v569 = vxor.u32 %v388, 2147483648
    %v570 = vxor.u32 %v392, 2147483648
    %v571 = vxor.u32 %v394, 2147483648
    %v572 = vxor.u32 %v398, 2147483648
    %v573 = vxor.u32 %v400, 2147483648
    %v574 = vxor.u32 %v404, 2147483648
    %v575 = vxor.u32 %v406, 2147483648
    %v576 = vxor.u32 %v410, 2147483648
    %v577 = vxor.u32 %v412, 2147483648
    %v578 = vxor.u32 %v416, 2147483648
    %v579 = vxor.u32 %v418, 2147483648
    %v580 = vxor.u32 %v422, 2147483648
    %v581 = vxor.u32 %v424, 2147483648
    %v582 = vxor.u32 %v428, 2147483648
    %v583 = vxor.u32 %v430, 2147483648
    %v584 = vxor.u32 %v434, 2147483648
    %v585 = vxor.u32 %v436, 2147483648
    %v586 = vxor.u32 %v440, 2147483648
    %v587 = vxor.u32 %v442, 2147483648
    %v588 = vxor.u32 %v446, 2147483648
    %v589 = vxor.u32 %v448, 2147483648
    %v590 = vxor.u32 %v452, 2147483648
    %v591 = vxor.u32 %v454, 2147483648
    %v592 = vxor.u32 %v458, 2147483648
    %v593 = vxor.u32 %v460, 2147483648
    %v594 = vxor.u32 %v464, 2147483648
    %v595 = vxor.u32 %v466, 2147483648
    %v596 = vxor.u32 %v470, 2147483648
    %v597 = vxor.u32 %v472, 2147483648
    %v598 = vxor.u32 %v476, 2147483648
    %v599 = vxor.u32 %v478, 2147483648
    %v600 = vxor.u32 %v482, 2147483648
    %v601 = vxor.u32 %v484, 2147483648
    %v602 = vxor.u32 %v488, 2147483648
    %v603 = vxor.u32 %v490, 2147483648
    %v604 = vxor.u32 %v494, 2147483648
    %v605 = vxor.u32 %v496, 2147483648
    %v606 = vxor.u32 %v500, 2147483648
    %v607 = vxor.u32 %v502, 2147483648
    %v608 = vxor.u32 %v506, 2147483648
    %v609 = vxor.u32 %v508, 2147483648
    %v610 = vxor.u32 %v512, 2147483648
    %v611 = vxor.u32 %v514, 2147483648
    %v612 = vxor.u32 %v518, 2147483648
    %v613 = vxor.u32 %v520, 2147483648
    %v614 = vxor.u32 %v524, 2147483648
    %v615 = vxor.u32 %v526, 2147483648
    %v616 = vxor.u32 %v530, 2147483648
    %v617 = vxor.u32 %v532, 2147483648
    %v618 = vxor.u32 %v536, 2147483648
    %v619 = vxor.u32 %v538, 2147483648
    %v620 = vxor.u32 %v542, 2147483648
    %v621 = vxor.u32 %v544, 2147483648
    %v622 = vmul.f32 %v546, 1.442695
    %v623 = vpow.pop %v622
    %v624 = vmul.f32 %v547, 1.442695
    %v625 = vpow.pop %v624
    %v626 = vmul.f32 %v548, 1.442695
    %v627 = vpow.pop %v626
    %v628 = vmul.f32 %v549, 1.442695
    %v629 = vpow.pop %v628
    %v630 = vmul.f32 %v550, 1.442695
    %v631 = vpow.pop %v630
    %v632 = vmul.f32 %v551, 1.442695
    %v633 = vpow.pop %v632
    %v634 = vmul.f32 %v552, 1.442695
    %v635 = vpow.pop %v634
    %v636 = vmul.f32 %v553, 1.442695
    %v637 = vpow.pop %v636
    %v638 = vmul.f32 %v554, 1.442695
    %v639 = vpow.pop %v638
    %v640 = vmul.f32 %v555, 1.442695
    %v641 = vpow.pop %v640
    %v642 = vmul.f32 %v556, 1.442695
    %v643 = vpow.pop %v642
    %v644 = vmul.f32 %v557, 1.442695
    %v645 = vpow.pop %v644
    %v646 = vmul.f32 %v558, 1.442695
    %v647 = vpow.pop %v646
    %v648 = vmul.f32 %v559, 1.442695
    %v649 = vpow.pop %v648
    %v650 = vmul.f32 %v560, 1.442695
    %v651 = vpow.pop %v650
    %v652 = vmul.f32 %v561, 1.442695
    %v653 = vpow.pop %v652
    %v654 = vmul.f32 %v562, 1.442695
    %v655 = vpow.pop %v654
    %v656 = vmul.f32 %v563, 1.442695
    %v657 = vpow.pop %v656
    %v658 = vmul.f32 %v564, 1.442695
    %v659 = vpow.pop %v658
    %v660 = vmul.f32 %v565, 1.442695
    %v661 = vpow.pop %v660
    %v662 = vmul.f32 %v566, 1.442695
    %v663 = vpow.pop %v662
    %v664 = vmul.f32 %v567, 1.442695
    %v665 = vpow.pop %v664
    %v666 = vmul.f32 %v568, 1.442695
    %v667 = vpow.pop %v666
    %v668 = vmul.f32 %v569, 1.442695
    %v669 = vpow.pop %v668
    %v670 = vmul.f32 %v570, 1.442695
    %v671 = vpow.pop %v670
    %v672 = vmul.f32 %v571, 1.442695
    %v673 = vpow.pop %v672
    %v674 = vmul.f32 %v572, 1.442695
    %v675 = vpow.pop %v674
    %v676 = vmul.f32 %v573, 1.442695
    %v677 = vpow.pop %v676
    %v678 = vmul.f32 %v574, 1.442695
    %v679 = vpow.pop %v678
    %v680 = vmul.f32 %v575, 1.442695
    %v681 = vpow.pop %v680
    %v682 = vmul.f32 %v576, 1.442695
    %v683 = vpow.pop %v682
    %v684 = vmul.f32 %v577, 1.442695
    %v685 = vpow.pop %v684
    %v686 = vmul.f32 %v578, 1.442695
    %v687 = vpow.pop %v686
    %v688 = vmul.f32 %v579, 1.442695
    %v689 = vpow.pop %v688
    %v690 = vmul.f32 %v580, 1.442695
    %v691 = vpow.pop %v690
    %v692 = vmul.f32 %v581, 1.442695
    %v693 = vpow.pop %v692
    %v694 = vmul.f32 %v582, 1.442695
    %v695 = vpow.pop %v694
    %v696 = vmul.f32 %v583, 1.442695
    %v697 = vpow.pop %v696
    %v698 = vmul.f32 %v584, 1.442695
    %v699 = vpow.pop %v698
    %v700 = vmul.f32 %v585, 1.442695
    %v701 = vpow.pop %v700
    %v702 = vmul.f32 %v586, 1.442695
    %v703 = vpow.pop %v702
    %v704 = vmul.f32 %v587, 1.442695
    %v705 = vpow.pop %v704
    %v706 = vmul.f32 %v588, 1.442695
    %v707 = vpow.pop %v706
    %v708 = vmul.f32 %v589, 1.442695
    %v709 = vpow.pop %v708
    %v710 = vmul.f32 %v590, 1.442695
    %v711 = vpow.pop %v710
    %v712 = vmul.f32 %v591, 1.442695
    %v713 = vpow.pop %v712
    %v714 = vmul.f32 %v592, 1.442695
    %v715 = vpow.pop %v714
    %v716 = vmul.f32 %v593, 1.442695
    %v717 = vpow.pop %v716
    %v718 = vmul.f32 %v594, 1.442695
    %v719 = vpow.pop %v718
    %v720 = vmul.f32 %v595, 1.442695
    %v721 = vpow.pop %v720
    %v722 = vmul.f32 %v596, 1.442695
    %v723 = vpow.pop %v722
    %v724 = vmul.f32 %v597, 1.442695
    %v725 = vpow.pop %v724
    %v726 = vmul.f32 %v598, 1.442695
    %v727 = vpow.pop %v726
    %v728 = vmul.f32 %v599, 1.442695
    %v729 = vpow.pop %v728
    %v730 = vmul.f32 %v600, 1.442695
    %v731 = vpow.pop %v730
    %v732 = vmul.f32 %v601, 1.442695
    %v733 = vpow.pop %v732
    %v734 = vmul.f32 %v602, 1.442695
    %v735 = vpow.pop %v734
    %v736 = vmul.f32 %v603, 1.442695
    %v737 = vpow.pop %v736
    %v738 = vmul.f32 %v604, 1.442695
    %v739 = vpow.pop %v738
    %v740 = vmul.f32 %v605, 1.442695
    %v741 = vpow.pop %v740
    %v742 = vmul.f32 %v606, 1.442695
    %v743 = vpow.pop %v742
    %v744 = vmul.f32 %v607, 1.442695
    %v745 = vpow.pop %v744
    %v746 = vmul.f32 %v608, 1.442695
    %v747 = vpow.pop %v746
    %v748 = vmul.f32 %v609, 1.442695
    %v749 = vpow.pop %v748
    %v750 = vmul.f32 %v610, 1.442695
    %v751 = vpow.pop %v750
    %v752 = vmul.f32 %v611, 1.442695
    %v753 = vpow.pop %v752
    %v754 = vmul.f32 %v612, 1.442695
    %v755 = vpow.pop %v754
    %v756 = vmul.f32 %v613, 1.442695
    %v757 = vpow.pop %v756
    %v758 = vmul.f32 %v614, 1.442695
    %v759 = vpow.pop %v758
    %v760 = vmul.f32 %v615, 1.442695
    %v761 = vpow.pop %v760
    %v762 = vmul.f32 %v616, 1.442695
    %v763 = vpow.pop %v762
    %v764 = vmul.f32 %v617, 1.442695
    %v765 = vpow.pop %v764
    %v766 = vmul.f32 %v618, 1.442695
    %v767 = vpow.pop %v766
    %v768 = vmul.f32 %v619, 1.442695
    %v769 = vpow.pop %v768
    %v770 = vmul.f32 %v620, 1.442695
    %v771 = vpow.pop %v770
    %v772 = vmul.f32 %v621, 1.442695
    %v773 = vpow.pop %v772
    %v774 = vadd.f32 %v623, 1.0
    %v775 = vadd.f32 %v625, 1.0
    %v776 = vadd.f32 %v627, 1.0
    %v777 = vadd.f32 %v629, 1.0
    %v778 = vadd.f32 %v631, 1.0
    %v779 = vadd.f32 %v633, 1.0
    %v780 = vadd.f32 %v635, 1.0
    %v781 = vadd.f32 %v637, 1.0
    %v782 = vadd.f32 %v639, 1.0
    %v783 = vadd.f32 %v641, 1.0
    %v784 = vadd.f32 %v643, 1.0
    %v785 = vadd.f32 %v645, 1.0
    %v786 = vadd.f32 %v647, 1.0
    %v787 = vadd.f32 %v649, 1.0
    %v788 = vadd.f32 %v651, 1.0
    %v789 = vadd.f32 %v653, 1.0
    %v790 = vadd.f32 %v655, 1.0
    %v791 = vadd.f32 %v657, 1.0
    %v792 = vadd.f32 %v659, 1.0
    %v793 = vadd.f32 %v661, 1.0
    %v794 = vadd.f32 %v663, 1.0
    %v795 = vadd.f32 %v665, 1.0
    %v796 = vadd.f32 %v667, 1.0
    %v797 = vadd.f32 %v669, 1.0
    %v798 = vadd.f32 %v671, 1.0
    %v799 = vadd.f32 %v673, 1.0
    %v800 = vadd.f32 %v675, 1.0
    %v801 = vadd.f32 %v677, 1.0
    %v802 = vadd.f32 %v679, 1.0
    %v803 = vadd.f32 %v681, 1.0
    %v804 = vadd.f32 %v683, 1.0
    %v805 = vadd.f32 %v685, 1.0
    %v806 = vadd.f32 %v687, 1.0
    %v807 = vadd.f32 %v689, 1.0
    %v808 = vadd.f32 %v691, 1.0
    %v809 = vadd.f32 %v693, 1.0
    %v810 = vadd.f32 %v695, 1.0
    %v811 = vadd.f32 %v697, 1.0
    %v812 = vadd.f32 %v699, 1.0
    %v813 = vadd.f32 %v701, 1.0
    %v814 = vadd.f32 %v703, 1.0
    %v815 = vadd.f32 %v705, 1.0
    %v816 = vadd.f32 %v707, 1.0
    %v817 = vadd.f32 %v709, 1.0
    %v818 = vadd.f32 %v711, 1.0
    %v819 = vadd.f32 %v713, 1.0
    %v820 = vadd.f32 %v715, 1.0
    %v821 = vadd.f32 %v717, 1.0
    %v822 = vadd.f32 %v719, 1.0
    %v823 = vadd.f32 %v721, 1.0
    %v824 = vadd.f32 %v723, 1.0
    %v825 = vadd.f32 %v725, 1.0
    %v826 = vadd.f32 %v727, 1.0
    %v827 = vadd.f32 %v729, 1.0
    %v828 = vadd.f32 %v731, 1.0
    %v829 = vadd.f32 %v733, 1.0
    %v830 = vadd.f32 %v735, 1.0
    %v831 = vadd.f32 %v737, 1.0
    %v832 = vadd.f32 %v739, 1.0
    %v833 = vadd.f32 %v741, 1.0
    %v834 = vadd.f32 %v743, 1.0
    %v835 = vadd.f32 %v745, 1.0
    %v836 = vadd.f32 %v747, 1.0
    %v837 = vadd.f32 %v749, 1.0
    %v838 = vadd.f32 %v751, 1.0
    %v839 = vadd.f32 %v753, 1.0
    %v840 = vadd.f32 %v755, 1.0
    %v841 = vadd.f32 %v757, 1.0
    %v842 = vadd.f32 %v759, 1.0
    %v843 = vadd.f32 %v761, 1.0
    %v844 = vadd.f32 %v763, 1.0
    %v845 = vadd.f32 %v765, 1.0
    %v846 = vadd.f32 %v767, 1.0
    %v847 = vadd.f32 %v769, 1.0
    %v848 = vadd.f32 %v771, 1.0
    %v849 = vadd.f32 %v773, 1.0
    %v850 = vrcp.pop %v774
    %v851 = vmul.f32 1.0, %v850
    %v852 = vrcp.pop %v775
    %v853 = vmul.f32 1.0, %v852
    %v854 = vrcp.pop %v776
    %v855 = vmul.f32 1.0, %v854
    %v856 = vrcp.pop %v777
    %v857 = vmul.f32 1.0, %v856
    %v858 = vrcp.pop %v778
    %v859 = vmul.f32 1.0, %v858
    %v860 = vrcp.pop %v779
    %v861 = vmul.f32 1.0, %v860
    %v862 = vrcp.pop %v780
    %v863 = vmul.f32 1.0, %v862
    %v864 = vrcp.pop %v781
    %v865 = vmul.f32 1.0, %v864
    %v866 = vrcp.pop %v782
    %v867 = vmul.f32 1.0, %v866
    %v868 = vrcp.pop %v783
    %v869 = vmul.f32 1.0, %v868
    %v870 = vrcp.pop %v784
    %v871 = vmul.f32 1.0, %v870
    %v872 = vrcp.pop %v785
    %v873 = vmul.f32 1.0, %v872
    %v874 = vrcp.pop %v786
    %v875 = vmul.f32 1.0, %v874
    %v876 = vrcp.pop %v787
    %v877 = vmul.f32 1.0, %v876
    %v878 = vrcp.pop %v788
    %v879 = vmul.f32 1.0, %v878
    %v880 = vrcp.pop %v789
    %v881 = vmul.f32 1.0, %v880
    %v882 = vrcp.pop %v790
    %v883 = vmul.f32 1.0, %v882
    %v884 = vrcp.pop %v791
    %v885 = vmul.f32 1.0, %v884
    %v886 = vrcp.pop %v792
    %v887 = vmul.f32 1.0, %v886
    %v888 = vrcp.pop %v793
    %v889 = vmul.f32 1.0, %v888
    %v890 = vrcp.pop %v794
    %v891 = vmul.f32 1.0, %v890
    %v892 = vrcp.pop %v795
    %v893 = vmul.f32 1.0, %v892
    %v894 = vrcp.pop %v796
    %v895 = vmul.f32 1.0, %v894
    %v896 = vrcp.pop %v797
    %v897 = vmul.f32 1.0, %v896
    %v898 = vrcp.pop %v798
    %v899 = vmul.f32 1.0, %v898
    %v900 = vrcp.pop %v799
    %v901 = vmul.f32 1.0, %v900
    %v902 = vrcp.pop %v800
    %v903 = vmul.f32 1.0, %v902
    %v904 = vrcp.pop %v801
    %v905 = vmul.f32 1.0, %v904
    %v906 = vrcp.pop %v802
    %v907 = vmul.f32 1.0, %v906
    %v908 = vrcp.pop %v803
    %v909 = vmul.f32 1.0, %v908
    %v910 = vrcp.pop %v804
    %v911 = vmul.f32 1.0, %v910
    %v912 = vrcp.pop %v805
    %v913 = vmul.f32 1.0, %v912
    %v914 = vrcp.pop %v806
    %v915 = vmul.f32 1.0, %v914
    %v916 = vrcp.pop %v807
    %v917 = vmul.f32 1.0, %v916
    %v918 = vrcp.pop %v808
    %v919 = vmul.f32 1.0, %v918
    %v920 = vrcp.pop %v809
    %v921 = vmul.f32 1.0, %v920
    %v922 = vrcp.pop %v810
    %v923 = vmul.f32 1.0, %v922
    %v924 = vrcp.pop %v811
    %v925 = vmul.f32 1.0, %v924
    %v926 = vrcp.pop %v812
    %v927 = vmul.f32 1.0, %v926
    %v928 = vrcp.pop %v813
    %v929 = vmul.f32 1.0, %v928
    %v930 = vrcp.pop %v814
    %v931 = vmul.f32 1.0, %v930
    %v932 = vrcp.pop %v815
    %v933 = vmul.f32 1.0, %v932
    %v934 = vrcp.pop %v816
    %v935 = vmul.f32 1.0, %v934
    %v936 = vrcp.pop %v817
    %v937 = vmul.f32 1.0, %v936
    %v938 = vrcp.pop %v818
    %v939 = vmul.f32 1.0, %v938
    %v940 = vrcp.pop %v819
    %v941 = vmul.f32 1.0, %v940
    %v942 = vrcp.pop %v820
    %v943 = vmul.f32 1.0, %v942
    %v944 = vrcp.pop %v821
    %v945 = vmul.f32 1.0, %v944
    %v946 = vrcp.pop %v822
    %v947 = vmul.f32 1.0, %v946
    %v948 = vrcp.pop %v823
    %v949 = vmul.f32 1.0, %v948
    %v950 = vrcp.pop %v824
    %v951 = vmul.f32 1.0, %v950
    %v952 = vrcp.pop %v825
    %v953 = vmul.f32 1.0, %v952
    %v954 = vrcp.pop %v826
    %v955 = vmul.f32 1.0, %v954
    %v956 = vrcp.pop %v827
    %v957 = vmul.f32 1.0, %v956
    %v958 = vrcp.pop %v828
    %v959 = vmul.f32 1.0, %v958
    %v960 = vrcp.pop %v829
    %v961 = vmul.f32 1.0, %v960
    %v962 = vrcp.pop %v830
    %v963 = vmul.f32 1.0, %v962
    %v964 = vrcp.pop %v831
    %v965 = vmul.f32 1.0, %v964
    %v966 = vrcp.pop %v832
    %v967 = vmul.f32 1.0, %v966
    %v968 = vrcp.pop %v833
    %v969 = vmul.f32 1.0, %v968
    %v970 = vrcp.pop %v834
    %v971 = vmul.f32 1.0, %v970
    %v972 = vrcp.pop %v835
    %v973 = vmul.f32 1.0, %v972
    %v974 = vrcp.pop %v836
    %v975 = vmul.f32 1.0, %v974
    %v976 = vrcp.pop %v837
    %v977 = vmul.f32 1.0, %v976
    %v978 = vrcp.pop %v838
    %v979 = vmul.f32 1.0, %v978
    %v980 = vrcp.pop %v839
    %v981 = vmul.f32 1.0, %v980
    %v982 = vrcp.pop %v840
    %v983 = vmul.f32 1.0, %v982
    %v984 = vrcp.pop %v841
    %v985 = vmul.f32 1.0, %v984
    %v986 = vrcp.pop %v842
    %v987 = vmul.f32 1.0, %v986
    %v988 = vrcp.pop %v843
    %v989 = vmul.f32 1.0, %v988
    %v990 = vrcp.pop %v844
    %v991 = vmul.f32 1.0, %v990
    %v992 = vrcp.pop %v845
    %v993 = vmul.f32 1.0, %v992
    %v994 = vrcp.pop %v846
    %v995 = vmul.f32 1.0, %v994
    %v996 = vrcp.pop %v847
    %v997 = vmul.f32 1.0, %v996
    %v998 = vrcp.pop %v848
    %v999 = vmul.f32 1.0, %v998
    %v1000 = vrcp.pop %v849
    %v1001 = vmul.f32 1.0, %v1000
    %v1002 = vmul.f32 %v320, %v851
    %v1003 = vmul.f32 %v322, %v853
    %v1004 = vmul.f32 %v326, %v855
    %v1005 = vmul.f32 %v328, %v857
    %v1006 = vmul.f32 %v332, %v859
    %v1007 = vmul.f32 %v334, %v861
    %v1008 = vmul.f32 %v338, %v863
    %v1009 = vmul.f32 %v340, %v865
    %v1010 = vmul.f32 %v344, %v867
    %v1011 = vmul.f32 %v346, %v869
    %v1012 = vmul.f32 %v350, %v871
    %v1013 = vmul.f32 %v352, %v873
    %v1014 = vmul.f32 %v356, %v875
    %v1015 = vmul.f32 %v358, %v877
    %v1016 = vmul.f32 %v362, %v879
    %v1017 = vmul.f32 %v364, %v881
    %v1018 = vmul.f32 %v368, %v883
    %v1019 = vmul.f32 %v370, %v885
    %v1020 = vmul.f32 %v374, %v887
    %v1021 = vmul.f32 %v376, %v889
    %v1022 = vmul.f32 %v380, %v891
    %v1023 = vmul.f32 %v382, %v893
    %v1024 = vmul.f32 %v386, %v895
    %v1025 = vmul.f32 %v388, %v897
    %v1026 = vmul.f32 %v392, %v899
    %v1027 = vmul.f32 %v394, %v901
    %v1028 = vmul.f32 %v398, %v903
    %v1029 = vmul.f32 %v400, %v905
    %v1030 = vmul.f32 %v404, %v907
    %v1031 = vmul.f32 %v406, %v909
    %v1032 = vmul.f32 %v410, %v911
    %v1033 = vmul.f32 %v412, %v913
    %v1034 = vmul.f32 %v416, %v915
    %v1035 = vmul.f32 %v418, %v917
    %v1036 = vmul.f32 %v422, %v919
    %v1037 = vmul.f32 %v424, %v921
    %v1038 = vmul.f32 %v428, %v923
    %v1039 = vmul.f32 %v430, %v925
    %v1040 = vmul.f32 %v434, %v927
    %v1041 = vmul.f32 %v436, %v929
    %v1042 = vmul.f32 %v440, %v931
    %v1043 = vmul.f32 %v442, %v933
    %v1044 = vmul.f32 %v446, %v935
    %v1045 = vmul.f32 %v448, %v937
    %v1046 = vmul.f32 %v452, %v939
    %v1047 = vmul.f32 %v454, %v941
    %v1048 = vmul.f32 %v458, %v943
    %v1049 = vmul.f32 %v460, %v945
    %v1050 = vmul.f32 %v464, %v947
    %v1051 = vmul.f32 %v466, %v949
    %v1052 = vmul.f32 %v470, %v951
    %v1053 = vmul.f32 %v472, %v953
    %v1054 = vmul.f32 %v476, %v955
    %v1055 = vmul.f32 %v478, %v957
    %v1056 = vmul.f32 %v482, %v959
    %v1057 = vmul.f32 %v484, %v961
    %v1058 = vmul.f32 %v488, %v963
    %v1059 = vmul.f32 %v490, %v965
    %v1060 = vmul.f32 %v494, %v967
    %v1061 = vmul.f32 %v496, %v969
    %v1062 = vmul.f32 %v500, %v971
    %v1063 = vmul.f32 %v502, %v973
    %v1064 = vmul.f32 %v506, %v975
    %v1065 = vmul.f32 %v508, %v977
    %v1066 = vmul.f32 %v512, %v979
    %v1067 = vmul.f32 %v514, %v981
    %v1068 = vmul.f32 %v518, %v983
    %v1069 = vmul.f32 %v520, %v985
    %v1070 = vmul.f32 %v524, %v987
    %v1071 = vmul.f32 %v526, %v989
    %v1072 = vmul.f32 %v530, %v991
    %v1073 = vmul.f32 %v532, %v993
    %v1074 = vmul.f32 %v536, %v995
    %v1075 = vmul.f32 %v538, %v997
    %v1076 = vmul.f32 %v542, %v999
    %v1077 = vmul.f32 %v544, %v1001
    %v1078 = vld [vmem:[#allocation5] sm:$0xff]
    %v1079 = vld [vmem:[#allocation5 + $0x8] sm:$0xff]
    %v1080 = vld [vmem:[#allocation5 + $0x10] sm:$0xff]
    %v1081 = vld [vmem:[#allocation5 + $0x18] sm:$0xff]
    %v1082 = vld [vmem:[#allocation5 + $0x20] sm:$0xff]
    %v1083 = vld [vmem:[#allocation5 + $0x28] sm:$0xff]
    %v1084 = vld [vmem:[#allocation5 + $0x30] sm:$0xff]
    %v1085 = vld [vmem:[#allocation5 + $0x38] sm:$0xff]
    %v1086 = vld [vmem:[#allocation5 + $0x40] sm:$0xff]
    %v1087 = vld [vmem:[#allocation5 + $0x48] sm:$0xff]
    %v1088 = vld [vmem:[#allocation5 + $0x50] sm:$0xff]
    %v1089 = vld [vmem:[#allocation5 + $0x58] sm:$0xff]
    %v1090 = vld [vmem:[#allocation5 + $0x60] sm:$0xff]
    %v1091 = vld [vmem:[#allocation5 + $0x68] sm:$0xff]
    %v1092 = vld [vmem:[#allocation5 + $0x70] sm:$0xff]
    %v1093 = vld [vmem:[#allocation5 + $0x78] sm:$0xff]
    %v1094 = vld [vmem:[#allocation5 + $0x80] sm:$0xff]
    %v1095 = vld [vmem:[#allocation5 + $0x88] sm:$0xff]
    %v1096 = vld [vmem:[#allocation5 + $0x90] sm:$0xff]
    %v1097 = vld [vmem:[#allocation5 + $0x98] sm:$0xff]
    %v1098 = vld [vmem:[#allocation5 + $0xa0] sm:$0xff]
    %v1099 = vld [vmem:[#allocation5 + $0xa8] sm:$0xff]
    %v1100 = vld [vmem:[#allocation5 + $0xb0] sm:$0xff]
    %v1101 = vld [vmem:[#allocation5 + $0xb8] sm:$0xff]
    %v1102 = vld [vmem:[#allocation5 + $0xc0] sm:$0xff]
    %v1103 = vld [vmem:[#allocation5 + $0xc8] sm:$0xff]
    %v1104 = vld [vmem:[#allocation5 + $0xd0] sm:$0xff]
    %v1105 = vld [vmem:[#allocation5 + $0xd8] sm:$0xff]
    %v1106 = vld [vmem:[#allocation5 + $0xe0] sm:$0xff]
    %v1107 = vld [vmem:[#allocation5 + $0xe8] sm:$0xff]
    %v1108 = vld [vmem:[#allocation5 + $0xf0] sm:$0xff]
    %v1109 = vld [vmem:[#allocation5 + $0xf8] sm:$0xff]
    %v1110 = vld [vmem:[#allocation5 + $0x100] sm:$0xff]
    %v1111 = vld [vmem:[#allocation5 + $0x108] sm:$0xff]
    %v1112 = vld [vmem:[#allocation5 + $0x110] sm:$0xff]
    %v1113 = vld [vmem:[#allocation5 + $0x118] sm:$0xff]
    %v1114 = vld [vmem:[#allocation5 + $0x120] sm:$0xff]
    %v1115 = vld [vmem:[#allocation5 + $0x128] sm:$0xff]
    %v1116 = vld [vmem:[#allocation5 + $0x130] sm:$0xff]
    %v1117 = vld [vmem:[#allocation5 + $0x138] sm:$0xff]
    %v1118 = vld [vmem:[#allocation5 + $0x140] sm:$0xff]
    %v1119 = vld [vmem:[#allocation5 + $0x148] sm:$0xff]
    %v1120 = vld [vmem:[#allocation5 + $0x150] sm:$0xff]
    %v1121 = vld [vmem:[#allocation5 + $0x158] sm:$0xff]
    %v1122 = vld [vmem:[#allocation5 + $0x160] sm:$0xff]
    %v1123 = vld [vmem:[#allocation5 + $0x168] sm:$0xff]
    %v1124 = vld [vmem:[#allocation5 + $0x170] sm:$0xff]
    %v1125 = vld [vmem:[#allocation5 + $0x178] sm:$0xff]
    %v1126 = vld [vmem:[#allocation5 + $0x180] sm:$0xff]
    %v1127 = vld [vmem:[#allocation5 + $0x188] sm:$0xff]
    %v1128 = vld [vmem:[#allocation5 + $0x190] sm:$0xff]
    %v1129 = vld [vmem:[#allocation5 + $0x198] sm:$0xff]
    %v1130 = vld [vmem:[#allocation5 + $0x1a0] sm:$0xff]
    %v1131 = vld [vmem:[#allocation5 + $0x1a8] sm:$0xff]
    %v1132 = vld [vmem:[#allocation5 + $0x1b0] sm:$0xff]
    %v1133 = vld [vmem:[#allocation5 + $0x1b8] sm:$0xff]
    %v1134 = vld [vmem:[#allocation5 + $0x1c0] sm:$0xff]
    %v1135 = vld [vmem:[#allocation5 + $0x1c8] sm:$0xff]
    %v1136 = vld [vmem:[#allocation5 + $0x1d0] sm:$0xff]
    %v1137 = vld [vmem:[#allocation5 + $0x1d8] sm:$0xff]
    %v1138 = vld [vmem:[#allocation5 + $0x1e0] sm:$0xff]
    %v1139 = vld [vmem:[#allocation5 + $0x1e8] sm:$0xff]
    %v1140 = vld [vmem:[#allocation5 + $0x1f0] sm:$0xff]
    %v1141 = vld [vmem:[#allocation5 + $0x1f8] sm:$0xff]
    %v1142 = vld [vmem:[%s4] sm:$0x3]
    %v1144 = vlaneseq
    %v1145 = vshrl.u32 %v1144, 7
    %v1146 = vsub.s32 0, %v1145
    %v1147 = vrot.slane %v1142, %v1146
    %v1148 = vlaneseq
    %v1149 = vshrl.u32 %v1148, 7
    %v1150 = vsub.s32 1, %v1149
    %v1151 = vrot.slane %v1142, %v1150
    %1154 = vmatprep.subr.mxu0 %v1109
    %1155 = vmatpush1.msra.mxu0 %v1108
    %1156 = vmatprep.subr.mxu0 %v1107
    %1157 = vmatpush1.msra.mxu0 %v1106
    %1158 = vmatprep.subr.mxu0 %v1105
    %1159 = vmatpush1.msra.mxu0 %v1104
    %1160 = vmatprep.subr.mxu0 %v1103
    %1161 = vmatpush1.msra.mxu0 %v1102
    %1162 = vmatprep.subr.mxu0 %v1101
    %1163 = vmatpush1.msra.mxu0 %v1100
    %1164 = vmatprep.subr.mxu0 %v1099
    %1165 = vmatpush1.msra.mxu0 %v1098
    %1166 = vmatprep.subr.mxu0 %v1097
    %1167 = vmatpush1.msra.mxu0 %v1096
    %1168 = vmatprep.subr.mxu0 %v1095
    %1169 = vmatpush1.msra.mxu0 %v1094
    %1170 = vmatprep.subr.mxu0 %v1093
    %1171 = vmatpush1.msra.mxu0 %v1092
    %1172 = vmatprep.subr.mxu0 %v1091
    %1173 = vmatpush1.msra.mxu0 %v1090
    %1174 = vmatprep.subr.mxu0 %v1089
    %1175 = vmatpush1.msra.mxu0 %v1088
    %1176 = vmatprep.subr.mxu0 %v1087
    %1177 = vmatpush1.msra.mxu0 %v1086
    %1178 = vmatprep.subr.mxu0 %v1085
    %1179 = vmatpush1.msra.mxu0 %v1084
    %1180 = vmatprep.subr.mxu0 %v1083
    %1181 = vmatpush1.msra.mxu0 %v1082
    %1182 = vmatprep.subr.mxu0 %v1081
    %1183 = vmatpush1.msra.mxu0 %v1080
    %1184 = vmatprep.subr.mxu0 %v1079
    %1185 = vmatpush1.msra.mxu0 %v1078
    %1186 = vmatprep.subr.mxu0 %v1141
    %1187 = vmatpush2.msra.mxu0 %v1140
    %1188 = vmatprep.subr.mxu0 %v1139
    %1189 = vmatpush2.msra.mxu0 %v1138
    %1190 = vmatprep.subr.mxu0 %v1137
    %1191 = vmatpush2.msra.mxu0 %v1136
    %1192 = vmatprep.subr.mxu0 %v1135
    %1193 = vmatpush2.msra.mxu0 %v1134
    %1194 = vmatprep.subr.mxu0 %v1133
    %1195 = vmatpush2.msra.mxu0 %v1132
    %1196 = vmatprep.subr.mxu0 %v1131
    %1197 = vmatpush2.msra.mxu0 %v1130
    %1198 = vmatprep.subr.mxu0 %v1129
    %1199 = vmatpush2.msra.mxu0 %v1128
    %1200 = vmatprep.subr.mxu0 %v1127
    %1201 = vmatpush2.msra.mxu0 %v1126
    %1202 = vmatprep.subr.mxu0 %v1125
    %1203 = vmatpush2.msra.mxu0 %v1124
    %1204 = vmatprep.subr.mxu0 %v1123
    %1205 = vmatpush2.msra.mxu0 %v1122
    %1206 = vmatprep.subr.mxu0 %v1121
    %1207 = vmatpush2.msra.mxu0 %v1120
    %1208 = vmatprep.subr.mxu0 %v1119
    %1209 = vmatpush2.msra.mxu0 %v1118
    %1210 = vmatprep.subr.mxu0 %v1117
    %1211 = vmatpush2.msra.mxu0 %v1116
    %1212 = vmatprep.subr.mxu0 %v1115
    %1213 = vmatpush2.msra.mxu0 %v1114
    %1214 = vmatprep.subr.mxu0 %v1113
    %1215 = vmatpush2.msra.mxu0 %v1112
    %1216 = vmatprep.subr.mxu0 %v1111
    %1217 = vmatpush2.msra.mxu0 %v1110
    %1218 = vmatprep.mubr.f32.mxu0 %v1003
    %1219 = vmatmul.mubr.f32.gmra.mxu0 %v1002
    %v1220 = vpop.f32.mrf.mxu0
    %v1221 = vadd.f32 %v1147, %v1220
    %v1222 = vpop.f32.mrf.mxu0
    %v1223 = vadd.f32 %v1151, %v1222
    %1224 = vmatprep.mubr.f32.mxu0 %v1005
    %1225 = vmatmul.mubr.f32.gmra.mxu0 %v1004
    %v1226 = vpop.f32.mrf.mxu0
    %v1227 = vadd.f32 %v1147, %v1226
    %v1228 = vpop.f32.mrf.mxu0
    %v1229 = vadd.f32 %v1151, %v1228
    %1230 = vmatprep.mubr.f32.mxu0 %v1007
    %1231 = vmatmul.mubr.f32.gmra.mxu0 %v1006
    %v1232 = vpop.f32.mrf.mxu0
    %v1233 = vadd.f32 %v1147, %v1232
    %v1234 = vpop.f32.mrf.mxu0
    %v1235 = vadd.f32 %v1151, %v1234
    %1236 = vmatprep.mubr.f32.mxu0 %v1009
    %1237 = vmatmul.mubr.f32.gmra.mxu0 %v1008
    %v1238 = vpop.f32.mrf.mxu0
    %v1239 = vadd.f32 %v1147, %v1238
    %v1240 = vpop.f32.mrf.mxu0
    %v1241 = vadd.f32 %v1151, %v1240
    %1242 = vmatprep.mubr.f32.mxu0 %v1011
    %1243 = vmatmul.mubr.f32.gmra.mxu0 %v1010
    %v1244 = vpop.f32.mrf.mxu0
    %v1245 = vadd.f32 %v1147, %v1244
    %v1246 = vpop.f32.mrf.mxu0
    %v1247 = vadd.f32 %v1151, %v1246
    %1248 = vmatprep.mubr.f32.mxu0 %v1013
    %1249 = vmatmul.mubr.f32.gmra.mxu0 %v1012
    %v1250 = vpop.f32.mrf.mxu0
    %v1251 = vadd.f32 %v1147, %v1250
    %v1252 = vpop.f32.mrf.mxu0
    %v1253 = vadd.f32 %v1151, %v1252
    %1254 = vmatprep.mubr.f32.mxu0 %v1015
    %1255 = vmatmul.mubr.f32.gmra.mxu0 %v1014
    %v1256 = vpop.f32.mrf.mxu0
    %v1257 = vadd.f32 %v1147, %v1256
    %v1258 = vpop.f32.mrf.mxu0
    %v1259 = vadd.f32 %v1151, %v1258
    %1260 = vmatprep.mubr.f32.mxu0 %v1017
    %1261 = vmatmul.mubr.f32.gmra.mxu0 %v1016
    %v1262 = vpop.f32.mrf.mxu0
    %v1263 = vadd.f32 %v1147, %v1262
    %v1264 = vpop.f32.mrf.mxu0
    %v1265 = vadd.f32 %v1151, %v1264
    %1266 = vmatprep.mubr.f32.mxu0 %v1019
    %1267 = vmatmul.mubr.f32.gmra.mxu0 %v1018
    %v1268 = vpop.f32.mrf.mxu0
    %v1269 = vadd.f32 %v1147, %v1268
    %v1270 = vpop.f32.mrf.mxu0
    %v1271 = vadd.f32 %v1151, %v1270
    %1272 = vmatprep.mubr.f32.mxu0 %v1021
    %1273 = vmatmul.mubr.f32.gmra.mxu0 %v1020
    %v1274 = vpop.f32.mrf.mxu0
    %v1275 = vadd.f32 %v1147, %v1274
    %v1276 = vpop.f32.mrf.mxu0
    %v1277 = vadd.f32 %v1151, %v1276
    %1278 = vmatprep.mubr.f32.mxu0 %v1023
    %1279 = vmatmul.mubr.f32.gmra.mxu0 %v1022
    %v1280 = vpop.f32.mrf.mxu0
    %v1281 = vadd.f32 %v1147, %v1280
    %v1282 = vpop.f32.mrf.mxu0
    %v1283 = vadd.f32 %v1151, %v1282
    %1284 = vmatprep.mubr.f32.mxu0 %v1025
    %1285 = vmatmul.mubr.f32.gmra.mxu0 %v1024
    %v1286 = vpop.f32.mrf.mxu0
    %v1287 = vadd.f32 %v1147, %v1286
    %v1288 = vpop.f32.mrf.mxu0
    %v1289 = vadd.f32 %v1151, %v1288
    %1290 = vmatprep.mubr.f32.mxu0 %v1027
    %1291 = vmatmul.mubr.f32.gmra.mxu0 %v1026
    %v1292 = vpop.f32.mrf.mxu0
    %v1293 = vadd.f32 %v1147, %v1292
    %v1294 = vpop.f32.mrf.mxu0
    %v1295 = vadd.f32 %v1151, %v1294
    %1296 = vmatprep.mubr.f32.mxu0 %v1029
    %1297 = vmatmul.mubr.f32.gmra.mxu0 %v1028
    %v1298 = vpop.f32.mrf.mxu0
    %v1299 = vadd.f32 %v1147, %v1298
    %v1300 = vpop.f32.mrf.mxu0
    %v1301 = vadd.f32 %v1151, %v1300
    %1302 = vmatprep.mubr.f32.mxu0 %v1031
    %1303 = vmatmul.mubr.f32.gmra.mxu0 %v1030
    %v1304 = vpop.f32.mrf.mxu0
    %v1305 = vadd.f32 %v1147, %v1304
    %v1306 = vpop.f32.mrf.mxu0
    %v1307 = vadd.f32 %v1151, %v1306
    %1308 = vmatprep.mubr.f32.mxu0 %v1033
    %1309 = vmatmul.mubr.f32.gmra.mxu0 %v1032
    %v1310 = vpop.f32.mrf.mxu0
    %v1311 = vadd.f32 %v1147, %v1310
    %v1312 = vpop.f32.mrf.mxu0
    %v1313 = vadd.f32 %v1151, %v1312
    %1314 = vmatprep.mubr.f32.mxu0 %v1035
    %1315 = vmatmul.mubr.f32.gmra.mxu0 %v1034
    %v1316 = vpop.f32.mrf.mxu0
    %v1317 = vadd.f32 %v1147, %v1316
    %v1318 = vpop.f32.mrf.mxu0
    %v1319 = vadd.f32 %v1151, %v1318
    %1320 = vmatprep.mubr.f32.mxu0 %v1037
    %1321 = vmatmul.mubr.f32.gmra.mxu0 %v1036
    %v1322 = vpop.f32.mrf.mxu0
    %v1323 = vadd.f32 %v1147, %v1322
    %v1324 = vpop.f32.mrf.mxu0
    %v1325 = vadd.f32 %v1151, %v1324
    %1326 = vmatprep.mubr.f32.mxu0 %v1039
    %1327 = vmatmul.mubr.f32.gmra.mxu0 %v1038
    %v1328 = vpop.f32.mrf.mxu0
    %v1329 = vadd.f32 %v1147, %v1328
    %v1330 = vpop.f32.mrf.mxu0
    %v1331 = vadd.f32 %v1151, %v1330
    %1332 = vmatprep.mubr.f32.mxu0 %v1041
    %1333 = vmatmul.mubr.f32.gmra.mxu0 %v1040
    %v1334 = vpop.f32.mrf.mxu0
    %v1335 = vadd.f32 %v1147, %v1334
    %v1336 = vpop.f32.mrf.mxu0
    %v1337 = vadd.f32 %v1151, %v1336
    %1338 = vmatprep.mubr.f32.mxu0 %v1043
    %1339 = vmatmul.mubr.f32.gmra.mxu0 %v1042
    %v1340 = vpop.f32.mrf.mxu0
    %v1341 = vadd.f32 %v1147, %v1340
    %v1342 = vpop.f32.mrf.mxu0
    %v1343 = vadd.f32 %v1151, %v1342
    %1344 = vmatprep.mubr.f32.mxu0 %v1045
    %1345 = vmatmul.mubr.f32.gmra.mxu0 %v1044
    %v1346 = vpop.f32.mrf.mxu0
    %v1347 = vadd.f32 %v1147, %v1346
    %v1348 = vpop.f32.mrf.mxu0
    %v1349 = vadd.f32 %v1151, %v1348
    %1350 = vmatprep.mubr.f32.mxu0 %v1047
    %1351 = vmatmul.mubr.f32.gmra.mxu0 %v1046
    %v1352 = vpop.f32.mrf.mxu0
    %v1353 = vadd.f32 %v1147, %v1352
    %v1354 = vpop.f32.mrf.mxu0
    %v1355 = vadd.f32 %v1151, %v1354
    %1356 = vmatprep.mubr.f32.mxu0 %v1049
    %1357 = vmatmul.mubr.f32.gmra.mxu0 %v1048
    %v1358 = vpop.f32.mrf.mxu0
    %v1359 = vadd.f32 %v1147, %v1358
    %v1360 = vpop.f32.mrf.mxu0
    %v1361 = vadd.f32 %v1151, %v1360
    %1362 = vmatprep.mubr.f32.mxu0 %v1051
    %1363 = vmatmul.mubr.f32.gmra.mxu0 %v1050
    %v1364 = vpop.f32.mrf.mxu0
    %v1365 = vadd.f32 %v1147, %v1364
    %v1366 = vpop.f32.mrf.mxu0
    %v1367 = vadd.f32 %v1151, %v1366
    %1368 = vmatprep.mubr.f32.mxu0 %v1053
    %1369 = vmatmul.mubr.f32.gmra.mxu0 %v1052
    %v1370 = vpop.f32.mrf.mxu0
    %v1371 = vadd.f32 %v1147, %v1370
    %v1372 = vpop.f32.mrf.mxu0
    %v1373 = vadd.f32 %v1151, %v1372
    %1374 = vmatprep.mubr.f32.mxu0 %v1055
    %1375 = vmatmul.mubr.f32.gmra.mxu0 %v1054
    %v1376 = vpop.f32.mrf.mxu0
    %v1377 = vadd.f32 %v1147, %v1376
    %v1378 = vpop.f32.mrf.mxu0
    %v1379 = vadd.f32 %v1151, %v1378
    %1380 = vmatprep.mubr.f32.mxu0 %v1057
    %1381 = vmatmul.mubr.f32.gmra.mxu0 %v1056
    %v1382 = vpop.f32.mrf.mxu0
    %v1383 = vadd.f32 %v1147, %v1382
    %v1384 = vpop.f32.mrf.mxu0
    %v1385 = vadd.f32 %v1151, %v1384
    %1386 = vmatprep.mubr.f32.mxu0 %v1059
    %1387 = vmatmul.mubr.f32.gmra.mxu0 %v1058
    %v1388 = vpop.f32.mrf.mxu0
    %v1389 = vadd.f32 %v1147, %v1388
    %v1390 = vpop.f32.mrf.mxu0
    %v1391 = vadd.f32 %v1151, %v1390
    %1392 = vmatprep.mubr.f32.mxu0 %v1061
    %1393 = vmatmul.mubr.f32.gmra.mxu0 %v1060
    %v1394 = vpop.f32.mrf.mxu0
    %v1395 = vadd.f32 %v1147, %v1394
    %v1396 = vpop.f32.mrf.mxu0
    %v1397 = vadd.f32 %v1151, %v1396
    %1398 = vmatprep.mubr.f32.mxu0 %v1063
    %1399 = vmatmul.mubr.f32.gmra.mxu0 %v1062
    %v1400 = vpop.f32.mrf.mxu0
    %v1401 = vadd.f32 %v1147, %v1400
    %v1402 = vpop.f32.mrf.mxu0
    %v1403 = vadd.f32 %v1151, %v1402
    %1404 = vmatprep.mubr.f32.mxu0 %v1065
    %1405 = vmatmul.mubr.f32.gmra.mxu0 %v1064
    %v1406 = vpop.f32.mrf.mxu0
    %v1407 = vadd.f32 %v1147, %v1406
    %v1408 = vpop.f32.mrf.mxu0
    %v1409 = vadd.f32 %v1151, %v1408
    %1410 = vmatprep.mubr.f32.mxu0 %v1067
    %1411 = vmatmul.mubr.f32.gmra.mxu0 %v1066
    %v1412 = vpop.f32.mrf.mxu0
    %v1413 = vadd.f32 %v1147, %v1412
    %v1414 = vpop.f32.mrf.mxu0
    %v1415 = vadd.f32 %v1151, %v1414
    %1416 = vmatprep.mubr.f32.mxu0 %v1069
    %1417 = vmatmul.mubr.f32.gmra.mxu0 %v1068
    %v1418 = vpop.f32.mrf.mxu0
    %v1419 = vadd.f32 %v1147, %v1418
    %v1420 = vpop.f32.mrf.mxu0
    %v1421 = vadd.f32 %v1151, %v1420
    %1422 = vmatprep.mubr.f32.mxu0 %v1071
    %1423 = vmatmul.mubr.f32.gmra.mxu0 %v1070
    %v1424 = vpop.f32.mrf.mxu0
    %v1425 = vadd.f32 %v1147, %v1424
    %v1426 = vpop.f32.mrf.mxu0
    %v1427 = vadd.f32 %v1151, %v1426
    %1428 = vmatprep.mubr.f32.mxu0 %v1073
    %1429 = vmatmul.mubr.f32.gmra.mxu0 %v1072
    %v1430 = vpop.f32.mrf.mxu0
    %v1431 = vadd.f32 %v1147, %v1430
    %v1432 = vpop.f32.mrf.mxu0
    %v1433 = vadd.f32 %v1151, %v1432
    %1434 = vmatprep.mubr.f32.mxu0 %v1075
    %1435 = vmatmul.mubr.f32.gmra.mxu0 %v1074
    %v1436 = vpop.f32.mrf.mxu0
    %v1437 = vadd.f32 %v1147, %v1436
    %v1438 = vpop.f32.mrf.mxu0
    %v1439 = vadd.f32 %v1151, %v1438
    %1440 = vmatprep.mubr.f32.mxu0 %v1077
    %1441 = vmatmul.mubr.f32.gmra.mxu0 %v1076
    %v1442 = vpop.f32.mrf.mxu0
    %v1443 = vadd.f32 %v1147, %v1442
    %v1444 = vpop.f32.mrf.mxu0
    %v1445 = vadd.f32 %v1151, %v1444
    %1446 = vdwg.mxu0
    %v1447 = vxor.u32 %v1221, 2147483648
    %v1448 = vxor.u32 %v1223, 2147483648
    %v1449 = vxor.u32 %v1227, 2147483648
    %v1450 = vxor.u32 %v1229, 2147483648
    %v1451 = vxor.u32 %v1233, 2147483648
    %v1452 = vxor.u32 %v1235, 2147483648
    %v1453 = vxor.u32 %v1239, 2147483648
    %v1454 = vxor.u32 %v1241, 2147483648
    %v1455 = vxor.u32 %v1245, 2147483648
    %v1456 = vxor.u32 %v1247, 2147483648
    %v1457 = vxor.u32 %v1251, 2147483648
    %v1458 = vxor.u32 %v1253, 2147483648
    %v1459 = vxor.u32 %v1257, 2147483648
    %v1460 = vxor.u32 %v1259, 2147483648
    %v1461 = vxor.u32 %v1263, 2147483648
    %v1462 = vxor.u32 %v1265, 2147483648
    %v1463 = vxor.u32 %v1269, 2147483648
    %v1464 = vxor.u32 %v1271, 2147483648
    %v1465 = vxor.u32 %v1275, 2147483648
    %v1466 = vxor.u32 %v1277, 2147483648
    %v1467 = vxor.u32 %v1281, 2147483648
    %v1468 = vxor.u32 %v1283, 2147483648
    %v1469 = vxor.u32 %v1287, 2147483648
    %v1470 = vxor.u32 %v1289, 2147483648
    %v1471 = vxor.u32 %v1293, 2147483648
    %v1472 = vxor.u32 %v1295, 2147483648
    %v1473 = vxor.u32 %v1299, 2147483648
    %v1474 = vxor.u32 %v1301, 2147483648
    %v1475 = vxor.u32 %v1305, 2147483648
    %v1476 = vxor.u32 %v1307, 2147483648
    %v1477 = vxor.u32 %v1311, 2147483648
    %v1478 = vxor.u32 %v1313, 2147483648
    %v1479 = vxor.u32 %v1317, 2147483648
    %v1480 = vxor.u32 %v1319, 2147483648
    %v1481 = vxor.u32 %v1323, 2147483648
    %v1482 = vxor.u32 %v1325, 2147483648
    %v1483 = vxor.u32 %v1329, 2147483648
    %v1484 = vxor.u32 %v1331, 2147483648
    %v1485 = vxor.u32 %v1335, 2147483648
    %v1486 = vxor.u32 %v1337, 2147483648
    %v1487 = vxor.u32 %v1341, 2147483648
    %v1488 = vxor.u32 %v1343, 2147483648
    %v1489 = vxor.u32 %v1347, 2147483648
    %v1490 = vxor.u32 %v1349, 2147483648
    %v1491 = vxor.u32 %v1353, 2147483648
    %v1492 = vxor.u32 %v1355, 2147483648
    %v1493 = vxor.u32 %v1359, 2147483648
    %v1494 = vxor.u32 %v1361, 2147483648
    %v1495 = vxor.u32 %v1365, 2147483648
    %v1496 = vxor.u32 %v1367, 2147483648
    %v1497 = vxor.u32 %v1371, 2147483648
    %v1498 = vxor.u32 %v1373, 2147483648
    %v1499 = vxor.u32 %v1377, 2147483648
    %v1500 = vxor.u32 %v1379, 2147483648
    %v1501 = vxor.u32 %v1383, 2147483648
    %v1502 = vxor.u32 %v1385, 2147483648
    %v1503 = vxor.u32 %v1389, 2147483648
    %v1504 = vxor.u32 %v1391, 2147483648
    %v1505 = vxor.u32 %v1395, 2147483648
    %v1506 = vxor.u32 %v1397, 2147483648
    %v1507 = vxor.u32 %v1401, 2147483648
    %v1508 = vxor.u32 %v1403, 2147483648
    %v1509 = vxor.u32 %v1407, 2147483648
    %v1510 = vxor.u32 %v1409, 2147483648
    %v1511 = vxor.u32 %v1413, 2147483648
    %v1512 = vxor.u32 %v1415, 2147483648
    %v1513 = vxor.u32 %v1419, 2147483648
    %v1514 = vxor.u32 %v1421, 2147483648
    %v1515 = vxor.u32 %v1425, 2147483648
    %v1516 = vxor.u32 %v1427, 2147483648
    %v1517 = vxor.u32 %v1431, 2147483648
    %v1518 = vxor.u32 %v1433, 2147483648
    %v1519 = vxor.u32 %v1437, 2147483648
    %v1520 = vxor.u32 %v1439, 2147483648
    %v1521 = vxor.u32 %v1443, 2147483648
    %v1522 = vxor.u32 %v1445, 2147483648
    %v1523 = vmul.f32 %v1447, 1.442695
    %v1524 = vpow.pop %v1523
    %v1525 = vmul.f32 %v1448, 1.442695
    %v1526 = vpow.pop %v1525
    %v1527 = vmul.f32 %v1449, 1.442695
    %v1528 = vpow.pop %v1527
    %v1529 = vmul.f32 %v1450, 1.442695
    %v1530 = vpow.pop %v1529
    %v1531 = vmul.f32 %v1451, 1.442695
    %v1532 = vpow.pop %v1531
    %v1533 = vmul.f32 %v1452, 1.442695
    %v1534 = vpow.pop %v1533
    %v1535 = vmul.f32 %v1453, 1.442695
    %v1536 = vpow.pop %v1535
    %v1537 = vmul.f32 %v1454, 1.442695
    %v1538 = vpow.pop %v1537
    %v1539 = vmul.f32 %v1455, 1.442695
    %v1540 = vpow.pop %v1539
    %v1541 = vmul.f32 %v1456, 1.442695
    %v1542 = vpow.pop %v1541
    %v1543 = vmul.f32 %v1457, 1.442695
    %v1544 = vpow.pop %v1543
    %v1545 = vmul.f32 %v1458, 1.442695
    %v1546 = vpow.pop %v1545
    %v1547 = vmul.f32 %v1459, 1.442695
    %v1548 = vpow.pop %v1547
    %v1549 = vmul.f32 %v1460, 1.442695
    %v1550 = vpow.pop %v1549
    %v1551 = vmul.f32 %v1461, 1.442695
    %v1552 = vpow.pop %v1551
    %v1553 = vmul.f32 %v1462, 1.442695
    %v1554 = vpow.pop %v1553
    %v1555 = vmul.f32 %v1463, 1.442695
    %v1556 = vpow.pop %v1555
    %v1557 = vmul.f32 %v1464, 1.442695
    %v1558 = vpow.pop %v1557
    %v1559 = vmul.f32 %v1465, 1.442695
    %v1560 = vpow.pop %v1559
    %v1561 = vmul.f32 %v1466, 1.442695
    %v1562 = vpow.pop %v1561
    %v1563 = vmul.f32 %v1467, 1.442695
    %v1564 = vpow.pop %v1563
    %v1565 = vmul.f32 %v1468, 1.442695
    %v1566 = vpow.pop %v1565
    %v1567 = vmul.f32 %v1469, 1.442695
    %v1568 = vpow.pop %v1567
    %v1569 = vmul.f32 %v1470, 1.442695
    %v1570 = vpow.pop %v1569
    %v1571 = vmul.f32 %v1471, 1.442695
    %v1572 = vpow.pop %v1571
    %v1573 = vmul.f32 %v1472, 1.442695
    %v1574 = vpow.pop %v1573
    %v1575 = vmul.f32 %v1473, 1.442695
    %v1576 = vpow.pop %v1575
    %v1577 = vmul.f32 %v1474, 1.442695
    %v1578 = vpow.pop %v1577
    %v1579 = vmul.f32 %v1475, 1.442695
    %v1580 = vpow.pop %v1579
    %v1581 = vmul.f32 %v1476, 1.442695
    %v1582 = vpow.pop %v1581
    %v1583 = vmul.f32 %v1477, 1.442695
    %v1584 = vpow.pop %v1583
    %v1585 = vmul.f32 %v1478, 1.442695
    %v1586 = vpow.pop %v1585
    %v1587 = vmul.f32 %v1479, 1.442695
    %v1588 = vpow.pop %v1587
    %v1589 = vmul.f32 %v1480, 1.442695
    %v1590 = vpow.pop %v1589
    %v1591 = vmul.f32 %v1481, 1.442695
    %v1592 = vpow.pop %v1591
    %v1593 = vmul.f32 %v1482, 1.442695
    %v1594 = vpow.pop %v1593
    %v1595 = vmul.f32 %v1483, 1.442695
    %v1596 = vpow.pop %v1595
    %v1597 = vmul.f32 %v1484, 1.442695
    %v1598 = vpow.pop %v1597
    %v1599 = vmul.f32 %v1485, 1.442695
    %v1600 = vpow.pop %v1599
    %v1601 = vmul.f32 %v1486, 1.442695
    %v1602 = vpow.pop %v1601
    %v1603 = vmul.f32 %v1487, 1.442695
    %v1604 = vpow.pop %v1603
    %v1605 = vmul.f32 %v1488, 1.442695
    %v1606 = vpow.pop %v1605
    %v1607 = vmul.f32 %v1489, 1.442695
    %v1608 = vpow.pop %v1607
    %v1609 = vmul.f32 %v1490, 1.442695
    %v1610 = vpow.pop %v1609
    %v1611 = vmul.f32 %v1491, 1.442695
    %v1612 = vpow.pop %v1611
    %v1613 = vmul.f32 %v1492, 1.442695
    %v1614 = vpow.pop %v1613
    %v1615 = vmul.f32 %v1493, 1.442695
    %v1616 = vpow.pop %v1615
    %v1617 = vmul.f32 %v1494, 1.442695
    %v1618 = vpow.pop %v1617
    %v1619 = vmul.f32 %v1495, 1.442695
    %v1620 = vpow.pop %v1619
    %v1621 = vmul.f32 %v1496, 1.442695
    %v1622 = vpow.pop %v1621
    %v1623 = vmul.f32 %v1497, 1.442695
    %v1624 = vpow.pop %v1623
    %v1625 = vmul.f32 %v1498, 1.442695
    %v1626 = vpow.pop %v1625
    %v1627 = vmul.f32 %v1499, 1.442695
    %v1628 = vpow.pop %v1627
    %v1629 = vmul.f32 %v1500, 1.442695
    %v1630 = vpow.pop %v1629
    %v1631 = vmul.f32 %v1501, 1.442695
    %v1632 = vpow.pop %v1631
    %v1633 = vmul.f32 %v1502, 1.442695
    %v1634 = vpow.pop %v1633
    %v1635 = vmul.f32 %v1503, 1.442695
    %v1636 = vpow.pop %v1635
    %v1637 = vmul.f32 %v1504, 1.442695
    %v1638 = vpow.pop %v1637
    %v1639 = vmul.f32 %v1505, 1.442695
    %v1640 = vpow.pop %v1639
    %v1641 = vmul.f32 %v1506, 1.442695
    %v1642 = vpow.pop %v1641
    %v1643 = vmul.f32 %v1507, 1.442695
    %v1644 = vpow.pop %v1643
    %v1645 = vmul.f32 %v1508, 1.442695
    %v1646 = vpow.pop %v1645
    %v1647 = vmul.f32 %v1509, 1.442695
    %v1648 = vpow.pop %v1647
    %v1649 = vmul.f32 %v1510, 1.442695
    %v1650 = vpow.pop %v1649
    %v1651 = vmul.f32 %v1511, 1.442695
    %v1652 = vpow.pop %v1651
    %v1653 = vmul.f32 %v1512, 1.442695
    %v1654 = vpow.pop %v1653
    %v1655 = vmul.f32 %v1513, 1.442695
    %v1656 = vpow.pop %v1655
    %v1657 = vmul.f32 %v1514, 1.442695
    %v1658 = vpow.pop %v1657
    %v1659 = vmul.f32 %v1515, 1.442695
    %v1660 = vpow.pop %v1659
    %v1661 = vmul.f32 %v1516, 1.442695
    %v1662 = vpow.pop %v1661
    %v1663 = vmul.f32 %v1517, 1.442695
    %v1664 = vpow.pop %v1663
    %v1665 = vmul.f32 %v1518, 1.442695
    %v1666 = vpow.pop %v1665
    %v1667 = vmul.f32 %v1519, 1.442695
    %v1668 = vpow.pop %v1667
    %v1669 = vmul.f32 %v1520, 1.442695
    %v1670 = vpow.pop %v1669
    %v1671 = vmul.f32 %v1521, 1.442695
    %v1672 = vpow.pop %v1671
    %v1673 = vmul.f32 %v1522, 1.442695
    %v1674 = vpow.pop %v1673
    %v1675 = vadd.f32 %v1524, 1.0
    %v1676 = vadd.f32 %v1526, 1.0
    %v1677 = vadd.f32 %v1528, 1.0
    %v1678 = vadd.f32 %v1530, 1.0
    %v1679 = vadd.f32 %v1532, 1.0
    %v1680 = vadd.f32 %v1534, 1.0
    %v1681 = vadd.f32 %v1536, 1.0
    %v1682 = vadd.f32 %v1538, 1.0
    %v1683 = vadd.f32 %v1540, 1.0
    %v1684 = vadd.f32 %v1542, 1.0
    %v1685 = vadd.f32 %v1544, 1.0
    %v1686 = vadd.f32 %v1546, 1.0
    %v1687 = vadd.f32 %v1548, 1.0
    %v1688 = vadd.f32 %v1550, 1.0
    %v1689 = vadd.f32 %v1552, 1.0
    %v1690 = vadd.f32 %v1554, 1.0
    %v1691 = vadd.f32 %v1556, 1.0
    %v1692 = vadd.f32 %v1558, 1.0
    %v1693 = vadd.f32 %v1560, 1.0
    %v1694 = vadd.f32 %v1562, 1.0
    %v1695 = vadd.f32 %v1564, 1.0
    %v1696 = vadd.f32 %v1566, 1.0
    %v1697 = vadd.f32 %v1568, 1.0
    %v1698 = vadd.f32 %v1570, 1.0
    %v1699 = vadd.f32 %v1572, 1.0
    %v1700 = vadd.f32 %v1574, 1.0
    %v1701 = vadd.f32 %v1576, 1.0
    %v1702 = vadd.f32 %v1578, 1.0
    %v1703 = vadd.f32 %v1580, 1.0
    %v1704 = vadd.f32 %v1582, 1.0
    %v1705 = vadd.f32 %v1584, 1.0
    %v1706 = vadd.f32 %v1586, 1.0
    %v1707 = vadd.f32 %v1588, 1.0
    %v1708 = vadd.f32 %v1590, 1.0
    %v1709 = vadd.f32 %v1592, 1.0
    %v1710 = vadd.f32 %v1594, 1.0
    %v1711 = vadd.f32 %v1596, 1.0
    %v1712 = vadd.f32 %v1598, 1.0
    %v1713 = vadd.f32 %v1600, 1.0
    %v1714 = vadd.f32 %v1602, 1.0
    %v1715 = vadd.f32 %v1604, 1.0
    %v1716 = vadd.f32 %v1606, 1.0
    %v1717 = vadd.f32 %v1608, 1.0
    %v1718 = vadd.f32 %v1610, 1.0
    %v1719 = vadd.f32 %v1612, 1.0
    %v1720 = vadd.f32 %v1614, 1.0
    %v1721 = vadd.f32 %v1616, 1.0
    %v1722 = vadd.f32 %v1618, 1.0
    %v1723 = vadd.f32 %v1620, 1.0
    %v1724 = vadd.f32 %v1622, 1.0
    %v1725 = vadd.f32 %v1624, 1.0
    %v1726 = vadd.f32 %v1626, 1.0
    %v1727 = vadd.f32 %v1628, 1.0
    %v1728 = vadd.f32 %v1630, 1.0
    %v1729 = vadd.f32 %v1632, 1.0
    %v1730 = vadd.f32 %v1634, 1.0
    %v1731 = vadd.f32 %v1636, 1.0
    %v1732 = vadd.f32 %v1638, 1.0
    %v1733 = vadd.f32 %v1640, 1.0
    %v1734 = vadd.f32 %v1642, 1.0
    %v1735 = vadd.f32 %v1644, 1.0
    %v1736 = vadd.f32 %v1646, 1.0
    %v1737 = vadd.f32 %v1648, 1.0
    %v1738 = vadd.f32 %v1650, 1.0
    %v1739 = vadd.f32 %v1652, 1.0
    %v1740 = vadd.f32 %v1654, 1.0
    %v1741 = vadd.f32 %v1656, 1.0
    %v1742 = vadd.f32 %v1658, 1.0
    %v1743 = vadd.f32 %v1660, 1.0
    %v1744 = vadd.f32 %v1662, 1.0
    %v1745 = vadd.f32 %v1664, 1.0
    %v1746 = vadd.f32 %v1666, 1.0
    %v1747 = vadd.f32 %v1668, 1.0
    %v1748 = vadd.f32 %v1670, 1.0
    %v1749 = vadd.f32 %v1672, 1.0
    %v1750 = vadd.f32 %v1674, 1.0
    %v1751 = vrcp.pop %v1675
    %v1752 = vmul.f32 1.0, %v1751
    %v1753 = vrcp.pop %v1676
    %v1754 = vmul.f32 1.0, %v1753
    %v1755 = vrcp.pop %v1677
    %v1756 = vmul.f32 1.0, %v1755
    %v1757 = vrcp.pop %v1678
    %v1758 = vmul.f32 1.0, %v1757
    %v1759 = vrcp.pop %v1679
    %v1760 = vmul.f32 1.0, %v1759
    %v1761 = vrcp.pop %v1680
    %v1762 = vmul.f32 1.0, %v1761
    %v1763 = vrcp.pop %v1681
    %v1764 = vmul.f32 1.0, %v1763
    %v1765 = vrcp.pop %v1682
    %v1766 = vmul.f32 1.0, %v1765
    %v1767 = vrcp.pop %v1683
    %v1768 = vmul.f32 1.0, %v1767
    %v1769 = vrcp.pop %v1684
    %v1770 = vmul.f32 1.0, %v1769
    %v1771 = vrcp.pop %v1685
    %v1772 = vmul.f32 1.0, %v1771
    %v1773 = vrcp.pop %v1686
    %v1774 = vmul.f32 1.0, %v1773
    %v1775 = vrcp.pop %v1687
    %v1776 = vmul.f32 1.0, %v1775
    %v1777 = vrcp.pop %v1688
    %v1778 = vmul.f32 1.0, %v1777
    %v1779 = vrcp.pop %v1689
    %v1780 = vmul.f32 1.0, %v1779
    %v1781 = vrcp.pop %v1690
    %v1782 = vmul.f32 1.0, %v1781
    %v1783 = vrcp.pop %v1691
    %v1784 = vmul.f32 1.0, %v1783
    %v1785 = vrcp.pop %v1692
    %v1786 = vmul.f32 1.0, %v1785
    %v1787 = vrcp.pop %v1693
    %v1788 = vmul.f32 1.0, %v1787
    %v1789 = vrcp.pop %v1694
    %v1790 = vmul.f32 1.0, %v1789
    %v1791 = vrcp.pop %v1695
    %v1792 = vmul.f32 1.0, %v1791
    %v1793 = vrcp.pop %v1696
    %v1794 = vmul.f32 1.0, %v1793
    %v1795 = vrcp.pop %v1697
    %v1796 = vmul.f32 1.0, %v1795
    %v1797 = vrcp.pop %v1698
    %v1798 = vmul.f32 1.0, %v1797
    %v1799 = vrcp.pop %v1699
    %v1800 = vmul.f32 1.0, %v1799
    %v1801 = vrcp.pop %v1700
    %v1802 = vmul.f32 1.0, %v1801
    %v1803 = vrcp.pop %v1701
    %v1804 = vmul.f32 1.0, %v1803
    %v1805 = vrcp.pop %v1702
    %v1806 = vmul.f32 1.0, %v1805
    %v1807 = vrcp.pop %v1703
    %v1808 = vmul.f32 1.0, %v1807
    %v1809 = vrcp.pop %v1704
    %v1810 = vmul.f32 1.0, %v1809
    %v1811 = vrcp.pop %v1705
    %v1812 = vmul.f32 1.0, %v1811
    %v1813 = vrcp.pop %v1706
    %v1814 = vmul.f32 1.0, %v1813
    %v1815 = vrcp.pop %v1707
    %v1816 = vmul.f32 1.0, %v1815
    %v1817 = vrcp.pop %v1708
    %v1818 = vmul.f32 1.0, %v1817
    %v1819 = vrcp.pop %v1709
    %v1820 = vmul.f32 1.0, %v1819
    %v1821 = vrcp.pop %v1710
    %v1822 = vmul.f32 1.0, %v1821
    %v1823 = vrcp.pop %v1711
    %v1824 = vmul.f32 1.0, %v1823
    %v1825 = vrcp.pop %v1712
    %v1826 = vmul.f32 1.0, %v1825
    %v1827 = vrcp.pop %v1713
    %v1828 = vmul.f32 1.0, %v1827
    %v1829 = vrcp.pop %v1714
    %v1830 = vmul.f32 1.0, %v1829
    %v1831 = vrcp.pop %v1715
    %v1832 = vmul.f32 1.0, %v1831
    %v1833 = vrcp.pop %v1716
    %v1834 = vmul.f32 1.0, %v1833
    %v1835 = vrcp.pop %v1717
    %v1836 = vmul.f32 1.0, %v1835
    %v1837 = vrcp.pop %v1718
    %v1838 = vmul.f32 1.0, %v1837
    %v1839 = vrcp.pop %v1719
    %v1840 = vmul.f32 1.0, %v1839
    %v1841 = vrcp.pop %v1720
    %v1842 = vmul.f32 1.0, %v1841
    %v1843 = vrcp.pop %v1721
    %v1844 = vmul.f32 1.0, %v1843
    %v1845 = vrcp.pop %v1722
    %v1846 = vmul.f32 1.0, %v1845
    %v1847 = vrcp.pop %v1723
    %v1848 = vmul.f32 1.0, %v1847
    %v1849 = vrcp.pop %v1724
    %v1850 = vmul.f32 1.0, %v1849
    %v1851 = vrcp.pop %v1725
    %v1852 = vmul.f32 1.0, %v1851
    %v1853 = vrcp.pop %v1726
    %v1854 = vmul.f32 1.0, %v1853
    %v1855 = vrcp.pop %v1727
    %v1856 = vmul.f32 1.0, %v1855
    %v1857 = vrcp.pop %v1728
    %v1858 = vmul.f32 1.0, %v1857
    %v1859 = vrcp.pop %v1729
    %v1860 = vmul.f32 1.0, %v1859
    %v1861 = vrcp.pop %v1730
    %v1862 = vmul.f32 1.0, %v1861
    %v1863 = vrcp.pop %v1731
    %v1864 = vmul.f32 1.0, %v1863
    %v1865 = vrcp.pop %v1732
    %v1866 = vmul.f32 1.0, %v1865
    %v1867 = vrcp.pop %v1733
    %v1868 = vmul.f32 1.0, %v1867
    %v1869 = vrcp.pop %v1734
    %v1870 = vmul.f32 1.0, %v1869
    %v1871 = vrcp.pop %v1735
    %v1872 = vmul.f32 1.0, %v1871
    %v1873 = vrcp.pop %v1736
    %v1874 = vmul.f32 1.0, %v1873
    %v1875 = vrcp.pop %v1737
    %v1876 = vmul.f32 1.0, %v1875
    %v1877 = vrcp.pop %v1738
    %v1878 = vmul.f32 1.0, %v1877
    %v1879 = vrcp.pop %v1739
    %v1880 = vmul.f32 1.0, %v1879
    %v1881 = vrcp.pop %v1740
    %v1882 = vmul.f32 1.0, %v1881
    %v1883 = vrcp.pop %v1741
    %v1884 = vmul.f32 1.0, %v1883
    %v1885 = vrcp.pop %v1742
    %v1886 = vmul.f32 1.0, %v1885
    %v1887 = vrcp.pop %v1743
    %v1888 = vmul.f32 1.0, %v1887
    %v1889 = vrcp.pop %v1744
    %v1890 = vmul.f32 1.0, %v1889
    %v1891 = vrcp.pop %v1745
    %v1892 = vmul.f32 1.0, %v1891
    %v1893 = vrcp.pop %v1746
    %v1894 = vmul.f32 1.0, %v1893
    %v1895 = vrcp.pop %v1747
    %v1896 = vmul.f32 1.0, %v1895
    %v1897 = vrcp.pop %v1748
    %v1898 = vmul.f32 1.0, %v1897
    %v1899 = vrcp.pop %v1749
    %v1900 = vmul.f32 1.0, %v1899
    %v1901 = vrcp.pop %v1750
    %v1902 = vmul.f32 1.0, %v1901
    %v1903 = vmul.f32 %v1221, %v1752
    %v1904 = vmul.f32 %v1223, %v1754
    %v1905 = vmul.f32 %v1227, %v1756
    %v1906 = vmul.f32 %v1229, %v1758
    %v1907 = vmul.f32 %v1233, %v1760
    %v1908 = vmul.f32 %v1235, %v1762
    %v1909 = vmul.f32 %v1239, %v1764
    %v1910 = vmul.f32 %v1241, %v1766
    %v1911 = vmul.f32 %v1245, %v1768
    %v1912 = vmul.f32 %v1247, %v1770
    %v1913 = vmul.f32 %v1251, %v1772
    %v1914 = vmul.f32 %v1253, %v1774
    %v1915 = vmul.f32 %v1257, %v1776
    %v1916 = vmul.f32 %v1259, %v1778
    %v1917 = vmul.f32 %v1263, %v1780
    %v1918 = vmul.f32 %v1265, %v1782
    %v1919 = vmul.f32 %v1269, %v1784
    %v1920 = vmul.f32 %v1271, %v1786
    %v1921 = vmul.f32 %v1275, %v1788
    %v1922 = vmul.f32 %v1277, %v1790
    %v1923 = vmul.f32 %v1281, %v1792
    %v1924 = vmul.f32 %v1283, %v1794
    %v1925 = vmul.f32 %v1287, %v1796
    %v1926 = vmul.f32 %v1289, %v1798
    %v1927 = vmul.f32 %v1293, %v1800
    %v1928 = vmul.f32 %v1295, %v1802
    %v1929 = vmul.f32 %v1299, %v1804
    %v1930 = vmul.f32 %v1301, %v1806
    %v1931 = vmul.f32 %v1305, %v1808
    %v1932 = vmul.f32 %v1307, %v1810
    %v1933 = vmul.f32 %v1311, %v1812
    %v1934 = vmul.f32 %v1313, %v1814
    %v1935 = vmul.f32 %v1317, %v1816
    %v1936 = vmul.f32 %v1319, %v1818
    %v1937 = vmul.f32 %v1323, %v1820
    %v1938 = vmul.f32 %v1325, %v1822
    %v1939 = vmul.f32 %v1329, %v1824
    %v1940 = vmul.f32 %v1331, %v1826
    %v1941 = vmul.f32 %v1335, %v1828
    %v1942 = vmul.f32 %v1337, %v1830
    %v1943 = vmul.f32 %v1341, %v1832
    %v1944 = vmul.f32 %v1343, %v1834
    %v1945 = vmul.f32 %v1347, %v1836
    %v1946 = vmul.f32 %v1349, %v1838
    %v1947 = vmul.f32 %v1353, %v1840
    %v1948 = vmul.f32 %v1355, %v1842
    %v1949 = vmul.f32 %v1359, %v1844
    %v1950 = vmul.f32 %v1361, %v1846
    %v1951 = vmul.f32 %v1365, %v1848
    %v1952 = vmul.f32 %v1367, %v1850
    %v1953 = vmul.f32 %v1371, %v1852
    %v1954 = vmul.f32 %v1373, %v1854
    %v1955 = vmul.f32 %v1377, %v1856
    %v1956 = vmul.f32 %v1379, %v1858
    %v1957 = vmul.f32 %v1383, %v1860
    %v1958 = vmul.f32 %v1385, %v1862
    %v1959 = vmul.f32 %v1389, %v1864
    %v1960 = vmul.f32 %v1391, %v1866
    %v1961 = vmul.f32 %v1395, %v1868
    %v1962 = vmul.f32 %v1397, %v1870
    %v1963 = vmul.f32 %v1401, %v1872
    %v1964 = vmul.f32 %v1403, %v1874
    %v1965 = vmul.f32 %v1407, %v1876
    %v1966 = vmul.f32 %v1409, %v1878
    %v1967 = vmul.f32 %v1413, %v1880
    %v1968 = vmul.f32 %v1415, %v1882
    %v1969 = vmul.f32 %v1419, %v1884
    %v1970 = vmul.f32 %v1421, %v1886
    %v1971 = vmul.f32 %v1425, %v1888
    %v1972 = vmul.f32 %v1427, %v1890
    %v1973 = vmul.f32 %v1431, %v1892
    %v1974 = vmul.f32 %v1433, %v1894
    %v1975 = vmul.f32 %v1437, %v1896
    %v1976 = vmul.f32 %v1439, %v1898
    %v1977 = vmul.f32 %v1443, %v1900
    %v1978 = vmul.f32 %v1445, %v1902
    %v1979 = vld [vmem:[%s5] sm:$0xff]
    %v1980 = vld [vmem:[%s5 + $0x8] sm:$0xff]
    %v1981 = vld [vmem:[%s5 + $0x10] sm:$0xff]
    %v1982 = vld [vmem:[%s5 + $0x18] sm:$0xff]
    %v1983 = vld [vmem:[%s5 + $0x20] sm:$0xff]
    %v1984 = vld [vmem:[%s5 + $0x28] sm:$0xff]
    %v1985 = vld [vmem:[%s5 + $0x30] sm:$0xff]
    %v1986 = vld [vmem:[%s5 + $0x38] sm:$0xff]
    %v1987 = vld [vmem:[%s5 + $0x40] sm:$0xff]
    %v1988 = vld [vmem:[%s5 + $0x48] sm:$0xff]
    %v1989 = vld [vmem:[%s5 + $0x50] sm:$0xff]
    %v1990 = vld [vmem:[%s5 + $0x58] sm:$0xff]
    %v1991 = vld [vmem:[%s5 + $0x60] sm:$0xff]
    %v1992 = vld [vmem:[%s5 + $0x68] sm:$0xff]
    %v1993 = vld [vmem:[%s5 + $0x70] sm:$0xff]
    %v1994 = vld [vmem:[%s5 + $0x78] sm:$0xff]
    %v1995 = vld [vmem:[%s5 + $0x80] sm:$0xff]
    %v1996 = vld [vmem:[%s5 + $0x88] sm:$0xff]
    %v1997 = vld [vmem:[%s5 + $0x90] sm:$0xff]
    %v1998 = vld [vmem:[%s5 + $0x98] sm:$0xff]
    %v1999 = vld [vmem:[%s5 + $0xa0] sm:$0xff]
    %v2000 = vld [vmem:[%s5 + $0xa8] sm:$0xff]
    %v2001 = vld [vmem:[%s5 + $0xb0] sm:$0xff]
    %v2002 = vld [vmem:[%s5 + $0xb8] sm:$0xff]
    %v2003 = vld [vmem:[%s5 + $0xc0] sm:$0xff]
    %v2004 = vld [vmem:[%s5 + $0xc8] sm:$0xff]
    %v2005 = vld [vmem:[%s5 + $0xd0] sm:$0xff]
    %v2006 = vld [vmem:[%s5 + $0xd8] sm:$0xff]
    %v2007 = vld [vmem:[%s5 + $0xe0] sm:$0xff]
    %v2008 = vld [vmem:[%s5 + $0xe8] sm:$0xff]
    %v2009 = vld [vmem:[%s5 + $0xf0] sm:$0xff]
    %v2010 = vld [vmem:[%s5 + $0xf8] sm:$0xff]
    %v2011 = vld [vmem:[%s6] sm:$0x1]
    %v2013 = vlaneseq
    %v2014 = vshrl.u32 %v2013, 7
    %v2015 = vsub.s32 0, %v2014
    %v2016 = vrot.slane %v2011, %v2015
    %2018 = vmatprep.subr.mxu0 0.0
    %2019 = vmatpush1.msra.mxu0 %v1994
    %2020 = vmatprep.subr.mxu0 0.0
    %2021 = vmatpush1.msra.mxu0 %v1993
    %2022 = vmatprep.subr.mxu0 0.0
    %2023 = vmatpush1.msra.mxu0 %v1992
    %2024 = vmatprep.subr.mxu0 0.0
    %2025 = vmatpush1.msra.mxu0 %v1991
    %2026 = vmatprep.subr.mxu0 0.0
    %2027 = vmatpush1.msra.mxu0 %v1990
    %2028 = vmatprep.subr.mxu0 0.0
    %2029 = vmatpush1.msra.mxu0 %v1989
    %2030 = vmatprep.subr.mxu0 0.0
    %2031 = vmatpush1.msra.mxu0 %v1988
    %2032 = vmatprep.subr.mxu0 0.0
    %2033 = vmatpush1.msra.mxu0 %v1987
    %2034 = vmatprep.subr.mxu0 0.0
    %2035 = vmatpush1.msra.mxu0 %v1986
    %2036 = vmatprep.subr.mxu0 0.0
    %2037 = vmatpush1.msra.mxu0 %v1985
    %2038 = vmatprep.subr.mxu0 0.0
    %2039 = vmatpush1.msra.mxu0 %v1984
    %2040 = vmatprep.subr.mxu0 0.0
    %2041 = vmatpush1.msra.mxu0 %v1983
    %2042 = vmatprep.subr.mxu0 0.0
    %2043 = vmatpush1.msra.mxu0 %v1982
    %2044 = vmatprep.subr.mxu0 0.0
    %2045 = vmatpush1.msra.mxu0 %v1981
    %2046 = vmatprep.subr.mxu0 0.0
    %2047 = vmatpush1.msra.mxu0 %v1980
    %2048 = vmatprep.subr.mxu0 0.0
    %2049 = vmatpush1.msra.mxu0 %v1979
    %2050 = vmatprep.subr.mxu0 0.0
    %2051 = vmatpush2.msra.mxu0 %v2010
    %2052 = vmatprep.subr.mxu0 0.0
    %2053 = vmatpush2.msra.mxu0 %v2009
    %2054 = vmatprep.subr.mxu0 0.0
    %2055 = vmatpush2.msra.mxu0 %v2008
    %2056 = vmatprep.subr.mxu0 0.0
    %2057 = vmatpush2.msra.mxu0 %v2007
    %2058 = vmatprep.subr.mxu0 0.0
    %2059 = vmatpush2.msra.mxu0 %v2006
    %2060 = vmatprep.subr.mxu0 0.0
    %2061 = vmatpush2.msra.mxu0 %v2005
    %2062 = vmatprep.subr.mxu0 0.0
    %2063 = vmatpush2.msra.mxu0 %v2004
    %2064 = vmatprep.subr.mxu0 0.0
    %2065 = vmatpush2.msra.mxu0 %v2003
    %2066 = vmatprep.subr.mxu0 0.0
    %2067 = vmatpush2.msra.mxu0 %v2002
    %2068 = vmatprep.subr.mxu0 0.0
    %2069 = vmatpush2.msra.mxu0 %v2001
    %2070 = vmatprep.subr.mxu0 0.0
    %2071 = vmatpush2.msra.mxu0 %v2000
    %2072 = vmatprep.subr.mxu0 0.0
    %2073 = vmatpush2.msra.mxu0 %v1999
    %2074 = vmatprep.subr.mxu0 0.0
    %2075 = vmatpush2.msra.mxu0 %v1998
    %2076 = vmatprep.subr.mxu0 0.0
    %2077 = vmatpush2.msra.mxu0 %v1997
    %2078 = vmatprep.subr.mxu0 0.0
    %2079 = vmatpush2.msra.mxu0 %v1996
    %2080 = vmatprep.subr.mxu0 0.0
    %2081 = vmatpush2.msra.mxu0 %v1995
    %2082 = vmatprep.mubr.f32.mxu0 %v1904
    %2083 = vmatmul.mubr.f32.gmra.mxu0 %v1903
    %v2084 = vpop.f32.mrf.mxu0
    %v2085 = vadd.f32 %v2016, %v2084
    %v2086 = vpop.f32.mrf.mxu0
    %2087 = vmatprep.mubr.f32.mxu0 %v1906
    %2088 = vmatmul.mubr.f32.gmra.mxu0 %v1905
    %v2089 = vpop.f32.mrf.mxu0
    %v2090 = vadd.f32 %v2016, %v2089
    %v2091 = vpop.f32.mrf.mxu0
    %2092 = vmatprep.mubr.f32.mxu0 %v1908
    %2093 = vmatmul.mubr.f32.gmra.mxu0 %v1907
    %v2094 = vpop.f32.mrf.mxu0
    %v2095 = vadd.f32 %v2016, %v2094
    %v2096 = vpop.f32.mrf.mxu0
    %2097 = vmatprep.mubr.f32.mxu0 %v1910
    %2098 = vmatmul.mubr.f32.gmra.mxu0 %v1909
    %v2099 = vpop.f32.mrf.mxu0
    %v2100 = vadd.f32 %v2016, %v2099
    %v2101 = vpop.f32.mrf.mxu0
    %2102 = vmatprep.mubr.f32.mxu0 %v1912
    %2103 = vmatmul.mubr.f32.gmra.mxu0 %v1911
    %v2104 = vpop.f32.mrf.mxu0
    %v2105 = vadd.f32 %v2016, %v2104
    %v2106 = vpop.f32.mrf.mxu0
    %2107 = vmatprep.mubr.f32.mxu0 %v1914
    %2108 = vmatmul.mubr.f32.gmra.mxu0 %v1913
    %v2109 = vpop.f32.mrf.mxu0
    %v2110 = vadd.f32 %v2016, %v2109
    %v2111 = vpop.f32.mrf.mxu0
    %2112 = vmatprep.mubr.f32.mxu0 %v1916
    %2113 = vmatmul.mubr.f32.gmra.mxu0 %v1915
    %v2114 = vpop.f32.mrf.mxu0
    %v2115 = vadd.f32 %v2016, %v2114
    %v2116 = vpop.f32.mrf.mxu0
    %2117 = vmatprep.mubr.f32.mxu0 %v1918
    %2118 = vmatmul.mubr.f32.gmra.mxu0 %v1917
    %v2119 = vpop.f32.mrf.mxu0
    %v2120 = vadd.f32 %v2016, %v2119
    %v2121 = vpop.f32.mrf.mxu0
    %2122 = vmatprep.mubr.f32.mxu0 %v1920
    %2123 = vmatmul.mubr.f32.gmra.mxu0 %v1919
    %v2124 = vpop.f32.mrf.mxu0
    %v2125 = vadd.f32 %v2016, %v2124
    %v2126 = vpop.f32.mrf.mxu0
    %2127 = vmatprep.mubr.f32.mxu0 %v1922
    %2128 = vmatmul.mubr.f32.gmra.mxu0 %v1921
    %v2129 = vpop.f32.mrf.mxu0
    %v2130 = vadd.f32 %v2016, %v2129
    %v2131 = vpop.f32.mrf.mxu0
    %2132 = vmatprep.mubr.f32.mxu0 %v1924
    %2133 = vmatmul.mubr.f32.gmra.mxu0 %v1923
    %v2134 = vpop.f32.mrf.mxu0
    %v2135 = vadd.f32 %v2016, %v2134
    %v2136 = vpop.f32.mrf.mxu0
    %2137 = vmatprep.mubr.f32.mxu0 %v1926
    %2138 = vmatmul.mubr.f32.gmra.mxu0 %v1925
    %v2139 = vpop.f32.mrf.mxu0
    %v2140 = vadd.f32 %v2016, %v2139
    %v2141 = vpop.f32.mrf.mxu0
    %2142 = vmatprep.mubr.f32.mxu0 %v1928
    %2143 = vmatmul.mubr.f32.gmra.mxu0 %v1927
    %v2144 = vpop.f32.mrf.mxu0
    %v2145 = vadd.f32 %v2016, %v2144
    %v2146 = vpop.f32.mrf.mxu0
    %2147 = vmatprep.mubr.f32.mxu0 %v1930
    %2148 = vmatmul.mubr.f32.gmra.mxu0 %v1929
    %v2149 = vpop.f32.mrf.mxu0
    %v2150 = vadd.f32 %v2016, %v2149
    %v2151 = vpop.f32.mrf.mxu0
    %2152 = vmatprep.mubr.f32.mxu0 %v1932
    %2153 = vmatmul.mubr.f32.gmra.mxu0 %v1931
    %v2154 = vpop.f32.mrf.mxu0
    %v2155 = vadd.f32 %v2016, %v2154
    %v2156 = vpop.f32.mrf.mxu0
    %2157 = vmatprep.mubr.f32.mxu0 %v1934
    %2158 = vmatmul.mubr.f32.gmra.mxu0 %v1933
    %v2159 = vpop.f32.mrf.mxu0
    %v2160 = vadd.f32 %v2016, %v2159
    %v2161 = vpop.f32.mrf.mxu0
    %2162 = vmatprep.mubr.f32.mxu0 %v1936
    %2163 = vmatmul.mubr.f32.gmra.mxu0 %v1935
    %v2164 = vpop.f32.mrf.mxu0
    %v2165 = vadd.f32 %v2016, %v2164
    %v2166 = vpop.f32.mrf.mxu0
    %2167 = vmatprep.mubr.f32.mxu0 %v1938
    %2168 = vmatmul.mubr.f32.gmra.mxu0 %v1937
    %v2169 = vpop.f32.mrf.mxu0
    %v2170 = vadd.f32 %v2016, %v2169
    %v2171 = vpop.f32.mrf.mxu0
    %2172 = vmatprep.mubr.f32.mxu0 %v1940
    %2173 = vmatmul.mubr.f32.gmra.mxu0 %v1939
    %v2174 = vpop.f32.mrf.mxu0
    %v2175 = vadd.f32 %v2016, %v2174
    %v2176 = vpop.f32.mrf.mxu0
    %2177 = vmatprep.mubr.f32.mxu0 %v1942
    %2178 = vmatmul.mubr.f32.gmra.mxu0 %v1941
    %v2179 = vpop.f32.mrf.mxu0
    %v2180 = vadd.f32 %v2016, %v2179
    %v2181 = vpop.f32.mrf.mxu0
    %2182 = vmatprep.mubr.f32.mxu0 %v1944
    %2183 = vmatmul.mubr.f32.gmra.mxu0 %v1943
    %v2184 = vpop.f32.mrf.mxu0
    %v2185 = vadd.f32 %v2016, %v2184
    %v2186 = vpop.f32.mrf.mxu0
    %2187 = vmatprep.mubr.f32.mxu0 %v1946
    %2188 = vmatmul.mubr.f32.gmra.mxu0 %v1945
    %v2189 = vpop.f32.mrf.mxu0
    %v2190 = vadd.f32 %v2016, %v2189
    %v2191 = vpop.f32.mrf.mxu0
    %2192 = vmatprep.mubr.f32.mxu0 %v1948
    %2193 = vmatmul.mubr.f32.gmra.mxu0 %v1947
    %v2194 = vpop.f32.mrf.mxu0
    %v2195 = vadd.f32 %v2016, %v2194
    %v2196 = vpop.f32.mrf.mxu0
    %2197 = vmatprep.mubr.f32.mxu0 %v1950
    %2198 = vmatmul.mubr.f32.gmra.mxu0 %v1949
    %v2199 = vpop.f32.mrf.mxu0
    %v2200 = vadd.f32 %v2016, %v2199
    %v2201 = vpop.f32.mrf.mxu0
    %2202 = vmatprep.mubr.f32.mxu0 %v1952
    %2203 = vmatmul.mubr.f32.gmra.mxu0 %v1951
    %v2204 = vpop.f32.mrf.mxu0
    %v2205 = vadd.f32 %v2016, %v2204
    %v2206 = vpop.f32.mrf.mxu0
    %2207 = vmatprep.mubr.f32.mxu0 %v1954
    %2208 = vmatmul.mubr.f32.gmra.mxu0 %v1953
    %v2209 = vpop.f32.mrf.mxu0
    %v2210 = vadd.f32 %v2016, %v2209
    %v2211 = vpop.f32.mrf.mxu0
    %2212 = vmatprep.mubr.f32.mxu0 %v1956
    %2213 = vmatmul.mubr.f32.gmra.mxu0 %v1955
    %v2214 = vpop.f32.mrf.mxu0
    %v2215 = vadd.f32 %v2016, %v2214
    %v2216 = vpop.f32.mrf.mxu0
    %2217 = vmatprep.mubr.f32.mxu0 %v1958
    %2218 = vmatmul.mubr.f32.gmra.mxu0 %v1957
    %v2219 = vpop.f32.mrf.mxu0
    %v2220 = vadd.f32 %v2016, %v2219
    %v2221 = vpop.f32.mrf.mxu0
    %2222 = vmatprep.mubr.f32.mxu0 %v1960
    %2223 = vmatmul.mubr.f32.gmra.mxu0 %v1959
    %v2224 = vpop.f32.mrf.mxu0
    %v2225 = vadd.f32 %v2016, %v2224
    %v2226 = vpop.f32.mrf.mxu0
    %2227 = vmatprep.mubr.f32.mxu0 %v1962
    %2228 = vmatmul.mubr.f32.gmra.mxu0 %v1961
    %v2229 = vpop.f32.mrf.mxu0
    %v2230 = vadd.f32 %v2016, %v2229
    %v2231 = vpop.f32.mrf.mxu0
    %2232 = vmatprep.mubr.f32.mxu0 %v1964
    %2233 = vmatmul.mubr.f32.gmra.mxu0 %v1963
    %v2234 = vpop.f32.mrf.mxu0
    %v2235 = vadd.f32 %v2016, %v2234
    %v2236 = vpop.f32.mrf.mxu0
    %2237 = vmatprep.mubr.f32.mxu0 %v1966
    %2238 = vmatmul.mubr.f32.gmra.mxu0 %v1965
    %v2239 = vpop.f32.mrf.mxu0
    %v2240 = vadd.f32 %v2016, %v2239
    %v2241 = vpop.f32.mrf.mxu0
    %2242 = vmatprep.mubr.f32.mxu0 %v1968
    %2243 = vmatmul.mubr.f32.gmra.mxu0 %v1967
    %v2244 = vpop.f32.mrf.mxu0
    %v2245 = vadd.f32 %v2016, %v2244
    %v2246 = vpop.f32.mrf.mxu0
    %2247 = vmatprep.mubr.f32.mxu0 %v1970
    %2248 = vmatmul.mubr.f32.gmra.mxu0 %v1969
    %v2249 = vpop.f32.mrf.mxu0
    %v2250 = vadd.f32 %v2016, %v2249
    %v2251 = vpop.f32.mrf.mxu0
    %2252 = vmatprep.mubr.f32.mxu0 %v1972
    %2253 = vmatmul.mubr.f32.gmra.mxu0 %v1971
    %v2254 = vpop.f32.mrf.mxu0
    %v2255 = vadd.f32 %v2016, %v2254
    %v2256 = vpop.f32.mrf.mxu0
    %2257 = vmatprep.mubr.f32.mxu0 %v1974
    %2258 = vmatmul.mubr.f32.gmra.mxu0 %v1973
    %v2259 = vpop.f32.mrf.mxu0
    %v2260 = vadd.f32 %v2016, %v2259
    %v2261 = vpop.f32.mrf.mxu0
    %2262 = vmatprep.mubr.f32.mxu0 %v1976
    %2263 = vmatmul.mubr.f32.gmra.mxu0 %v1975
    %v2264 = vpop.f32.mrf.mxu0
    %v2265 = vadd.f32 %v2016, %v2264
    %v2266 = vpop.f32.mrf.mxu0
    %2267 = vmatprep.mubr.f32.mxu0 %v1978
    %2268 = vmatmul.mubr.f32.gmra.mxu0 %v1977
    %v2269 = vpop.f32.mrf.mxu0
    %v2270 = vadd.f32 %v2016, %v2269
    %v2271 = vpop.f32.mrf.mxu0
    %2272 = vdwg.mxu0
    %v2273 = vxor.u32 %v2085, 2147483648
    %v2274 = vxor.u32 %v2090, 2147483648
    %v2275 = vxor.u32 %v2095, 2147483648
    %v2276 = vxor.u32 %v2100, 2147483648
    %v2277 = vxor.u32 %v2105, 2147483648
    %v2278 = vxor.u32 %v2110, 2147483648
    %v2279 = vxor.u32 %v2115, 2147483648
    %v2280 = vxor.u32 %v2120, 2147483648
    %v2281 = vxor.u32 %v2125, 2147483648
    %v2282 = vxor.u32 %v2130, 2147483648
    %v2283 = vxor.u32 %v2135, 2147483648
    %v2284 = vxor.u32 %v2140, 2147483648
    %v2285 = vxor.u32 %v2145, 2147483648
    %v2286 = vxor.u32 %v2150, 2147483648
    %v2287 = vxor.u32 %v2155, 2147483648
    %v2288 = vxor.u32 %v2160, 2147483648
    %v2289 = vxor.u32 %v2165, 2147483648
    %v2290 = vxor.u32 %v2170, 2147483648
    %v2291 = vxor.u32 %v2175, 2147483648
    %v2292 = vxor.u32 %v2180, 2147483648
    %v2293 = vxor.u32 %v2185, 2147483648
    %v2294 = vxor.u32 %v2190, 2147483648
    %v2295 = vxor.u32 %v2195, 2147483648
    %v2296 = vxor.u32 %v2200, 2147483648
    %v2297 = vxor.u32 %v2205, 2147483648
    %v2298 = vxor.u32 %v2210, 2147483648
    %v2299 = vxor.u32 %v2215, 2147483648
    %v2300 = vxor.u32 %v2220, 2147483648
    %v2301 = vxor.u32 %v2225, 2147483648
    %v2302 = vxor.u32 %v2230, 2147483648
    %v2303 = vxor.u32 %v2235, 2147483648
    %v2304 = vxor.u32 %v2240, 2147483648
    %v2305 = vxor.u32 %v2245, 2147483648
    %v2306 = vxor.u32 %v2250, 2147483648
    %v2307 = vxor.u32 %v2255, 2147483648
    %v2308 = vxor.u32 %v2260, 2147483648
    %v2309 = vxor.u32 %v2265, 2147483648
    %v2310 = vxor.u32 %v2270, 2147483648
    %v2311 = vmul.f32 %v2273, 1.442695
    %v2312 = vpow.pop %v2311
    %v2313 = vmul.f32 %v2274, 1.442695
    %v2314 = vpow.pop %v2313
    %v2315 = vmul.f32 %v2275, 1.442695
    %v2316 = vpow.pop %v2315
    %v2317 = vmul.f32 %v2276, 1.442695
    %v2318 = vpow.pop %v2317
    %v2319 = vmul.f32 %v2277, 1.442695
    %v2320 = vpow.pop %v2319
    %v2321 = vmul.f32 %v2278, 1.442695
    %v2322 = vpow.pop %v2321
    %v2323 = vmul.f32 %v2279, 1.442695
    %v2324 = vpow.pop %v2323
    %v2325 = vmul.f32 %v2280, 1.442695
    %v2326 = vpow.pop %v2325
    %v2327 = vmul.f32 %v2281, 1.442695
    %v2328 = vpow.pop %v2327
    %v2329 = vmul.f32 %v2282, 1.442695
    %v2330 = vpow.pop %v2329
    %v2331 = vmul.f32 %v2283, 1.442695
    %v2332 = vpow.pop %v2331
    %v2333 = vmul.f32 %v2284, 1.442695
    %v2334 = vpow.pop %v2333
    %v2335 = vmul.f32 %v2285, 1.442695
    %v2336 = vpow.pop %v2335
    %v2337 = vmul.f32 %v2286, 1.442695
    %v2338 = vpow.pop %v2337
    %v2339 = vmul.f32 %v2287, 1.442695
    %v2340 = vpow.pop %v2339
    %v2341 = vmul.f32 %v2288, 1.442695
    %v2342 = vpow.pop %v2341
    %v2343 = vmul.f32 %v2289, 1.442695
    %v2344 = vpow.pop %v2343
    %v2345 = vmul.f32 %v2290, 1.442695
    %v2346 = vpow.pop %v2345
    %v2347 = vmul.f32 %v2291, 1.442695
    %v2348 = vpow.pop %v2347
    %v2349 = vmul.f32 %v2292, 1.442695
    %v2350 = vpow.pop %v2349
    %v2351 = vmul.f32 %v2293, 1.442695
    %v2352 = vpow.pop %v2351
    %v2353 = vmul.f32 %v2294, 1.442695
    %v2354 = vpow.pop %v2353
    %v2355 = vmul.f32 %v2295, 1.442695
    %v2356 = vpow.pop %v2355
    %v2357 = vmul.f32 %v2296, 1.442695
    %v2358 = vpow.pop %v2357
    %v2359 = vmul.f32 %v2297, 1.442695
    %v2360 = vpow.pop %v2359
    %v2361 = vmul.f32 %v2298, 1.442695
    %v2362 = vpow.pop %v2361
    %v2363 = vmul.f32 %v2299, 1.442695
    %v2364 = vpow.pop %v2363
    %v2365 = vmul.f32 %v2300, 1.442695
    %v2366 = vpow.pop %v2365
    %v2367 = vmul.f32 %v2301, 1.442695
    %v2368 = vpow.pop %v2367
    %v2369 = vmul.f32 %v2302, 1.442695
    %v2370 = vpow.pop %v2369
    %v2371 = vmul.f32 %v2303, 1.442695
    %v2372 = vpow.pop %v2371
    %v2373 = vmul.f32 %v2304, 1.442695
    %v2374 = vpow.pop %v2373
    %v2375 = vmul.f32 %v2305, 1.442695
    %v2376 = vpow.pop %v2375
    %v2377 = vmul.f32 %v2306, 1.442695
    %v2378 = vpow.pop %v2377
    %v2379 = vmul.f32 %v2307, 1.442695
    %v2380 = vpow.pop %v2379
    %v2381 = vmul.f32 %v2308, 1.442695
    %v2382 = vpow.pop %v2381
    %v2383 = vmul.f32 %v2309, 1.442695
    %v2384 = vpow.pop %v2383
    %v2385 = vmul.f32 %v2310, 1.442695
    %v2386 = vpow.pop %v2385
    %v2387 = vadd.f32 %v2312, 1.0
    %v2388 = vadd.f32 %v2314, 1.0
    %v2389 = vadd.f32 %v2316, 1.0
    %v2390 = vadd.f32 %v2318, 1.0
    %v2391 = vadd.f32 %v2320, 1.0
    %v2392 = vadd.f32 %v2322, 1.0
    %v2393 = vadd.f32 %v2324, 1.0
    %v2394 = vadd.f32 %v2326, 1.0
    %v2395 = vadd.f32 %v2328, 1.0
    %v2396 = vadd.f32 %v2330, 1.0
    %v2397 = vadd.f32 %v2332, 1.0
    %v2398 = vadd.f32 %v2334, 1.0
    %v2399 = vadd.f32 %v2336, 1.0
    %v2400 = vadd.f32 %v2338, 1.0
    %v2401 = vadd.f32 %v2340, 1.0
    %v2402 = vadd.f32 %v2342, 1.0
    %v2403 = vadd.f32 %v2344, 1.0
    %v2404 = vadd.f32 %v2346, 1.0
    %v2405 = vadd.f32 %v2348, 1.0
    %v2406 = vadd.f32 %v2350, 1.0
    %v2407 = vadd.f32 %v2352, 1.0
    %v2408 = vadd.f32 %v2354, 1.0
    %v2409 = vadd.f32 %v2356, 1.0
    %v2410 = vadd.f32 %v2358, 1.0
    %v2411 = vadd.f32 %v2360, 1.0
    %v2412 = vadd.f32 %v2362, 1.0
    %v2413 = vadd.f32 %v2364, 1.0
    %v2414 = vadd.f32 %v2366, 1.0
    %v2415 = vadd.f32 %v2368, 1.0
    %v2416 = vadd.f32 %v2370, 1.0
    %v2417 = vadd.f32 %v2372, 1.0
    %v2418 = vadd.f32 %v2374, 1.0
    %v2419 = vadd.f32 %v2376, 1.0
    %v2420 = vadd.f32 %v2378, 1.0
    %v2421 = vadd.f32 %v2380, 1.0
    %v2422 = vadd.f32 %v2382, 1.0
    %v2423 = vadd.f32 %v2384, 1.0
    %v2424 = vadd.f32 %v2386, 1.0
    %v2425 = vrcp.pop %v2387
    %v2426 = vmul.f32 1.0, %v2425
    %v2427 = vrcp.pop %v2388
    %v2428 = vmul.f32 1.0, %v2427
    %v2429 = vrcp.pop %v2389
    %v2430 = vmul.f32 1.0, %v2429
    %v2431 = vrcp.pop %v2390
    %v2432 = vmul.f32 1.0, %v2431
    %v2433 = vrcp.pop %v2391
    %v2434 = vmul.f32 1.0, %v2433
    %v2435 = vrcp.pop %v2392
    %v2436 = vmul.f32 1.0, %v2435
    %v2437 = vrcp.pop %v2393
    %v2438 = vmul.f32 1.0, %v2437
    %v2439 = vrcp.pop %v2394
    %v2440 = vmul.f32 1.0, %v2439
    %v2441 = vrcp.pop %v2395
    %v2442 = vmul.f32 1.0, %v2441
    %v2443 = vrcp.pop %v2396
    %v2444 = vmul.f32 1.0, %v2443
    %v2445 = vrcp.pop %v2397
    %v2446 = vmul.f32 1.0, %v2445
    %v2447 = vrcp.pop %v2398
    %v2448 = vmul.f32 1.0, %v2447
    %v2449 = vrcp.pop %v2399
    %v2450 = vmul.f32 1.0, %v2449
    %v2451 = vrcp.pop %v2400
    %v2452 = vmul.f32 1.0, %v2451
    %v2453 = vrcp.pop %v2401
    %v2454 = vmul.f32 1.0, %v2453
    %v2455 = vrcp.pop %v2402
    %v2456 = vmul.f32 1.0, %v2455
    %v2457 = vrcp.pop %v2403
    %v2458 = vmul.f32 1.0, %v2457
    %v2459 = vrcp.pop %v2404
    %v2460 = vmul.f32 1.0, %v2459
    %v2461 = vrcp.pop %v2405
    %v2462 = vmul.f32 1.0, %v2461
    %v2463 = vrcp.pop %v2406
    %v2464 = vmul.f32 1.0, %v2463
    %v2465 = vrcp.pop %v2407
    %v2466 = vmul.f32 1.0, %v2465
    %v2467 = vrcp.pop %v2408
    %v2468 = vmul.f32 1.0, %v2467
    %v2469 = vrcp.pop %v2409
    %v2470 = vmul.f32 1.0, %v2469
    %v2471 = vrcp.pop %v2410
    %v2472 = vmul.f32 1.0, %v2471
    %v2473 = vrcp.pop %v2411
    %v2474 = vmul.f32 1.0, %v2473
    %v2475 = vrcp.pop %v2412
    %v2476 = vmul.f32 1.0, %v2475
    %v2477 = vrcp.pop %v2413
    %v2478 = vmul.f32 1.0, %v2477
    %v2479 = vrcp.pop %v2414
    %v2480 = vmul.f32 1.0, %v2479
    %v2481 = vrcp.pop %v2415
    %v2482 = vmul.f32 1.0, %v2481
    %v2483 = vrcp.pop %v2416
    %v2484 = vmul.f32 1.0, %v2483
    %v2485 = vrcp.pop %v2417
    %v2486 = vmul.f32 1.0, %v2485
    %v2487 = vrcp.pop %v2418
    %v2488 = vmul.f32 1.0, %v2487
    %v2489 = vrcp.pop %v2419
    %v2490 = vmul.f32 1.0, %v2489
    %v2491 = vrcp.pop %v2420
    %v2492 = vmul.f32 1.0, %v2491
    %v2493 = vrcp.pop %v2421
    %v2494 = vmul.f32 1.0, %v2493
    %v2495 = vrcp.pop %v2422
    %v2496 = vmul.f32 1.0, %v2495
    %v2497 = vrcp.pop %v2423
    %v2498 = vmul.f32 1.0, %v2497
    %v2499 = vrcp.pop %v2424
    %v2500 = vmul.f32 1.0, %v2499
    %v2501 = vmul.f32 %v2085, %v2426
    %v2502 = vmul.f32 %v2090, %v2428
    %v2503 = vmul.f32 %v2095, %v2430
    %v2504 = vmul.f32 %v2100, %v2432
    %v2505 = vmul.f32 %v2105, %v2434
    %v2506 = vmul.f32 %v2110, %v2436
    %v2507 = vmul.f32 %v2115, %v2438
    %v2508 = vmul.f32 %v2120, %v2440
    %v2509 = vmul.f32 %v2125, %v2442
    %v2510 = vmul.f32 %v2130, %v2444
    %v2511 = vmul.f32 %v2135, %v2446
    %v2512 = vmul.f32 %v2140, %v2448
    %v2513 = vmul.f32 %v2145, %v2450
    %v2514 = vmul.f32 %v2150, %v2452
    %v2515 = vmul.f32 %v2155, %v2454
    %v2516 = vmul.f32 %v2160, %v2456
    %v2517 = vmul.f32 %v2165, %v2458
    %v2518 = vmul.f32 %v2170, %v2460
    %v2519 = vmul.f32 %v2175, %v2462
    %v2520 = vmul.f32 %v2180, %v2464
    %v2521 = vmul.f32 %v2185, %v2466
    %v2522 = vmul.f32 %v2190, %v2468
    %v2523 = vmul.f32 %v2195, %v2470
    %v2524 = vmul.f32 %v2200, %v2472
    %v2525 = vmul.f32 %v2205, %v2474
    %v2526 = vmul.f32 %v2210, %v2476
    %v2527 = vmul.f32 %v2215, %v2478
    %v2528 = vmul.f32 %v2220, %v2480
    %v2529 = vmul.f32 %v2225, %v2482
    %v2530 = vmul.f32 %v2230, %v2484
    %v2531 = vmul.f32 %v2235, %v2486
    %v2532 = vmul.f32 %v2240, %v2488
    %v2533 = vmul.f32 %v2245, %v2490
    %v2534 = vmul.f32 %v2250, %v2492
    %v2535 = vmul.f32 %v2255, %v2494
    %v2536 = vmul.f32 %v2260, %v2496
    %v2537 = vmul.f32 %v2265, %v2498
    %v2538 = vmul.f32 %v2270, %v2500
    %v2539 = vld [vmem:[%s7] sm:$0xff]
    %v2540 = vld [vmem:[%s7 + $0x8] sm:$0xff]
    %v2541 = vld [vmem:[%s7 + $0x10] sm:$0xff]
    %v2542 = vld [vmem:[%s7 + $0x18] sm:$0xff]
    %v2543 = vld [vmem:[%s7 + $0x20] sm:$0xff]
    %v2544 = vld [vmem:[%s7 + $0x28] sm:$0xff]
    %v2545 = vld [vmem:[%s7 + $0x30] sm:$0xff]
    %v2546 = vld [vmem:[%s7 + $0x38] sm:$0xff]
    %v2547 = vld [vmem:[%s7 + $0x40] sm:$0xff]
    %v2548 = vld [vmem:[%s7 + $0x48] sm:$0xff]
    %v2549 = vld [vmem:[%s7 + $0x50] sm:$0xff]
    %v2550 = vld [vmem:[%s7 + $0x58] sm:$0xff]
    %v2551 = vld [vmem:[%s7 + $0x60] sm:$0xff]
    %v2552 = vld [vmem:[%s7 + $0x68] sm:$0xff]
    %v2553 = vld [vmem:[%s7 + $0x70] sm:$0xff]
    %v2554 = vld [vmem:[%s7 + $0x78] sm:$0xff]
    %v2555 = vld [vmem:[%s8] sm:$0x1]
    %v2557 = vlaneseq
    %v2558 = vshrl.u32 %v2557, 7
    %v2559 = vsub.s32 0, %v2558
    %v2560 = vrot.slane %v2555, %v2559
    %2562 = vmatprep.subr.mxu0 0.0
    %2563 = vmatpush1.msra.mxu0 %v2554
    %2564 = vmatprep.subr.mxu0 0.0
    %2565 = vmatpush1.msra.mxu0 %v2553
    %2566 = vmatprep.subr.mxu0 0.0
    %2567 = vmatpush1.msra.mxu0 %v2552
    %2568 = vmatprep.subr.mxu0 0.0
    %2569 = vmatpush1.msra.mxu0 %v2551
    %2570 = vmatprep.subr.mxu0 0.0
    %2571 = vmatpush1.msra.mxu0 %v2550
    %2572 = vmatprep.subr.mxu0 0.0
    %2573 = vmatpush1.msra.mxu0 %v2549
    %2574 = vmatprep.subr.mxu0 0.0
    %2575 = vmatpush1.msra.mxu0 %v2548
    %2576 = vmatprep.subr.mxu0 0.0
    %2577 = vmatpush1.msra.mxu0 %v2547
    %2578 = vmatprep.subr.mxu0 0.0
    %2579 = vmatpush1.msra.mxu0 %v2546
    %2580 = vmatprep.subr.mxu0 0.0
    %2581 = vmatpush1.msra.mxu0 %v2545
    %2582 = vmatprep.subr.mxu0 0.0
    %2583 = vmatpush1.msra.mxu0 %v2544
    %2584 = vmatprep.subr.mxu0 0.0
    %2585 = vmatpush1.msra.mxu0 %v2543
    %2586 = vmatprep.subr.mxu0 0.0
    %2587 = vmatpush1.msra.mxu0 %v2542
    %2588 = vmatprep.subr.mxu0 0.0
    %2589 = vmatpush1.msra.mxu0 %v2541
    %2590 = vmatprep.subr.mxu0 0.0
    %2591 = vmatpush1.msra.mxu0 %v2540
    %2592 = vmatprep.subr.mxu0 0.0
    %2593 = vmatpush1.msra.mxu0 %v2539
    %2594 = vmatprep.subr.mxu0 0.0
    %2595 = vmatpush2.msra.mxu0 0.0
    %2596 = vmatprep.subr.mxu0 0.0
    %2597 = vmatpush2.msra.mxu0 0.0
    %2598 = vmatprep.subr.mxu0 0.0
    %2599 = vmatpush2.msra.mxu0 0.0
    %2600 = vmatprep.subr.mxu0 0.0
    %2601 = vmatpush2.msra.mxu0 0.0
    %2602 = vmatprep.subr.mxu0 0.0
    %2603 = vmatpush2.msra.mxu0 0.0
    %2604 = vmatprep.subr.mxu0 0.0
    %2605 = vmatpush2.msra.mxu0 0.0
    %2606 = vmatprep.subr.mxu0 0.0
    %2607 = vmatpush2.msra.mxu0 0.0
    %2608 = vmatprep.subr.mxu0 0.0
    %2609 = vmatpush2.msra.mxu0 0.0
    %2610 = vmatprep.subr.mxu0 0.0
    %2611 = vmatpush2.msra.mxu0 0.0
    %2612 = vmatprep.subr.mxu0 0.0
    %2613 = vmatpush2.msra.mxu0 0.0
    %2614 = vmatprep.subr.mxu0 0.0
    %2615 = vmatpush2.msra.mxu0 0.0
    %2616 = vmatprep.subr.mxu0 0.0
    %2617 = vmatpush2.msra.mxu0 0.0
    %2618 = vmatprep.subr.mxu0 0.0
    %2619 = vmatpush2.msra.mxu0 0.0
    %2620 = vmatprep.subr.mxu0 0.0
    %2621 = vmatpush2.msra.mxu0 0.0
    %2622 = vmatprep.subr.mxu0 0.0
    %2623 = vmatpush2.msra.mxu0 0.0
    %2624 = vmatprep.subr.mxu0 0.0
    %2625 = vmatpush2.msra.mxu0 0.0
    %2626 = vmatprep.mubr.f32.mxu0 0.0
    %2627 = vmatmul.mubr.f32.gmra.mxu0 %v2501
    %v2628 = vpop.f32.mrf.mxu0
    %v2629 = vadd.f32 %v2560, %v2628
    %v2630 = vpop.f32.mrf.mxu0
    %2631 = vmatprep.mubr.f32.mxu0 0.0
    %2632 = vmatmul.mubr.f32.gmra.mxu0 %v2502
    %v2633 = vpop.f32.mrf.mxu0
    %v2634 = vadd.f32 %v2560, %v2633
    %v2635 = vpop.f32.mrf.mxu0
    %2636 = vmatprep.mubr.f32.mxu0 0.0
    %2637 = vmatmul.mubr.f32.gmra.mxu0 %v2503
    %v2638 = vpop.f32.mrf.mxu0
    %v2639 = vadd.f32 %v2560, %v2638
    %v2640 = vpop.f32.mrf.mxu0
    %2641 = vmatprep.mubr.f32.mxu0 0.0
    %2642 = vmatmul.mubr.f32.gmra.mxu0 %v2504
    %v2643 = vpop.f32.mrf.mxu0
    %v2644 = vadd.f32 %v2560, %v2643
    %v2645 = vpop.f32.mrf.mxu0
    %2646 = vmatprep.mubr.f32.mxu0 0.0
    %2647 = vmatmul.mubr.f32.gmra.mxu0 %v2505
    %v2648 = vpop.f32.mrf.mxu0
    %v2649 = vadd.f32 %v2560, %v2648
    %v2650 = vpop.f32.mrf.mxu0
    %2651 = vmatprep.mubr.f32.mxu0 0.0
    %2652 = vmatmul.mubr.f32.gmra.mxu0 %v2506
    %v2653 = vpop.f32.mrf.mxu0
    %v2654 = vadd.f32 %v2560, %v2653
    %v2655 = vpop.f32.mrf.mxu0
    %2656 = vmatprep.mubr.f32.mxu0 0.0
    %2657 = vmatmul.mubr.f32.gmra.mxu0 %v2507
    %v2658 = vpop.f32.mrf.mxu0
    %v2659 = vadd.f32 %v2560, %v2658
    %v2660 = vpop.f32.mrf.mxu0
    %2661 = vmatprep.mubr.f32.mxu0 0.0
    %2662 = vmatmul.mubr.f32.gmra.mxu0 %v2508
    %v2663 = vpop.f32.mrf.mxu0
    %v2664 = vadd.f32 %v2560, %v2663
    %v2665 = vpop.f32.mrf.mxu0
    %2666 = vmatprep.mubr.f32.mxu0 0.0
    %2667 = vmatmul.mubr.f32.gmra.mxu0 %v2509
    %v2668 = vpop.f32.mrf.mxu0
    %v2669 = vadd.f32 %v2560, %v2668
    %v2670 = vpop.f32.mrf.mxu0
    %2671 = vmatprep.mubr.f32.mxu0 0.0
    %2672 = vmatmul.mubr.f32.gmra.mxu0 %v2510
    %v2673 = vpop.f32.mrf.mxu0
    %v2674 = vadd.f32 %v2560, %v2673
    %v2675 = vpop.f32.mrf.mxu0
    %2676 = vmatprep.mubr.f32.mxu0 0.0
    %2677 = vmatmul.mubr.f32.gmra.mxu0 %v2511
    %v2678 = vpop.f32.mrf.mxu0
    %v2679 = vadd.f32 %v2560, %v2678
    %v2680 = vpop.f32.mrf.mxu0
    %2681 = vmatprep.mubr.f32.mxu0 0.0
    %2682 = vmatmul.mubr.f32.gmra.mxu0 %v2512
    %v2683 = vpop.f32.mrf.mxu0
    %v2684 = vadd.f32 %v2560, %v2683
    %v2685 = vpop.f32.mrf.mxu0
    %2686 = vmatprep.mubr.f32.mxu0 0.0
    %2687 = vmatmul.mubr.f32.gmra.mxu0 %v2513
    %v2688 = vpop.f32.mrf.mxu0
    %v2689 = vadd.f32 %v2560, %v2688
    %v2690 = vpop.f32.mrf.mxu0
    %2691 = vmatprep.mubr.f32.mxu0 0.0
    %2692 = vmatmul.mubr.f32.gmra.mxu0 %v2514
    %v2693 = vpop.f32.mrf.mxu0
    %v2694 = vadd.f32 %v2560, %v2693
    %v2695 = vpop.f32.mrf.mxu0
    %2696 = vmatprep.mubr.f32.mxu0 0.0
    %2697 = vmatmul.mubr.f32.gmra.mxu0 %v2515
    %v2698 = vpop.f32.mrf.mxu0
    %v2699 = vadd.f32 %v2560, %v2698
    %v2700 = vpop.f32.mrf.mxu0
    %2701 = vmatprep.mubr.f32.mxu0 0.0
    %2702 = vmatmul.mubr.f32.gmra.mxu0 %v2516
    %v2703 = vpop.f32.mrf.mxu0
    %v2704 = vadd.f32 %v2560, %v2703
    %v2705 = vpop.f32.mrf.mxu0
    %2706 = vmatprep.mubr.f32.mxu0 0.0
    %2707 = vmatmul.mubr.f32.gmra.mxu0 %v2517
    %v2708 = vpop.f32.mrf.mxu0
    %v2709 = vadd.f32 %v2560, %v2708
    %v2710 = vpop.f32.mrf.mxu0
    %2711 = vmatprep.mubr.f32.mxu0 0.0
    %2712 = vmatmul.mubr.f32.gmra.mxu0 %v2518
    %v2713 = vpop.f32.mrf.mxu0
    %v2714 = vadd.f32 %v2560, %v2713
    %v2715 = vpop.f32.mrf.mxu0
    %2716 = vmatprep.mubr.f32.mxu0 0.0
    %2717 = vmatmul.mubr.f32.gmra.mxu0 %v2519
    %v2718 = vpop.f32.mrf.mxu0
    %v2719 = vadd.f32 %v2560, %v2718
    %v2720 = vpop.f32.mrf.mxu0
    %2721 = vmatprep.mubr.f32.mxu0 0.0
    %2722 = vmatmul.mubr.f32.gmra.mxu0 %v2520
    %v2723 = vpop.f32.mrf.mxu0
    %v2724 = vadd.f32 %v2560, %v2723
    %v2725 = vpop.f32.mrf.mxu0
    %2726 = vmatprep.mubr.f32.mxu0 0.0
    %2727 = vmatmul.mubr.f32.gmra.mxu0 %v2521
    %v2728 = vpop.f32.mrf.mxu0
    %v2729 = vadd.f32 %v2560, %v2728
    %v2730 = vpop.f32.mrf.mxu0
    %2731 = vmatprep.mubr.f32.mxu0 0.0
    %2732 = vmatmul.mubr.f32.gmra.mxu0 %v2522
    %v2733 = vpop.f32.mrf.mxu0
    %v2734 = vadd.f32 %v2560, %v2733
    %v2735 = vpop.f32.mrf.mxu0
    %2736 = vmatprep.mubr.f32.mxu0 0.0
    %2737 = vmatmul.mubr.f32.gmra.mxu0 %v2523
    %v2738 = vpop.f32.mrf.mxu0
    %v2739 = vadd.f32 %v2560, %v2738
    %v2740 = vpop.f32.mrf.mxu0
    %2741 = vmatprep.mubr.f32.mxu0 0.0
    %2742 = vmatmul.mubr.f32.gmra.mxu0 %v2524
    %v2743 = vpop.f32.mrf.mxu0
    %v2744 = vadd.f32 %v2560, %v2743
    %v2745 = vpop.f32.mrf.mxu0
    %2746 = vmatprep.mubr.f32.mxu0 0.0
    %2747 = vmatmul.mubr.f32.gmra.mxu0 %v2525
    %v2748 = vpop.f32.mrf.mxu0
    %v2749 = vadd.f32 %v2560, %v2748
    %v2750 = vpop.f32.mrf.mxu0
    %2751 = vmatprep.mubr.f32.mxu0 0.0
    %2752 = vmatmul.mubr.f32.gmra.mxu0 %v2526
    %v2753 = vpop.f32.mrf.mxu0
    %v2754 = vadd.f32 %v2560, %v2753
    %v2755 = vpop.f32.mrf.mxu0
    %2756 = vmatprep.mubr.f32.mxu0 0.0
    %2757 = vmatmul.mubr.f32.gmra.mxu0 %v2527
    %v2758 = vpop.f32.mrf.mxu0
    %v2759 = vadd.f32 %v2560, %v2758
    %v2760 = vpop.f32.mrf.mxu0
    %2761 = vmatprep.mubr.f32.mxu0 0.0
    %2762 = vmatmul.mubr.f32.gmra.mxu0 %v2528
    %v2763 = vpop.f32.mrf.mxu0
    %v2764 = vadd.f32 %v2560, %v2763
    %v2765 = vpop.f32.mrf.mxu0
    %2766 = vmatprep.mubr.f32.mxu0 0.0
    %2767 = vmatmul.mubr.f32.gmra.mxu0 %v2529
    %v2768 = vpop.f32.mrf.mxu0
    %v2769 = vadd.f32 %v2560, %v2768
    %v2770 = vpop.f32.mrf.mxu0
    %2771 = vmatprep.mubr.f32.mxu0 0.0
    %2772 = vmatmul.mubr.f32.gmra.mxu0 %v2530
    %v2773 = vpop.f32.mrf.mxu0
    %v2774 = vadd.f32 %v2560, %v2773
    %v2775 = vpop.f32.mrf.mxu0
    %2776 = vmatprep.mubr.f32.mxu0 0.0
    %2777 = vmatmul.mubr.f32.gmra.mxu0 %v2531
    %v2778 = vpop.f32.mrf.mxu0
    %v2779 = vadd.f32 %v2560, %v2778
    %v2780 = vpop.f32.mrf.mxu0
    %2781 = vmatprep.mubr.f32.mxu0 0.0
    %2782 = vmatmul.mubr.f32.gmra.mxu0 %v2532
    %v2783 = vpop.f32.mrf.mxu0
    %v2784 = vadd.f32 %v2560, %v2783
    %v2785 = vpop.f32.mrf.mxu0
    %2786 = vmatprep.mubr.f32.mxu0 0.0
    %2787 = vmatmul.mubr.f32.gmra.mxu0 %v2533
    %v2788 = vpop.f32.mrf.mxu0
    %v2789 = vadd.f32 %v2560, %v2788
    %v2790 = vpop.f32.mrf.mxu0
    %2791 = vmatprep.mubr.f32.mxu0 0.0
    %2792 = vmatmul.mubr.f32.gmra.mxu0 %v2534
    %v2793 = vpop.f32.mrf.mxu0
    %v2794 = vadd.f32 %v2560, %v2793
    %v2795 = vpop.f32.mrf.mxu0
    %2796 = vmatprep.mubr.f32.mxu0 0.0
    %2797 = vmatmul.mubr.f32.gmra.mxu0 %v2535
    %v2798 = vpop.f32.mrf.mxu0
    %v2799 = vadd.f32 %v2560, %v2798
    %v2800 = vpop.f32.mrf.mxu0
    %2801 = vmatprep.mubr.f32.mxu0 0.0
    %2802 = vmatmul.mubr.f32.gmra.mxu0 %v2536
    %v2803 = vpop.f32.mrf.mxu0
    %v2804 = vadd.f32 %v2560, %v2803
    %v2805 = vpop.f32.mrf.mxu0
    %2806 = vmatprep.mubr.f32.mxu0 0.0
    %2807 = vmatmul.mubr.f32.gmra.mxu0 %v2537
    %v2808 = vpop.f32.mrf.mxu0
    %v2809 = vadd.f32 %v2560, %v2808
    %v2810 = vpop.f32.mrf.mxu0
    %2811 = vmatprep.mubr.f32.mxu0 0.0
    %2812 = vmatmul.mubr.f32.gmra.mxu0 %v2538
    %v2813 = vpop.f32.mrf.mxu0
    %v2814 = vadd.f32 %v2560, %v2813
    %v2815 = vpop.f32.mrf.mxu0
    %2816 = vdwg.mxu0
    %v2817 = vxor.u32 %v2629, 2147483648
    %v2818 = vxor.u32 %v2634, 2147483648
    %v2819 = vxor.u32 %v2639, 2147483648
    %v2820 = vxor.u32 %v2644, 2147483648
    %v2821 = vxor.u32 %v2649, 2147483648
    %v2822 = vxor.u32 %v2654, 2147483648
    %v2823 = vxor.u32 %v2659, 2147483648
    %v2824 = vxor.u32 %v2664, 2147483648
    %v2825 = vxor.u32 %v2669, 2147483648
    %v2826 = vxor.u32 %v2674, 2147483648
    %v2827 = vxor.u32 %v2679, 2147483648
    %v2828 = vxor.u32 %v2684, 2147483648
    %v2829 = vxor.u32 %v2689, 2147483648
    %v2830 = vxor.u32 %v2694, 2147483648
    %v2831 = vxor.u32 %v2699, 2147483648
    %v2832 = vxor.u32 %v2704, 2147483648
    %v2833 = vxor.u32 %v2709, 2147483648
    %v2834 = vxor.u32 %v2714, 2147483648
    %v2835 = vxor.u32 %v2719, 2147483648
    %v2836 = vxor.u32 %v2724, 2147483648
    %v2837 = vxor.u32 %v2729, 2147483648
    %v2838 = vxor.u32 %v2734, 2147483648
    %v2839 = vxor.u32 %v2739, 2147483648
    %v2840 = vxor.u32 %v2744, 2147483648
    %v2841 = vxor.u32 %v2749, 2147483648
    %v2842 = vxor.u32 %v2754, 2147483648
    %v2843 = vxor.u32 %v2759, 2147483648
    %v2844 = vxor.u32 %v2764, 2147483648
    %v2845 = vxor.u32 %v2769, 2147483648
    %v2846 = vxor.u32 %v2774, 2147483648
    %v2847 = vxor.u32 %v2779, 2147483648
    %v2848 = vxor.u32 %v2784, 2147483648
    %v2849 = vxor.u32 %v2789, 2147483648
    %v2850 = vxor.u32 %v2794, 2147483648
    %v2851 = vxor.u32 %v2799, 2147483648
    %v2852 = vxor.u32 %v2804, 2147483648
    %v2853 = vxor.u32 %v2809, 2147483648
    %v2854 = vxor.u32 %v2814, 2147483648
    %v2855 = vmul.f32 %v2817, 1.442695
    %v2856 = vpow.pop %v2855
    %v2857 = vmul.f32 %v2818, 1.442695
    %v2858 = vpow.pop %v2857
    %v2859 = vmul.f32 %v2819, 1.442695
    %v2860 = vpow.pop %v2859
    %v2861 = vmul.f32 %v2820, 1.442695
    %v2862 = vpow.pop %v2861
    %v2863 = vmul.f32 %v2821, 1.442695
    %v2864 = vpow.pop %v2863
    %v2865 = vmul.f32 %v2822, 1.442695
    %v2866 = vpow.pop %v2865
    %v2867 = vmul.f32 %v2823, 1.442695
    %v2868 = vpow.pop %v2867
    %v2869 = vmul.f32 %v2824, 1.442695
    %v2870 = vpow.pop %v2869
    %v2871 = vmul.f32 %v2825, 1.442695
    %v2872 = vpow.pop %v2871
    %v2873 = vmul.f32 %v2826, 1.442695
    %v2874 = vpow.pop %v2873
    %v2875 = vmul.f32 %v2827, 1.442695
    %v2876 = vpow.pop %v2875
    %v2877 = vmul.f32 %v2828, 1.442695
    %v2878 = vpow.pop %v2877
    %v2879 = vmul.f32 %v2829, 1.442695
    %v2880 = vpow.pop %v2879
    %v2881 = vmul.f32 %v2830, 1.442695
    %v2882 = vpow.pop %v2881
    %v2883 = vmul.f32 %v2831, 1.442695
    %v2884 = vpow.pop %v2883
    %v2885 = vmul.f32 %v2832, 1.442695
    %v2886 = vpow.pop %v2885
    %v2887 = vmul.f32 %v2833, 1.442695
    %v2888 = vpow.pop %v2887
    %v2889 = vmul.f32 %v2834, 1.442695
    %v2890 = vpow.pop %v2889
    %v2891 = vmul.f32 %v2835, 1.442695
    %v2892 = vpow.pop %v2891
    %v2893 = vmul.f32 %v2836, 1.442695
    %v2894 = vpow.pop %v2893
    %v2895 = vmul.f32 %v2837, 1.442695
    %v2896 = vpow.pop %v2895
    %v2897 = vmul.f32 %v2838, 1.442695
    %v2898 = vpow.pop %v2897
    %v2899 = vmul.f32 %v2839, 1.442695
    %v2900 = vpow.pop %v2899
    %v2901 = vmul.f32 %v2840, 1.442695
    %v2902 = vpow.pop %v2901
    %v2903 = vmul.f32 %v2841, 1.442695
    %v2904 = vpow.pop %v2903
    %v2905 = vmul.f32 %v2842, 1.442695
    %v2906 = vpow.pop %v2905
    %v2907 = vmul.f32 %v2843, 1.442695
    %v2908 = vpow.pop %v2907
    %v2909 = vmul.f32 %v2844, 1.442695
    %v2910 = vpow.pop %v2909
    %v2911 = vmul.f32 %v2845, 1.442695
    %v2912 = vpow.pop %v2911
    %v2913 = vmul.f32 %v2846, 1.442695
    %v2914 = vpow.pop %v2913
    %v2915 = vmul.f32 %v2847, 1.442695
    %v2916 = vpow.pop %v2915
    %v2917 = vmul.f32 %v2848, 1.442695
    %v2918 = vpow.pop %v2917
    %v2919 = vmul.f32 %v2849, 1.442695
    %v2920 = vpow.pop %v2919
    %v2921 = vmul.f32 %v2850, 1.442695
    %v2922 = vpow.pop %v2921
    %v2923 = vmul.f32 %v2851, 1.442695
    %v2924 = vpow.pop %v2923
    %v2925 = vmul.f32 %v2852, 1.442695
    %v2926 = vpow.pop %v2925
    %v2927 = vmul.f32 %v2853, 1.442695
    %v2928 = vpow.pop %v2927
    %v2929 = vmul.f32 %v2854, 1.442695
    %v2930 = vpow.pop %v2929
    %v2931 = vadd.f32 %v2856, 1.0
    %v2932 = vadd.f32 %v2858, 1.0
    %v2933 = vadd.f32 %v2860, 1.0
    %v2934 = vadd.f32 %v2862, 1.0
    %v2935 = vadd.f32 %v2864, 1.0
    %v2936 = vadd.f32 %v2866, 1.0
    %v2937 = vadd.f32 %v2868, 1.0
    %v2938 = vadd.f32 %v2870, 1.0
    %v2939 = vadd.f32 %v2872, 1.0
    %v2940 = vadd.f32 %v2874, 1.0
    %v2941 = vadd.f32 %v2876, 1.0
    %v2942 = vadd.f32 %v2878, 1.0
    %v2943 = vadd.f32 %v2880, 1.0
    %v2944 = vadd.f32 %v2882, 1.0
    %v2945 = vadd.f32 %v2884, 1.0
    %v2946 = vadd.f32 %v2886, 1.0
    %v2947 = vadd.f32 %v2888, 1.0
    %v2948 = vadd.f32 %v2890, 1.0
    %v2949 = vadd.f32 %v2892, 1.0
    %v2950 = vadd.f32 %v2894, 1.0
    %v2951 = vadd.f32 %v2896, 1.0
    %v2952 = vadd.f32 %v2898, 1.0
    %v2953 = vadd.f32 %v2900, 1.0
    %v2954 = vadd.f32 %v2902, 1.0
    %v2955 = vadd.f32 %v2904, 1.0
    %v2956 = vadd.f32 %v2906, 1.0
    %v2957 = vadd.f32 %v2908, 1.0
    %v2958 = vadd.f32 %v2910, 1.0
    %v2959 = vadd.f32 %v2912, 1.0
    %v2960 = vadd.f32 %v2914, 1.0
    %v2961 = vadd.f32 %v2916, 1.0
    %v2962 = vadd.f32 %v2918, 1.0
    %v2963 = vadd.f32 %v2920, 1.0
    %v2964 = vadd.f32 %v2922, 1.0
    %v2965 = vadd.f32 %v2924, 1.0
    %v2966 = vadd.f32 %v2926, 1.0
    %v2967 = vadd.f32 %v2928, 1.0
    %v2968 = vadd.f32 %v2930, 1.0
    %v2969 = vrcp.pop %v2931
    %v2970 = vmul.f32 1.0, %v2969
    %v2971 = vrcp.pop %v2932
    %v2972 = vmul.f32 1.0, %v2971
    %v2973 = vrcp.pop %v2933
    %v2974 = vmul.f32 1.0, %v2973
    %v2975 = vrcp.pop %v2934
    %v2976 = vmul.f32 1.0, %v2975
    %v2977 = vrcp.pop %v2935
    %v2978 = vmul.f32 1.0, %v2977
    %v2979 = vrcp.pop %v2936
    %v2980 = vmul.f32 1.0, %v2979
    %v2981 = vrcp.pop %v2937
    %v2982 = vmul.f32 1.0, %v2981
    %v2983 = vrcp.pop %v2938
    %v2984 = vmul.f32 1.0, %v2983
    %v2985 = vrcp.pop %v2939
    %v2986 = vmul.f32 1.0, %v2985
    %v2987 = vrcp.pop %v2940
    %v2988 = vmul.f32 1.0, %v2987
    %v2989 = vrcp.pop %v2941
    %v2990 = vmul.f32 1.0, %v2989
    %v2991 = vrcp.pop %v2942
    %v2992 = vmul.f32 1.0, %v2991
    %v2993 = vrcp.pop %v2943
    %v2994 = vmul.f32 1.0, %v2993
    %v2995 = vrcp.pop %v2944
    %v2996 = vmul.f32 1.0, %v2995
    %v2997 = vrcp.pop %v2945
    %v2998 = vmul.f32 1.0, %v2997
    %v2999 = vrcp.pop %v2946
    %v3000 = vmul.f32 1.0, %v2999
    %v3001 = vrcp.pop %v2947
    %v3002 = vmul.f32 1.0, %v3001
    %v3003 = vrcp.pop %v2948
    %v3004 = vmul.f32 1.0, %v3003
    %v3005 = vrcp.pop %v2949
    %v3006 = vmul.f32 1.0, %v3005
    %v3007 = vrcp.pop %v2950
    %v3008 = vmul.f32 1.0, %v3007
    %v3009 = vrcp.pop %v2951
    %v3010 = vmul.f32 1.0, %v3009
    %v3011 = vrcp.pop %v2952
    %v3012 = vmul.f32 1.0, %v3011
    %v3013 = vrcp.pop %v2953
    %v3014 = vmul.f32 1.0, %v3013
    %v3015 = vrcp.pop %v2954
    %v3016 = vmul.f32 1.0, %v3015
    %v3017 = vrcp.pop %v2955
    %v3018 = vmul.f32 1.0, %v3017
    %v3019 = vrcp.pop %v2956
    %v3020 = vmul.f32 1.0, %v3019
    %v3021 = vrcp.pop %v2957
    %v3022 = vmul.f32 1.0, %v3021
    %v3023 = vrcp.pop %v2958
    %v3024 = vmul.f32 1.0, %v3023
    %v3025 = vrcp.pop %v2959
    %v3026 = vmul.f32 1.0, %v3025
    %v3027 = vrcp.pop %v2960
    %v3028 = vmul.f32 1.0, %v3027
    %v3029 = vrcp.pop %v2961
    %v3030 = vmul.f32 1.0, %v3029
    %v3031 = vrcp.pop %v2962
    %v3032 = vmul.f32 1.0, %v3031
    %v3033 = vrcp.pop %v2963
    %v3034 = vmul.f32 1.0, %v3033
    %v3035 = vrcp.pop %v2964
    %v3036 = vmul.f32 1.0, %v3035
    %v3037 = vrcp.pop %v2965
    %v3038 = vmul.f32 1.0, %v3037
    %v3039 = vrcp.pop %v2966
    %v3040 = vmul.f32 1.0, %v3039
    %v3041 = vrcp.pop %v2967
    %v3042 = vmul.f32 1.0, %v3041
    %v3043 = vrcp.pop %v2968
    %v3044 = vmul.f32 1.0, %v3043
    %v3045 = vmul.f32 %v2629, %v2970
    %v3046 = vmul.f32 %v2634, %v2972
    %v3047 = vmul.f32 %v2639, %v2974
    %v3048 = vmul.f32 %v2644, %v2976
    %v3049 = vmul.f32 %v2649, %v2978
    %v3050 = vmul.f32 %v2654, %v2980
    %v3051 = vmul.f32 %v2659, %v2982
    %v3052 = vmul.f32 %v2664, %v2984
    %v3053 = vmul.f32 %v2669, %v2986
    %v3054 = vmul.f32 %v2674, %v2988
    %v3055 = vmul.f32 %v2679, %v2990
    %v3056 = vmul.f32 %v2684, %v2992
    %v3057 = vmul.f32 %v2689, %v2994
    %v3058 = vmul.f32 %v2694, %v2996
    %v3059 = vmul.f32 %v2699, %v2998
    %v3060 = vmul.f32 %v2704, %v3000
    %v3061 = vmul.f32 %v2709, %v3002
    %v3062 = vmul.f32 %v2714, %v3004
    %v3063 = vmul.f32 %v2719, %v3006
    %v3064 = vmul.f32 %v2724, %v3008
    %v3065 = vmul.f32 %v2729, %v3010
    %v3066 = vmul.f32 %v2734, %v3012
    %v3067 = vmul.f32 %v2739, %v3014
    %v3068 = vmul.f32 %v2744, %v3016
    %v3069 = vmul.f32 %v2749, %v3018
    %v3070 = vmul.f32 %v2754, %v3020
    %v3071 = vmul.f32 %v2759, %v3022
    %v3072 = vmul.f32 %v2764, %v3024
    %v3073 = vmul.f32 %v2769, %v3026
    %v3074 = vmul.f32 %v2774, %v3028
    %v3075 = vmul.f32 %v2779, %v3030
    %v3076 = vmul.f32 %v2784, %v3032
    %v3077 = vmul.f32 %v2789, %v3034
    %v3078 = vmul.f32 %v2794, %v3036
    %v3079 = vmul.f32 %v2799, %v3038
    %v3080 = vmul.f32 %v2804, %v3040
    %v3081 = vmul.f32 %v2809, %v3042
    %v3082 = vmul.f32 %v2814, %v3044
    %v3083 = vld [vmem:[#allocation7] sm:$0xff]
    %v3084 = vld [vmem:[#allocation7 + $0x8] sm:$0xff]
    %v3085 = vld [vmem:[#allocation7 + $0x10] sm:$0xff]
    %v3086 = vld [vmem:[#allocation7 + $0x18] sm:$0xff]
    %v3087 = vld [vmem:[#allocation7 + $0x20] sm:$0xff]
    %v3088 = vld [vmem:[#allocation7 + $0x28] sm:$0xff]
    %v3089 = vld [vmem:[#allocation7 + $0x30] sm:$0xff]
    %v3090 = vld [vmem:[#allocation7 + $0x38] sm:$0xff]
    %v3091 = vld [vmem:[#allocation7 + $0x40] sm:$0xff]
    %v3092 = vld [vmem:[#allocation7 + $0x48] sm:$0xff]
    %v3093 = vld [vmem:[#allocation7 + $0x50] sm:$0xff]
    %v3094 = vld [vmem:[#allocation7 + $0x58] sm:$0xff]
    %v3095 = vld [vmem:[#allocation7 + $0x60] sm:$0xff]
    %v3096 = vld [vmem:[#allocation7 + $0x68] sm:$0xff]
    %v3097 = vld [vmem:[#allocation7 + $0x70] sm:$0xff]
    %v3098 = vld [vmem:[#allocation7 + $0x78] sm:$0xff]
    %v3099 = vld [vmem:[%s10] sm:$0x1]
    %v3101 = vlaneseq
    %v3102 = vshrl.u32 %v3101, 7
    %v3103 = vsub.s32 0, %v3102
    %v3104 = vrot.slane %v3099, %v3103
    %3106 = vmatprep.subr.mxu0 0.0
    %3107 = vmatpush1.msra.mxu0 %v3098
    %3108 = vmatprep.subr.mxu0 0.0
    %3109 = vmatpush1.msra.mxu0 %v3097
    %3110 = vmatprep.subr.mxu0 0.0
    %3111 = vmatpush1.msra.mxu0 %v3096
    %3112 = vmatprep.subr.mxu0 0.0
    %3113 = vmatpush1.msra.mxu0 %v3095
    %3114 = vmatprep.subr.mxu0 0.0
    %3115 = vmatpush1.msra.mxu0 %v3094
    %3116 = vmatprep.subr.mxu0 0.0
    %3117 = vmatpush1.msra.mxu0 %v3093
    %3118 = vmatprep.subr.mxu0 0.0
    %3119 = vmatpush1.msra.mxu0 %v3092
    %3120 = vmatprep.subr.mxu0 0.0
    %3121 = vmatpush1.msra.mxu0 %v3091
    %3122 = vmatprep.subr.mxu0 0.0
    %3123 = vmatpush1.msra.mxu0 %v3090
    %3124 = vmatprep.subr.mxu0 0.0
    %3125 = vmatpush1.msra.mxu0 %v3089
    %3126 = vmatprep.subr.mxu0 0.0
    %3127 = vmatpush1.msra.mxu0 %v3088
    %3128 = vmatprep.subr.mxu0 0.0
    %3129 = vmatpush1.msra.mxu0 %v3087
    %3130 = vmatprep.subr.mxu0 0.0
    %3131 = vmatpush1.msra.mxu0 %v3086
    %3132 = vmatprep.subr.mxu0 0.0
    %3133 = vmatpush1.msra.mxu0 %v3085
    %3134 = vmatprep.subr.mxu0 0.0
    %3135 = vmatpush1.msra.mxu0 %v3084
    %3136 = vmatprep.subr.mxu0 0.0
    %3137 = vmatpush1.msra.mxu0 %v3083
    %3138 = vmatprep.subr.mxu0 0.0
    %3139 = vmatpush2.msra.mxu0 0.0
    %3140 = vmatprep.subr.mxu0 0.0
    %3141 = vmatpush2.msra.mxu0 0.0
    %3142 = vmatprep.subr.mxu0 0.0
    %3143 = vmatpush2.msra.mxu0 0.0
    %3144 = vmatprep.subr.mxu0 0.0
    %3145 = vmatpush2.msra.mxu0 0.0
    %3146 = vmatprep.subr.mxu0 0.0
    %3147 = vmatpush2.msra.mxu0 0.0
    %3148 = vmatprep.subr.mxu0 0.0
    %3149 = vmatpush2.msra.mxu0 0.0
    %3150 = vmatprep.subr.mxu0 0.0
    %3151 = vmatpush2.msra.mxu0 0.0
    %3152 = vmatprep.subr.mxu0 0.0
    %3153 = vmatpush2.msra.mxu0 0.0
    %3154 = vmatprep.subr.mxu0 0.0
    %3155 = vmatpush2.msra.mxu0 0.0
    %3156 = vmatprep.subr.mxu0 0.0
    %3157 = vmatpush2.msra.mxu0 0.0
    %3158 = vmatprep.subr.mxu0 0.0
    %3159 = vmatpush2.msra.mxu0 0.0
    %3160 = vmatprep.subr.mxu0 0.0
    %3161 = vmatpush2.msra.mxu0 0.0
    %3162 = vmatprep.subr.mxu0 0.0
    %3163 = vmatpush2.msra.mxu0 0.0
    %3164 = vmatprep.subr.mxu0 0.0
    %3165 = vmatpush2.msra.mxu0 0.0
    %3166 = vmatprep.subr.mxu0 0.0
    %3167 = vmatpush2.msra.mxu0 0.0
    %3168 = vmatprep.subr.mxu0 0.0
    %3169 = vmatpush2.msra.mxu0 0.0
    %3170 = vmatprep.mubr.f32.mxu0 0.0
    %3171 = vmatmul.mubr.f32.gmra.mxu0 %v3045
    %v3172 = vpop.f32.mrf.mxu0
    %v3173 = vadd.f32 %v3104, %v3172
    %v3174 = vpop.f32.mrf.mxu0
    %3175 = vmatprep.mubr.f32.mxu0 0.0
    %3176 = vmatmul.mubr.f32.gmra.mxu0 %v3046
    %v3177 = vpop.f32.mrf.mxu0
    %v3178 = vadd.f32 %v3104, %v3177
    %v3179 = vpop.f32.mrf.mxu0
    %3180 = vmatprep.mubr.f32.mxu0 0.0
    %3181 = vmatmul.mubr.f32.gmra.mxu0 %v3047
    %v3182 = vpop.f32.mrf.mxu0
    %v3183 = vadd.f32 %v3104, %v3182
    %v3184 = vpop.f32.mrf.mxu0
    %3185 = vmatprep.mubr.f32.mxu0 0.0
    %3186 = vmatmul.mubr.f32.gmra.mxu0 %v3048
    %v3187 = vpop.f32.mrf.mxu0
    %v3188 = vadd.f32 %v3104, %v3187
    %v3189 = vpop.f32.mrf.mxu0
    %3190 = vmatprep.mubr.f32.mxu0 0.0
    %3191 = vmatmul.mubr.f32.gmra.mxu0 %v3049
    %v3192 = vpop.f32.mrf.mxu0
    %v3193 = vadd.f32 %v3104, %v3192
    %v3194 = vpop.f32.mrf.mxu0
    %3195 = vmatprep.mubr.f32.mxu0 0.0
    %3196 = vmatmul.mubr.f32.gmra.mxu0 %v3050
    %v3197 = vpop.f32.mrf.mxu0
    %v3198 = vadd.f32 %v3104, %v3197
    %v3199 = vpop.f32.mrf.mxu0
    %3200 = vmatprep.mubr.f32.mxu0 0.0
    %3201 = vmatmul.mubr.f32.gmra.mxu0 %v3051
    %v3202 = vpop.f32.mrf.mxu0
    %v3203 = vadd.f32 %v3104, %v3202
    %v3204 = vpop.f32.mrf.mxu0
    %3205 = vmatprep.mubr.f32.mxu0 0.0
    %3206 = vmatmul.mubr.f32.gmra.mxu0 %v3052
    %v3207 = vpop.f32.mrf.mxu0
    %v3208 = vadd.f32 %v3104, %v3207
    %v3209 = vpop.f32.mrf.mxu0
    %3210 = vmatprep.mubr.f32.mxu0 0.0
    %3211 = vmatmul.mubr.f32.gmra.mxu0 %v3053
    %v3212 = vpop.f32.mrf.mxu0
    %v3213 = vadd.f32 %v3104, %v3212
    %v3214 = vpop.f32.mrf.mxu0
    %3215 = vmatprep.mubr.f32.mxu0 0.0
    %3216 = vmatmul.mubr.f32.gmra.mxu0 %v3054
    %v3217 = vpop.f32.mrf.mxu0
    %v3218 = vadd.f32 %v3104, %v3217
    %v3219 = vpop.f32.mrf.mxu0
    %3220 = vmatprep.mubr.f32.mxu0 0.0
    %3221 = vmatmul.mubr.f32.gmra.mxu0 %v3055
    %v3222 = vpop.f32.mrf.mxu0
    %v3223 = vadd.f32 %v3104, %v3222
    %v3224 = vpop.f32.mrf.mxu0
    %3225 = vmatprep.mubr.f32.mxu0 0.0
    %3226 = vmatmul.mubr.f32.gmra.mxu0 %v3056
    %v3227 = vpop.f32.mrf.mxu0
    %v3228 = vadd.f32 %v3104, %v3227
    %v3229 = vpop.f32.mrf.mxu0
    %3230 = vmatprep.mubr.f32.mxu0 0.0
    %3231 = vmatmul.mubr.f32.gmra.mxu0 %v3057
    %v3232 = vpop.f32.mrf.mxu0
    %v3233 = vadd.f32 %v3104, %v3232
    %v3234 = vpop.f32.mrf.mxu0
    %3235 = vmatprep.mubr.f32.mxu0 0.0
    %3236 = vmatmul.mubr.f32.gmra.mxu0 %v3058
    %v3237 = vpop.f32.mrf.mxu0
    %v3238 = vadd.f32 %v3104, %v3237
    %v3239 = vpop.f32.mrf.mxu0
    %3240 = vmatprep.mubr.f32.mxu0 0.0
    %3241 = vmatmul.mubr.f32.gmra.mxu0 %v3059
    %v3242 = vpop.f32.mrf.mxu0
    %v3243 = vadd.f32 %v3104, %v3242
    %v3244 = vpop.f32.mrf.mxu0
    %3245 = vmatprep.mubr.f32.mxu0 0.0
    %3246 = vmatmul.mubr.f32.gmra.mxu0 %v3060
    %v3247 = vpop.f32.mrf.mxu0
    %v3248 = vadd.f32 %v3104, %v3247
    %v3249 = vpop.f32.mrf.mxu0
    %3250 = vmatprep.mubr.f32.mxu0 0.0
    %3251 = vmatmul.mubr.f32.gmra.mxu0 %v3061
    %v3252 = vpop.f32.mrf.mxu0
    %v3253 = vadd.f32 %v3104, %v3252
    %v3254 = vpop.f32.mrf.mxu0
    %3255 = vmatprep.mubr.f32.mxu0 0.0
    %3256 = vmatmul.mubr.f32.gmra.mxu0 %v3062
    %v3257 = vpop.f32.mrf.mxu0
    %v3258 = vadd.f32 %v3104, %v3257
    %v3259 = vpop.f32.mrf.mxu0
    %3260 = vmatprep.mubr.f32.mxu0 0.0
    %3261 = vmatmul.mubr.f32.gmra.mxu0 %v3063
    %v3262 = vpop.f32.mrf.mxu0
    %v3263 = vadd.f32 %v3104, %v3262
    %v3264 = vpop.f32.mrf.mxu0
    %3265 = vmatprep.mubr.f32.mxu0 0.0
    %3266 = vmatmul.mubr.f32.gmra.mxu0 %v3064
    %v3267 = vpop.f32.mrf.mxu0
    %v3268 = vadd.f32 %v3104, %v3267
    %v3269 = vpop.f32.mrf.mxu0
    %3270 = vmatprep.mubr.f32.mxu0 0.0
    %3271 = vmatmul.mubr.f32.gmra.mxu0 %v3065
    %v3272 = vpop.f32.mrf.mxu0
    %v3273 = vadd.f32 %v3104, %v3272
    %v3274 = vpop.f32.mrf.mxu0
    %3275 = vmatprep.mubr.f32.mxu0 0.0
    %3276 = vmatmul.mubr.f32.gmra.mxu0 %v3066
    %v3277 = vpop.f32.mrf.mxu0
    %v3278 = vadd.f32 %v3104, %v3277
    %v3279 = vpop.f32.mrf.mxu0
    %3280 = vmatprep.mubr.f32.mxu0 0.0
    %3281 = vmatmul.mubr.f32.gmra.mxu0 %v3067
    %v3282 = vpop.f32.mrf.mxu0
    %v3283 = vadd.f32 %v3104, %v3282
    %v3284 = vpop.f32.mrf.mxu0
    %3285 = vmatprep.mubr.f32.mxu0 0.0
    %3286 = vmatmul.mubr.f32.gmra.mxu0 %v3068
    %v3287 = vpop.f32.mrf.mxu0
    %v3288 = vadd.f32 %v3104, %v3287
    %v3289 = vpop.f32.mrf.mxu0
    %3290 = vmatprep.mubr.f32.mxu0 0.0
    %3291 = vmatmul.mubr.f32.gmra.mxu0 %v3069
    %v3292 = vpop.f32.mrf.mxu0
    %v3293 = vadd.f32 %v3104, %v3292
    %v3294 = vpop.f32.mrf.mxu0
    %3295 = vmatprep.mubr.f32.mxu0 0.0
    %3296 = vmatmul.mubr.f32.gmra.mxu0 %v3070
    %v3297 = vpop.f32.mrf.mxu0
    %v3298 = vadd.f32 %v3104, %v3297
    %v3299 = vpop.f32.mrf.mxu0
    %3300 = vmatprep.mubr.f32.mxu0 0.0
    %3301 = vmatmul.mubr.f32.gmra.mxu0 %v3071
    %v3302 = vpop.f32.mrf.mxu0
    %v3303 = vadd.f32 %v3104, %v3302
    %v3304 = vpop.f32.mrf.mxu0
    %3305 = vmatprep.mubr.f32.mxu0 0.0
    %3306 = vmatmul.mubr.f32.gmra.mxu0 %v3072
    %v3307 = vpop.f32.mrf.mxu0
    %v3308 = vadd.f32 %v3104, %v3307
    %v3309 = vpop.f32.mrf.mxu0
    %3310 = vmatprep.mubr.f32.mxu0 0.0
    %3311 = vmatmul.mubr.f32.gmra.mxu0 %v3073
    %v3312 = vpop.f32.mrf.mxu0
    %v3313 = vadd.f32 %v3104, %v3312
    %v3314 = vpop.f32.mrf.mxu0
    %3315 = vmatprep.mubr.f32.mxu0 0.0
    %3316 = vmatmul.mubr.f32.gmra.mxu0 %v3074
    %v3317 = vpop.f32.mrf.mxu0
    %v3318 = vadd.f32 %v3104, %v3317
    %v3319 = vpop.f32.mrf.mxu0
    %3320 = vmatprep.mubr.f32.mxu0 0.0
    %3321 = vmatmul.mubr.f32.gmra.mxu0 %v3075
    %v3322 = vpop.f32.mrf.mxu0
    %v3323 = vadd.f32 %v3104, %v3322
    %v3324 = vpop.f32.mrf.mxu0
    %3325 = vmatprep.mubr.f32.mxu0 0.0
    %3326 = vmatmul.mubr.f32.gmra.mxu0 %v3076
    %v3327 = vpop.f32.mrf.mxu0
    %v3328 = vadd.f32 %v3104, %v3327
    %v3329 = vpop.f32.mrf.mxu0
    %3330 = vmatprep.mubr.f32.mxu0 0.0
    %3331 = vmatmul.mubr.f32.gmra.mxu0 %v3077
    %v3332 = vpop.f32.mrf.mxu0
    %v3333 = vadd.f32 %v3104, %v3332
    %v3334 = vpop.f32.mrf.mxu0
    %3335 = vmatprep.mubr.f32.mxu0 0.0
    %3336 = vmatmul.mubr.f32.gmra.mxu0 %v3078
    %v3337 = vpop.f32.mrf.mxu0
    %v3338 = vadd.f32 %v3104, %v3337
    %v3339 = vpop.f32.mrf.mxu0
    %3340 = vmatprep.mubr.f32.mxu0 0.0
    %3341 = vmatmul.mubr.f32.gmra.mxu0 %v3079
    %v3342 = vpop.f32.mrf.mxu0
    %v3343 = vadd.f32 %v3104, %v3342
    %v3344 = vpop.f32.mrf.mxu0
    %3345 = vmatprep.mubr.f32.mxu0 0.0
    %3346 = vmatmul.mubr.f32.gmra.mxu0 %v3080
    %v3347 = vpop.f32.mrf.mxu0
    %v3348 = vadd.f32 %v3104, %v3347
    %v3349 = vpop.f32.mrf.mxu0
    %3350 = vmatprep.mubr.f32.mxu0 0.0
    %3351 = vmatmul.mubr.f32.gmra.mxu0 %v3081
    %v3352 = vpop.f32.mrf.mxu0
    %v3353 = vadd.f32 %v3104, %v3352
    %v3354 = vpop.f32.mrf.mxu0
    %3355 = vmatprep.mubr.f32.mxu0 0.0
    %3356 = vmatmul.mubr.f32.gmra.mxu0 %v3082
    %v3357 = vpop.f32.mrf.mxu0
    %v3358 = vadd.f32 %v3104, %v3357
    %v3359 = vpop.f32.mrf.mxu0
    %3360 = vdwg.mxu0
    %3361 = vst [vmem:[#allocation8] sm:$0xff] %v3173
    %3362 = vst [vmem:[#allocation8 + $0x8] sm:$0xff] %v3178
    %3363 = vst [vmem:[#allocation8 + $0x10] sm:$0xff] %v3183
    %3364 = vst [vmem:[#allocation8 + $0x18] sm:$0xff] %v3188
    %3365 = vst [vmem:[#allocation8 + $0x20] sm:$0xff] %v3193
    %3366 = vst [vmem:[#allocation8 + $0x28] sm:$0xff] %v3198
    %3367 = vst [vmem:[#allocation8 + $0x30] sm:$0xff] %v3203
    %3368 = vst [vmem:[#allocation8 + $0x38] sm:$0xff] %v3208
    %3369 = vst [vmem:[#allocation8 + $0x40] sm:$0xff] %v3213
    %3370 = vst [vmem:[#allocation8 + $0x48] sm:$0xff] %v3218
    %3371 = vst [vmem:[#allocation8 + $0x50] sm:$0xff] %v3223
    %3372 = vst [vmem:[#allocation8 + $0x58] sm:$0xff] %v3228
    %3373 = vst [vmem:[#allocation8 + $0x60] sm:$0xff] %v3233
    %3374 = vst [vmem:[#allocation8 + $0x68] sm:$0xff] %v3238
    %3375 = vst [vmem:[#allocation8 + $0x70] sm:$0xff] %v3243
    %3376 = vst [vmem:[#allocation8 + $0x78] sm:$0xff] %v3248
    %3377 = vst [vmem:[#allocation8 + $0x80] sm:$0xff] %v3253
    %3378 = vst [vmem:[#allocation8 + $0x88] sm:$0xff] %v3258
    %3379 = vst [vmem:[#allocation8 + $0x90] sm:$0xff] %v3263
    %3380 = vst [vmem:[#allocation8 + $0x98] sm:$0xff] %v3268
    %3381 = vst [vmem:[#allocation8 + $0xa0] sm:$0xff] %v3273
    %3382 = vst [vmem:[#allocation8 + $0xa8] sm:$0xff] %v3278
    %3383 = vst [vmem:[#allocation8 + $0xb0] sm:$0xff] %v3283
    %3384 = vst [vmem:[#allocation8 + $0xb8] sm:$0xff] %v3288
    %3385 = vst [vmem:[#allocation8 + $0xc0] sm:$0xff] %v3293
    %3386 = vst [vmem:[#allocation8 + $0xc8] sm:$0xff] %v3298
    %3387 = vst [vmem:[#allocation8 + $0xd0] sm:$0xff] %v3303
    %3388 = vst [vmem:[#allocation8 + $0xd8] sm:$0xff] %v3308
    %3389 = vst [vmem:[#allocation8 + $0xe0] sm:$0xff] %v3313
    %3390 = vst [vmem:[#allocation8 + $0xe8] sm:$0xff] %v3318
    %3391 = vst [vmem:[#allocation8 + $0xf0] sm:$0xff] %v3323
    %3392 = vst [vmem:[#allocation8 + $0xf8] sm:$0xff] %v3328
    %3393 = vst [vmem:[#allocation8 + $0x100] sm:$0xff] %v3333
    %3394 = vst [vmem:[#allocation8 + $0x108] sm:$0xff] %v3338
    %3395 = vst [vmem:[#allocation8 + $0x110] sm:$0xff] %v3343
    %3396 = vst [vmem:[#allocation8 + $0x118] sm:$0xff] %v3348
    %3397 = vst [vmem:[#allocation8 + $0x120] sm:$0xff] %v3353
    %3398 = vst [vmem:[#allocation8 + $0x128] sm:$0xff] %v3358
    // Predicated region
    $region58: #{tpu_custom_call.1} parent=1 // pred_check
      _
    $region59: #{tpu_custom_call.1} parent=1 // pred_check_branch
      %3400 = sbr.rel (0) target = $region61
    $region60: #{tpu_custom_call.1} parent=1 // pred_region
      %s3402 = ssub.s32 4864, 4864
      %3403 = vsyncadd [#allocation4], %s3402
      %s3404 = sshll.u32 [#allocation8], 4
      %s3405 = int_to_ptr.vmem [resolvable:$true] %s3404
      %3410 = dma.vmem_to_hbm [thread:$0]  %s3405, 4864, %s11, [#allocation4], 128, 128, 8
    $region61: #{tpu_custom_call.1} parent=1 // pred_fallthru
      _
    // Predicated region
    $region62: #{tpu_custom_call.1} parent=1 // pred_check
      _
    $region63: #{tpu_custom_call.1} parent=1 // pred_check_branch
      %3412 = sbr.rel (0) target = $region65
    $region64: #{tpu_custom_call.1} parent=1 // pred_region
      %3413 = dma.done [#allocation4], 4864
    $region65: #{tpu_custom_call.1} parent=1 // pred_fallthru
      _
    %3414 = vsyncpa [#allocation3], 1
    %3415 = vsyncpa [#allocation6], 1
    %3416 = vsyncpa [#allocation4], 1

</llo_original>
